<compile_context>
chip_gen: v7x
topology: tpu7x:2x2x1
jax: 0.10.0
libtpu: 0.0.40
codegen_flags: <defaults>
</compile_context>

<pallas_src>
import functools

import jax
import jax.numpy as jnp
import numpy as np
from jax.experimental import pallas as pl
from jax.experimental.pallas import tpu as pltpu


# ----------------------------------------------------------------------------
# Fused Pallas kernel: embedding + wavefront 4-layer LSTM + mean-pool + fc
# ----------------------------------------------------------------------------
def _fused_rnn_kernel(x_ref, emb_ref, wih0_ref, wbig_ref, b_ref,
                      fcwh_ref, fcwo_ref, fcb_ref, out_ref, *,
                      batch, seq_len, hidden, num_layers, vocab, n_other):
    """Everything in one kernel.

    x_ref:    (B, T + F) int32   [letter ids | one-hot other features]
    emb_ref:  (V, E)             embedding table
    wih0_ref: (E, 4*L*H)         layer-0 input weights, gate-major permuted,
                                 zero outside the layer-0 columns, g-cols x2
    wbig_ref: (L*H, 4*L*H)       recurrent (block diag) + inter-layer W_ih
                                 (sub-diag), gate-major permuted, g-cols x2
    b_ref:    (1, 4*L*H)         b_ih + b_hh, gate-major permuted, g-cols x2
    fcwh_ref: (1, H)   fcwo_ref: (1, F)   fcb_ref: (1, 1)
    out_ref:  (B, 1)
    Gate-major column layout: col = g*L*H + l*H + j, PyTorch gate order [i,f,g,o].
    """
    B, T, H, L = batch, seq_len, hidden, num_layers
    V, F = vocab, n_other
    LH = L * H

    xi = x_ref[...]                                      # (B, T+F) int32
    letters = xi[:, :T]                                  # (B, T)
    other = xi[:, T:T + F].astype(jnp.float32)           # (B, F)

    # Layer-0 input projection fused with the embedding gather:
    #   emb[ids] @ W_ih0  ==  onehot(ids) @ (emb_table @ W_ih0)
    eproj = jnp.dot(emb_ref[...], wih0_ref[...],
                    preferred_element_type=jnp.float32)  # (V, 4*L*H)
    iota_v = jax.lax.broadcasted_iota(jnp.int32, (B, V), 1)
    col_idx = jax.lax.broadcasted_iota(jnp.int32, (B, LH), 1)

    wbig = wbig_ref[...]                                 # (L*H, 4*L*H)
    bias = b_ref[...]                                    # (1, 4*L*H)

    h = jnp.zeros((B, LH), jnp.float32)
    c = jnp.zeros((B, LH), jnp.float32)
    hsum = jnp.zeros((B, LH), jnp.float32)

    # ---- wavefront: at wave w, layer l processes time step t = w - l --------
    for w in range(T + L - 1):                           # fully unrolled
        xp_w = None
        if w < T:                                        # layer-0 input for t=w
            onehot_w = jnp.where(letters[:, w:w + 1] == iota_v, 1.0, 0.0)
            xp_w = jnp.dot(onehot_w, eproj,
                           preferred_element_type=jnp.float32)   # (B, 4*L*H)
        if w == 0:                                       # h == 0 -> skip matmul
            gates = bias + xp_w
        else:
            gates = jnp.dot(h, wbig,
                            preferred_element_type=jnp.float32) + bias
            if xp_w is not None:
                gates = gates + xp_w
        sg = jax.nn.sigmoid(gates)                       # one EUP pass, all gates
        i_all = sg[:, 0 * LH:1 * LH]                     # lane-aligned 128 chunks
        f_all = sg[:, 1 * LH:2 * LH]
        g_all = 2.0 * sg[:, 2 * LH:3 * LH] - 1.0         # tanh(x) = 2*sig(2x) - 1
        o_all = sg[:, 3 * LH:4 * LH]
        c_new = f_all * c + i_all * g_all
        h_new = o_all * jnp.tanh(c_new)
        if w < L - 1:
            # layers l > w have not started yet: their h/c must stay exactly 0
            keep = col_idx < (w + 1) * H
            c = jnp.where(keep, c_new, 0.0)
            h = jnp.where(keep, h_new, 0.0)
        else:
            c = c_new
            h = h_new
        if w >= L - 1:                                   # last layer active
            hsum = hsum + h

    pooled = hsum[:, (L - 1) * H:L * H] * (1.0 / T)      # (B, H) mean over time

    # fc: VPU broadcast-mul + lane reduce (no N=1 MXU matmul)
    out_ref[...] = (
        jnp.sum(pooled * fcwh_ref[...], axis=-1, keepdims=True)
        + jnp.sum(other * fcwo_ref[...], axis=-1, keepdims=True)
        + fcb_ref[...])


def fused_rnn(x_int, kp, *, batch, seq_len, hidden, num_layers, vocab_size,
              n_other):
    B, T, H, L = batch, seq_len, hidden, num_layers
    V, F = vocab_size, n_other
    E = kp["embedding"].shape[1]
    kernel = functools.partial(_fused_rnn_kernel, batch=B, seq_len=T, hidden=H,
                               num_layers=L, vocab=V, n_other=F)
    # TODO(synk): for real workloads with larger batch, add a "parallel" batch
    #             grid axis (v7x has 2 TensorCores); at B=2 grid=(1,) is fine.
    return pl.pallas_call(
        kernel,
        out_shape=jax.ShapeDtypeStruct((B, 1), jnp.float32),
        grid=(1,),
        in_specs=[
            pl.BlockSpec((B, T + F), lambda i: (0, 0)),
            pl.BlockSpec((V, E), lambda i: (0, 0)),
            pl.BlockSpec((E, 4 * L * H), lambda i: (0, 0)),
            pl.BlockSpec((L * H, 4 * L * H), lambda i: (0, 0)),
            pl.BlockSpec((1, 4 * L * H), lambda i: (0, 0)),
            pl.BlockSpec((1, H), lambda i: (0, 0)),
            pl.BlockSpec((1, F), lambda i: (0, 0)),
            pl.BlockSpec((1, 1), lambda i: (0, 0)),
        ],
        out_specs=pl.BlockSpec((B, 1), lambda i: (0, 0)),
        compiler_params=pltpu.CompilerParams(
            dimension_semantics=("arbitrary",)),
    )(x_int, kp["embedding"], kp["wih0"], kp["wbig"], kp["b"],
      kp["fc_w_h"], kp["fc_w_o"], kp["fc_b"])


def rnn_model_forward(kparams, x, *, max_letters_length, hidden_size,
                      num_layers, vocab_size, n_other):
    """x: (B, max_letters_length + n_other_features), integer-valued."""
    return fused_rnn(x.astype(jnp.int32), kparams,
                     batch=x.shape[0], seq_len=max_letters_length,
                     hidden=hidden_size, num_layers=num_layers,
                     vocab_size=vocab_size, n_other=n_other)


# ----------------------------------------------------------------------------
# Raw (PyTorch-like) parameters + kernel-weight preparation
# ----------------------------------------------------------------------------
def init_raw_params(key, *, vocab_size, embed_size, hidden_size, num_layers,
                    n_other):
    keys = jax.random.split(key, 3 + 4 * num_layers)
    k = 1.0 / np.sqrt(hidden_size)
    params = {"embedding": jax.random.normal(keys[0], (vocab_size, embed_size),
                                             jnp.float32)}
    layers = []
    for layer in range(num_layers):
        in_size = embed_size if layer == 0 else hidden_size
        kw = keys[3 + 4 * layer: 3 + 4 * (layer + 1)]
        layers.append(dict(
            # stored pre-transposed: (In, 4H) / (H, 4H), gate order [i,f,g,o]
            w_ih=jax.random.uniform(kw[0], (in_size, 4 * hidden_size),
                                    jnp.float32, -k, k),
            w_hh=jax.random.uniform(kw[1], (hidden_size, 4 * hidden_size),
                                    jnp.float32, -k, k),
            b_ih=jax.random.uniform(kw[2], (4 * hidden_size,), jnp.float32,
                                    -k, k),
            b_hh=jax.random.uniform(kw[3], (4 * hidden_size,), jnp.float32,
                                    -k, k),
        ))
    params["lstm"] = layers
    fc_in = hidden_size + n_other
    kf = 1.0 / np.sqrt(fc_in)
    params["fc_w"] = jax.random.uniform(keys[1], (1, fc_in), jnp.float32,
                                        -kf, kf)
    params["fc_b"] = jax.random.uniform(keys[2], (1,), jnp.float32, -kf, kf)
    return params


def prepare_kernel_params(raw, *, hidden_size, num_layers, n_other):
    """Build the gate-major-permuted, block-structured weights for the kernel."""
    H, L, F = hidden_size, num_layers, n_other
    LH = L * H
    E = raw["embedding"].shape[1]

    wih0_perm = np.zeros((E, 4 * LH), np.float32)
    wbig = np.zeros((LH, 4 * LH), np.float32)
    b_perm = np.zeros((1, 4 * LH), np.float32)
    for l in range(L):
        lp = raw["lstm"][l]
        w_ih = np.asarray(lp["w_ih"], np.float32)
        w_hh = np.asarray(lp["w_hh"], np.float32)
        b = np.asarray(lp["b_ih"], np.float32) + np.asarray(lp["b_hh"],
                                                            np.float32)
        for g in range(4):
            scale = 2.0 if g == 2 else 1.0        # tanh(x) = 2*sigmoid(2x) - 1
            dst = slice(g * LH + l * H, g * LH + (l + 1) * H)
            src = slice(g * H, (g + 1) * H)
            wbig[l * H:(l + 1) * H, dst] = scale * w_hh[:, src]
            b_perm[0, dst] = scale * b[src]
            if l == 0:
                wih0_perm[:, dst] = scale * w_ih[:, src]
            else:
                wbig[(l - 1) * H:l * H, dst] = scale * w_ih[:, src]

    fc_w = np.asarray(raw["fc_w"], np.float32)    # (1, H + F)
    return dict(
        embedding=jnp.asarray(raw["embedding"], jnp.float32),
        wih0=jnp.asarray(wih0_perm),
        wbig=jnp.asarray(wbig),
        b=jnp.asarray(b_perm),
        fc_w_h=jnp.asarray(fc_w[:, :H]),
        fc_w_o=jnp.asarray(fc_w[:, H:]),
        fc_b=jnp.asarray(np.asarray(raw["fc_b"], np.float32).reshape(1, 1)),
    )


# ----------------------------------------------------------------------------
# Pure-JAX reference (numerical sanity check, uses the raw parameters)
# ----------------------------------------------------------------------------
def rnn_model_reference(raw, x, *, max_letters_length, hidden_size, num_layers):
    T, H = max_letters_length, hidden_size
    hi = jax.lax.Precision.HIGHEST
    letters = x[:, :T].astype(jnp.int32)
    other = x[:, T:].astype(jnp.float32)
    emb = jnp.take(raw["embedding"], letters, axis=0)           # (B, T, E)
    seq = jnp.transpose(emb, (1, 0, 2)).astype(jnp.float32)     # (T, B, E)
    B = seq.shape[1]
    for layer in range(num_layers):
        lp = raw["lstm"][layer]
        w_ih, w_hh = lp["w_ih"], lp["w_hh"]
        b = lp["b_ih"] + lp["b_hh"]
        h = jnp.zeros((B, H), jnp.float32)
        c = jnp.zeros((B, H), jnp.float32)
        outs = []
        for t in range(T):
            gates = (jnp.dot(seq[t], w_ih, precision=hi)
                     + jnp.dot(h, w_hh, precision=hi) + b)
            i_g = jax.nn.sigmoid(gates[:, 0 * H:1 * H])
            f_g = jax.nn.sigmoid(gates[:, 1 * H:2 * H])
            g_g = jnp.tanh(gates[:, 2 * H:3 * H])
            o_g = jax.nn.sigmoid(gates[:, 3 * H:4 * H])
            c = f_g * c + i_g * g_g
            h = o_g * jnp.tanh(c)
            outs.append(h)
        seq = jnp.stack(outs, axis=0)
    pooled = jnp.mean(seq, axis=0)
    combined = jnp.concatenate([pooled, other], axis=1)
    return jnp.dot(combined, raw["fc_w"].T, precision=hi) + raw["fc_b"]


# ----------------------------------------------------------------------------
if __name__ == "__main__":
    # Small, module-consistent synthetic sizes.
    batch = 2
    vocab_size = 20                # len(vocab) + 1
    embed_size = 50
    hidden_size = 32
    num_layers = 4
    max_letters_length = 8
    # one-hot feature widths: region(5) + is_government(2) + numbers(10) + years(4)
    n_other = 5 + 2 + 10 + 4       # 21 ; fc_input_size = 32 + 21 = 53

    key = jax.random.PRNGKey(0)
    k_param, k_letters, k_other = jax.random.split(key, 3)

    raw_params = init_raw_params(
        k_param, vocab_size=vocab_size, embed_size=embed_size,
        hidden_size=hidden_size, num_layers=num_layers, n_other=n_other)
    kernel_params = prepare_kernel_params(
        raw_params, hidden_size=hidden_size, num_layers=num_layers,
        n_other=n_other)

    # x = [letter token ids | one-hot other features], all integer valued.
    letters = jax.random.randint(k_letters, (batch, max_letters_length), 0,
                                 vocab_size, dtype=jnp.int32)
    other_idx = jax.random.randint(k_other, (batch, n_other), 0, 2,
                                   dtype=jnp.int32)
    x = jnp.concatenate([letters, other_idx], axis=1)           # (2, 29)

    fwd = jax.jit(functools.partial(
        rnn_model_forward, max_letters_length=max_letters_length,
        hidden_size=hidden_size, num_layers=num_layers,
        vocab_size=vocab_size, n_other=n_other))
    out = fwd(kernel_params, x)
    out = jax.block_until_ready(out)

    ref = rnn_model_reference(raw_params, x,
                              max_letters_length=max_letters_length,
                              hidden_size=hidden_size, num_layers=num_layers)
    assert out.shape == (batch, 1)
    # Tightened from 1e-2 (all-f32 path; slight slack for the tanh-via-sigmoid
    # EUP path and MXU accumulation-order differences).
    np.testing.assert_allclose(np.asarray(out), np.asarray(ref),
                               rtol=2e-4, atol=2e-5)

    print("KERNEL_OK")
</pallas_src>

<mosaic_0001>
module attributes {stable_mosaic.version = 11 : i64} {
  func.func @_fused_rnn_kernel(%arg0: i32, %arg1: memref<2x29xi32, #tpu.memory_space<vmem>>, %arg2: memref<20x50xf32, #tpu.memory_space<vmem>>, %arg3: memref<50x512xf32, #tpu.memory_space<vmem>>, %arg4: memref<128x512xf32, #tpu.memory_space<vmem>>, %arg5: memref<1x512xf32, #tpu.memory_space<vmem>>, %arg6: memref<1x32xf32, #tpu.memory_space<vmem>>, %arg7: memref<1x21xf32, #tpu.memory_space<vmem>>, %arg8: memref<1x1xf32, #tpu.memory_space<vmem>>, %arg9: memref<2x1xf32, #tpu.memory_space<vmem>>) attributes {dimension_semantics = [#tpu.dimension_semantics<arbitrary>], iteration_bounds = array<i64: 1>, scalar_prefetch = 0 : i64, scratch_operands = 0 : i64, tpu.core_type = #tpu.core_type<tc>, window_params = [{pipeline_mode = #tpu.pipeline_mode<synchronous>, transform_indices = @transform_0, window_bounds = array<i64: 2, 29>}, {pipeline_mode = #tpu.pipeline_mode<synchronous>, transform_indices = @transform_1, window_bounds = array<i64: 20, 50>}, {pipeline_mode = #tpu.pipeline_mode<synchronous>, transform_indices = @transform_2, window_bounds = array<i64: 50, 512>}, {pipeline_mode = #tpu.pipeline_mode<synchronous>, transform_indices = @transform_3, window_bounds = array<i64: 128, 512>}, {pipeline_mode = #tpu.pipeline_mode<synchronous>, transform_indices = @transform_4, window_bounds = array<i64: 1, 512>}, {pipeline_mode = #tpu.pipeline_mode<synchronous>, transform_indices = @transform_5, window_bounds = array<i64: 1, 32>}, {pipeline_mode = #tpu.pipeline_mode<synchronous>, transform_indices = @transform_6, window_bounds = array<i64: 1, 21>}, {pipeline_mode = #tpu.pipeline_mode<synchronous>, transform_indices = @transform_7, window_bounds = array<i64: 1, 1>}, {pipeline_mode = #tpu.pipeline_mode<synchronous>, transform_indices = @transform_8, window_bounds = array<i64: 2, 1>}]} {
    %c0 = arith.constant 0 : index
    %c0_0 = arith.constant 0 : index
    %0 = vector.load %arg1[%c0, %c0_0] : memref<2x29xi32, #tpu.memory_space<vmem>>, vector<2x29xi32>
    %1 = vector.extract_strided_slice %0 {offsets = [0, 0], sizes = [2, 8], strides = [1, 1]} : vector<2x29xi32> to vector<2x8xi32>
    %2 = vector.extract_strided_slice %0 {offsets = [0, 8], sizes = [2, 21], strides = [1, 1]} : vector<2x29xi32> to vector<2x21xi32>
    %3 = arith.sitofp %2 : vector<2x21xi32> to vector<2x21xf32>
    %c0_1 = arith.constant 0 : index
    %c0_2 = arith.constant 0 : index
    %4 = vector.load %arg2[%c0_1, %c0_2] : memref<20x50xf32, #tpu.memory_space<vmem>>, vector<20x50xf32>
    %c0_3 = arith.constant 0 : index
    %c0_4 = arith.constant 0 : index
    %5 = vector.load %arg3[%c0_3, %c0_4] : memref<50x512xf32, #tpu.memory_space<vmem>>, vector<50x512xf32>
    %cst = arith.constant dense<0.000000e+00> : vector<20x512xf32>
    %6 = tpu.matmul %4, %5, %cst {dimension_numbers = #tpu.dot_dimension_numbers<[1], [0], [0], [1], [0, 0, 1, 1], [], []>} : vector<20x50xf32>, vector<50x512xf32>, vector<20x512xf32> -> vector<20x512xf32>
    %7 = tpu.iota {dimensions = array<i32: 1>} : vector<2x20xi32>
    %8 = tpu.iota {dimensions = array<i32: 1>} : vector<2x128xi32>
    %c0_5 = arith.constant 0 : index
    %c0_6 = arith.constant 0 : index
    %9 = vector.load %arg4[%c0_5, %c0_6] : memref<128x512xf32, #tpu.memory_space<vmem>>, vector<128x512xf32>
    %c0_7 = arith.constant 0 : index
    %c0_8 = arith.constant 0 : index
    %10 = vector.load %arg5[%c0_7, %c0_8] : memref<1x512xf32, #tpu.memory_space<vmem>>, vector<1x512xf32>
    %cst_9 = arith.constant 0.000000e+00 : f32
    %11 = vector.broadcast %cst_9 : f32 to vector<2x128xf32>
    %cst_10 = arith.constant 0.000000e+00 : f32
    %12 = vector.broadcast %cst_10 : f32 to vector<2x128xf32>
    %13 = vector.extract_strided_slice %1 {offsets = [0, 0], sizes = [2, 1], strides = [1, 1]} : vector<2x8xi32> to vector<2x1xi32>
    %14 = vector.broadcast %13 : vector<2x1xi32> to vector<2x20xi32>
    %15 = arith.cmpi eq, %14, %7 : vector<2x20xi32>
    %cst_11 = arith.constant 1.000000e+00 : f32
    %cst_12 = arith.constant 0.000000e+00 : f32
    %16 = vector.broadcast %cst_11 : f32 to vector<2x20xf32>
    %17 = vector.broadcast %cst_12 : f32 to vector<2x20xf32>
    %18 = arith.select %15, %16, %17 : vector<2x20xi1>, vector<2x20xf32>
    %cst_13 = arith.constant dense<0.000000e+00> : vector<2x512xf32>
    %19 = tpu.matmul %18, %6, %cst_13 {dimension_numbers = #tpu.dot_dimension_numbers<[1], [0], [0], [1], [0, 0, 1, 1], [], []>} : vector<2x20xf32>, vector<20x512xf32>, vector<2x512xf32> -> vector<2x512xf32>
    %20 = vector.broadcast %10 : vector<1x512xf32> to vector<2x512xf32>
    %21 = arith.addf %20, %19 : vector<2x512xf32>
    %22 = arith.negf %21 : vector<2x512xf32>
    %23 = math.exp %22 : vector<2x512xf32>
    %cst_14 = arith.constant 1.000000e+00 : f32
    %24 = vector.broadcast %cst_14 : f32 to vector<2x512xf32>
    %25 = arith.addf %24, %23 : vector<2x512xf32>
    %26 = arith.divf %24, %25 : vector<2x512xf32>
    %27 = vector.extract_strided_slice %26 {offsets = [0, 0], sizes = [2, 128], strides = [1, 1]} : vector<2x512xf32> to vector<2x128xf32>
    %28 = vector.extract_strided_slice %26 {offsets = [0, 128], sizes = [2, 128], strides = [1, 1]} : vector<2x512xf32> to vector<2x128xf32>
    %29 = vector.extract_strided_slice %26 {offsets = [0, 256], sizes = [2, 128], strides = [1, 1]} : vector<2x512xf32> to vector<2x128xf32>
    %cst_15 = arith.constant 2.000000e+00 : f32
    %30 = vector.broadcast %cst_15 : f32 to vector<2x128xf32>
    %31 = arith.mulf %30, %29 : vector<2x128xf32>
    %cst_16 = arith.constant 1.000000e+00 : f32
    %32 = vector.broadcast %cst_16 : f32 to vector<2x128xf32>
    %33 = arith.subf %31, %32 : vector<2x128xf32>
    %34 = vector.extract_strided_slice %26 {offsets = [0, 384], sizes = [2, 128], strides = [1, 1]} : vector<2x512xf32> to vector<2x128xf32>
    %35 = arith.mulf %28, %11 : vector<2x128xf32>
    %36 = arith.mulf %27, %33 : vector<2x128xf32>
    %37 = arith.addf %35, %36 : vector<2x128xf32>
    %38 = math.tanh %37 : vector<2x128xf32>
    %39 = arith.mulf %34, %38 : vector<2x128xf32>
    %c32_i32 = arith.constant 32 : i32
    %40 = vector.broadcast %c32_i32 : i32 to vector<2x128xi32>
    %41 = arith.cmpi slt, %8, %40 : vector<2x128xi32>
    %cst_17 = arith.constant 0.000000e+00 : f32
    %42 = vector.broadcast %cst_17 : f32 to vector<2x128xf32>
    %43 = arith.select %41, %37, %42 : vector<2x128xi1>, vector<2x128xf32>
    %cst_18 = arith.constant 0.000000e+00 : f32
    %44 = vector.broadcast %cst_18 : f32 to vector<2x128xf32>
    %45 = arith.select %41, %39, %44 : vector<2x128xi1>, vector<2x128xf32>
    %46 = vector.extract_strided_slice %1 {offsets = [0, 1], sizes = [2, 1], strides = [1, 1]} : vector<2x8xi32> to vector<2x1xi32>
    %47 = vector.broadcast %46 : vector<2x1xi32> to vector<2x20xi32>
    %48 = arith.cmpi eq, %47, %7 : vector<2x20xi32>
    %cst_19 = arith.constant 1.000000e+00 : f32
    %cst_20 = arith.constant 0.000000e+00 : f32
    %49 = vector.broadcast %cst_19 : f32 to vector<2x20xf32>
    %50 = vector.broadcast %cst_20 : f32 to vector<2x20xf32>
    %51 = arith.select %48, %49, %50 : vector<2x20xi1>, vector<2x20xf32>
    %cst_21 = arith.constant dense<0.000000e+00> : vector<2x512xf32>
    %52 = tpu.matmul %51, %6, %cst_21 {dimension_numbers = #tpu.dot_dimension_numbers<[1], [0], [0], [1], [0, 0, 1, 1], [], []>} : vector<2x20xf32>, vector<20x512xf32>, vector<2x512xf32> -> vector<2x512xf32>
    %cst_22 = arith.constant dense<0.000000e+00> : vector<2x512xf32>
    %53 = tpu.matmul %45, %9, %cst_22 {dimension_numbers = #tpu.dot_dimension_numbers<[1], [0], [0], [1], [0, 0, 1, 1], [], []>} : vector<2x128xf32>, vector<128x512xf32>, vector<2x512xf32> -> vector<2x512xf32>
    %54 = vector.broadcast %10 : vector<1x512xf32> to vector<2x512xf32>
    %55 = arith.addf %53, %54 : vector<2x512xf32>
    %56 = arith.addf %55, %52 : vector<2x512xf32>
    %57 = arith.negf %56 : vector<2x512xf32>
    %58 = math.exp %57 : vector<2x512xf32>
    %cst_23 = arith.constant 1.000000e+00 : f32
    %59 = vector.broadcast %cst_23 : f32 to vector<2x512xf32>
    %60 = arith.addf %59, %58 : vector<2x512xf32>
    %61 = arith.divf %59, %60 : vector<2x512xf32>
    %62 = vector.extract_strided_slice %61 {offsets = [0, 0], sizes = [2, 128], strides = [1, 1]} : vector<2x512xf32> to vector<2x128xf32>
    %63 = vector.extract_strided_slice %61 {offsets = [0, 128], sizes = [2, 128], strides = [1, 1]} : vector<2x512xf32> to vector<2x128xf32>
    %64 = vector.extract_strided_slice %61 {offsets = [0, 256], sizes = [2, 128], strides = [1, 1]} : vector<2x512xf32> to vector<2x128xf32>
    %cst_24 = arith.constant 2.000000e+00 : f32
    %65 = vector.broadcast %cst_24 : f32 to vector<2x128xf32>
    %66 = arith.mulf %65, %64 : vector<2x128xf32>
    %cst_25 = arith.constant 1.000000e+00 : f32
    %67 = vector.broadcast %cst_25 : f32 to vector<2x128xf32>
    %68 = arith.subf %66, %67 : vector<2x128xf32>
    %69 = vector.extract_strided_slice %61 {offsets = [0, 384], sizes = [2, 128], strides = [1, 1]} : vector<2x512xf32> to vector<2x128xf32>
    %70 = arith.mulf %63, %43 : vector<2x128xf32>
    %71 = arith.mulf %62, %68 : vector<2x128xf32>
    %72 = arith.addf %70, %71 : vector<2x128xf32>
    %73 = math.tanh %72 : vector<2x128xf32>
    %74 = arith.mulf %69, %73 : vector<2x128xf32>
    %c64_i32 = arith.constant 64 : i32
    %75 = vector.broadcast %c64_i32 : i32 to vector<2x128xi32>
    %76 = arith.cmpi slt, %8, %75 : vector<2x128xi32>
    %cst_26 = arith.constant 0.000000e+00 : f32
    %77 = vector.broadcast %cst_26 : f32 to vector<2x128xf32>
    %78 = arith.select %76, %72, %77 : vector<2x128xi1>, vector<2x128xf32>
    %cst_27 = arith.constant 0.000000e+00 : f32
    %79 = vector.broadcast %cst_27 : f32 to vector<2x128xf32>
    %80 = arith.select %76, %74, %79 : vector<2x128xi1>, vector<2x128xf32>
    %81 = vector.extract_strided_slice %1 {offsets = [0, 2], sizes = [2, 1], strides = [1, 1]} : vector<2x8xi32> to vector<2x1xi32>
    %82 = vector.broadcast %81 : vector<2x1xi32> to vector<2x20xi32>
    %83 = arith.cmpi eq, %82, %7 : vector<2x20xi32>
    %cst_28 = arith.constant 1.000000e+00 : f32
    %cst_29 = arith.constant 0.000000e+00 : f32
    %84 = vector.broadcast %cst_28 : f32 to vector<2x20xf32>
    %85 = vector.broadcast %cst_29 : f32 to vector<2x20xf32>
    %86 = arith.select %83, %84, %85 : vector<2x20xi1>, vector<2x20xf32>
    %cst_30 = arith.constant dense<0.000000e+00> : vector<2x512xf32>
    %87 = tpu.matmul %86, %6, %cst_30 {dimension_numbers = #tpu.dot_dimension_numbers<[1], [0], [0], [1], [0, 0, 1, 1], [], []>} : vector<2x20xf32>, vector<20x512xf32>, vector<2x512xf32> -> vector<2x512xf32>
    %cst_31 = arith.constant dense<0.000000e+00> : vector<2x512xf32>
    %88 = tpu.matmul %80, %9, %cst_31 {dimension_numbers = #tpu.dot_dimension_numbers<[1], [0], [0], [1], [0, 0, 1, 1], [], []>} : vector<2x128xf32>, vector<128x512xf32>, vector<2x512xf32> -> vector<2x512xf32>
    %89 = vector.broadcast %10 : vector<1x512xf32> to vector<2x512xf32>
    %90 = arith.addf %88, %89 : vector<2x512xf32>
    %91 = arith.addf %90, %87 : vector<2x512xf32>
    %92 = arith.negf %91 : vector<2x512xf32>
    %93 = math.exp %92 : vector<2x512xf32>
    %cst_32 = arith.constant 1.000000e+00 : f32
    %94 = vector.broadcast %cst_32 : f32 to vector<2x512xf32>
    %95 = arith.addf %94, %93 : vector<2x512xf32>
    %96 = arith.divf %94, %95 : vector<2x512xf32>
    %97 = vector.extract_strided_slice %96 {offsets = [0, 0], sizes = [2, 128], strides = [1, 1]} : vector<2x512xf32> to vector<2x128xf32>
    %98 = vector.extract_strided_slice %96 {offsets = [0, 128], sizes = [2, 128], strides = [1, 1]} : vector<2x512xf32> to vector<2x128xf32>
    %99 = vector.extract_strided_slice %96 {offsets = [0, 256], sizes = [2, 128], strides = [1, 1]} : vector<2x512xf32> to vector<2x128xf32>
    %cst_33 = arith.constant 2.000000e+00 : f32
    %100 = vector.broadcast %cst_33 : f32 to vector<2x128xf32>
    %101 = arith.mulf %100, %99 : vector<2x128xf32>
    %cst_34 = arith.constant 1.000000e+00 : f32
    %102 = vector.broadcast %cst_34 : f32 to vector<2x128xf32>
    %103 = arith.subf %101, %102 : vector<2x128xf32>
    %104 = vector.extract_strided_slice %96 {offsets = [0, 384], sizes = [2, 128], strides = [1, 1]} : vector<2x512xf32> to vector<2x128xf32>
    %105 = arith.mulf %98, %78 : vector<2x128xf32>
    %106 = arith.mulf %97, %103 : vector<2x128xf32>
    %107 = arith.addf %105, %106 : vector<2x128xf32>
    %108 = math.tanh %107 : vector<2x128xf32>
    %109 = arith.mulf %104, %108 : vector<2x128xf32>
    %c96_i32 = arith.constant 96 : i32
    %110 = vector.broadcast %c96_i32 : i32 to vector<2x128xi32>
    %111 = arith.cmpi slt, %8, %110 : vector<2x128xi32>
    %cst_35 = arith.constant 0.000000e+00 : f32
    %112 = vector.broadcast %cst_35 : f32 to vector<2x128xf32>
    %113 = arith.select %111, %107, %112 : vector<2x128xi1>, vector<2x128xf32>
    %cst_36 = arith.constant 0.000000e+00 : f32
    %114 = vector.broadcast %cst_36 : f32 to vector<2x128xf32>
    %115 = arith.select %111, %109, %114 : vector<2x128xi1>, vector<2x128xf32>
    %116 = vector.extract_strided_slice %1 {offsets = [0, 3], sizes = [2, 1], strides = [1, 1]} : vector<2x8xi32> to vector<2x1xi32>
    %117 = vector.broadcast %116 : vector<2x1xi32> to vector<2x20xi32>
    %118 = arith.cmpi eq, %117, %7 : vector<2x20xi32>
    %cst_37 = arith.constant 1.000000e+00 : f32
    %cst_38 = arith.constant 0.000000e+00 : f32
    %119 = vector.broadcast %cst_37 : f32 to vector<2x20xf32>
    %120 = vector.broadcast %cst_38 : f32 to vector<2x20xf32>
    %121 = arith.select %118, %119, %120 : vector<2x20xi1>, vector<2x20xf32>
    %cst_39 = arith.constant dense<0.000000e+00> : vector<2x512xf32>
    %122 = tpu.matmul %121, %6, %cst_39 {dimension_numbers = #tpu.dot_dimension_numbers<[1], [0], [0], [1], [0, 0, 1, 1], [], []>} : vector<2x20xf32>, vector<20x512xf32>, vector<2x512xf32> -> vector<2x512xf32>
    %cst_40 = arith.constant dense<0.000000e+00> : vector<2x512xf32>
    %123 = tpu.matmul %115, %9, %cst_40 {dimension_numbers = #tpu.dot_dimension_numbers<[1], [0], [0], [1], [0, 0, 1, 1], [], []>} : vector<2x128xf32>, vector<128x512xf32>, vector<2x512xf32> -> vector<2x512xf32>
    %124 = vector.broadcast %10 : vector<1x512xf32> to vector<2x512xf32>
    %125 = arith.addf %123, %124 : vector<2x512xf32>
    %126 = arith.addf %125, %122 : vector<2x512xf32>
    %127 = arith.negf %126 : vector<2x512xf32>
    %128 = math.exp %127 : vector<2x512xf32>
    %cst_41 = arith.constant 1.000000e+00 : f32
    %129 = vector.broadcast %cst_41 : f32 to vector<2x512xf32>
    %130 = arith.addf %129, %128 : vector<2x512xf32>
    %131 = arith.divf %129, %130 : vector<2x512xf32>
    %132 = vector.extract_strided_slice %131 {offsets = [0, 0], sizes = [2, 128], strides = [1, 1]} : vector<2x512xf32> to vector<2x128xf32>
    %133 = vector.extract_strided_slice %131 {offsets = [0, 128], sizes = [2, 128], strides = [1, 1]} : vector<2x512xf32> to vector<2x128xf32>
    %134 = vector.extract_strided_slice %131 {offsets = [0, 256], sizes = [2, 128], strides = [1, 1]} : vector<2x512xf32> to vector<2x128xf32>
    %cst_42 = arith.constant 2.000000e+00 : f32
    %135 = vector.broadcast %cst_42 : f32 to vector<2x128xf32>
    %136 = arith.mulf %135, %134 : vector<2x128xf32>
    %cst_43 = arith.constant 1.000000e+00 : f32
    %137 = vector.broadcast %cst_43 : f32 to vector<2x128xf32>
    %138 = arith.subf %136, %137 : vector<2x128xf32>
    %139 = vector.extract_strided_slice %131 {offsets = [0, 384], sizes = [2, 128], strides = [1, 1]} : vector<2x512xf32> to vector<2x128xf32>
    %140 = arith.mulf %133, %113 : vector<2x128xf32>
    %141 = arith.mulf %132, %138 : vector<2x128xf32>
    %142 = arith.addf %140, %141 : vector<2x128xf32>
    %143 = math.tanh %142 : vector<2x128xf32>
    %144 = arith.mulf %139, %143 : vector<2x128xf32>
    %145 = arith.addf %12, %144 : vector<2x128xf32>
    %146 = vector.extract_strided_slice %1 {offsets = [0, 4], sizes = [2, 1], strides = [1, 1]} : vector<2x8xi32> to vector<2x1xi32>
    %147 = vector.broadcast %146 : vector<2x1xi32> to vector<2x20xi32>
    %148 = arith.cmpi eq, %147, %7 : vector<2x20xi32>
    %cst_44 = arith.constant 1.000000e+00 : f32
    %cst_45 = arith.constant 0.000000e+00 : f32
    %149 = vector.broadcast %cst_44 : f32 to vector<2x20xf32>
    %150 = vector.broadcast %cst_45 : f32 to vector<2x20xf32>
    %151 = arith.select %148, %149, %150 : vector<2x20xi1>, vector<2x20xf32>
    %cst_46 = arith.constant dense<0.000000e+00> : vector<2x512xf32>
    %152 = tpu.matmul %151, %6, %cst_46 {dimension_numbers = #tpu.dot_dimension_numbers<[1], [0], [0], [1], [0, 0, 1, 1], [], []>} : vector<2x20xf32>, vector<20x512xf32>, vector<2x512xf32> -> vector<2x512xf32>
    %cst_47 = arith.constant dense<0.000000e+00> : vector<2x512xf32>
    %153 = tpu.matmul %144, %9, %cst_47 {dimension_numbers = #tpu.dot_dimension_numbers<[1], [0], [0], [1], [0, 0, 1, 1], [], []>} : vector<2x128xf32>, vector<128x512xf32>, vector<2x512xf32> -> vector<2x512xf32>
    %154 = vector.broadcast %10 : vector<1x512xf32> to vector<2x512xf32>
    %155 = arith.addf %153, %154 : vector<2x512xf32>
    %156 = arith.addf %155, %152 : vector<2x512xf32>
    %157 = arith.negf %156 : vector<2x512xf32>
    %158 = math.exp %157 : vector<2x512xf32>
    %cst_48 = arith.constant 1.000000e+00 : f32
    %159 = vector.broadcast %cst_48 : f32 to vector<2x512xf32>
    %160 = arith.addf %159, %158 : vector<2x512xf32>
    %161 = arith.divf %159, %160 : vector<2x512xf32>
    %162 = vector.extract_strided_slice %161 {offsets = [0, 0], sizes = [2, 128], strides = [1, 1]} : vector<2x512xf32> to vector<2x128xf32>
    %163 = vector.extract_strided_slice %161 {offsets = [0, 128], sizes = [2, 128], strides = [1, 1]} : vector<2x512xf32> to vector<2x128xf32>
    %164 = vector.extract_strided_slice %161 {offsets = [0, 256], sizes = [2, 128], strides = [1, 1]} : vector<2x512xf32> to vector<2x128xf32>
    %cst_49 = arith.constant 2.000000e+00 : f32
    %165 = vector.broadcast %cst_49 : f32 to vector<2x128xf32>
    %166 = arith.mulf %165, %164 : vector<2x128xf32>
    %cst_50 = arith.constant 1.000000e+00 : f32
    %167 = vector.broadcast %cst_50 : f32 to vector<2x128xf32>
    %168 = arith.subf %166, %167 : vector<2x128xf32>
    %169 = vector.extract_strided_slice %161 {offsets = [0, 384], sizes = [2, 128], strides = [1, 1]} : vector<2x512xf32> to vector<2x128xf32>
    %170 = arith.mulf %163, %142 : vector<2x128xf32>
    %171 = arith.mulf %162, %168 : vector<2x128xf32>
    %172 = arith.addf %170, %171 : vector<2x128xf32>
    %173 = math.tanh %172 : vector<2x128xf32>
    %174 = arith.mulf %169, %173 : vector<2x128xf32>
    %175 = arith.addf %145, %174 : vector<2x128xf32>
    %176 = vector.extract_strided_slice %1 {offsets = [0, 5], sizes = [2, 1], strides = [1, 1]} : vector<2x8xi32> to vector<2x1xi32>
    %177 = vector.broadcast %176 : vector<2x1xi32> to vector<2x20xi32>
    %178 = arith.cmpi eq, %177, %7 : vector<2x20xi32>
    %cst_51 = arith.constant 1.000000e+00 : f32
    %cst_52 = arith.constant 0.000000e+00 : f32
    %179 = vector.broadcast %cst_51 : f32 to vector<2x20xf32>
    %180 = vector.broadcast %cst_52 : f32 to vector<2x20xf32>
    %181 = arith.select %178, %179, %180 : vector<2x20xi1>, vector<2x20xf32>
    %cst_53 = arith.constant dense<0.000000e+00> : vector<2x512xf32>
    %182 = tpu.matmul %181, %6, %cst_53 {dimension_numbers = #tpu.dot_dimension_numbers<[1], [0], [0], [1], [0, 0, 1, 1], [], []>} : vector<2x20xf32>, vector<20x512xf32>, vector<2x512xf32> -> vector<2x512xf32>
    %cst_54 = arith.constant dense<0.000000e+00> : vector<2x512xf32>
    %183 = tpu.matmul %174, %9, %cst_54 {dimension_numbers = #tpu.dot_dimension_numbers<[1], [0], [0], [1], [0, 0, 1, 1], [], []>} : vector<2x128xf32>, vector<128x512xf32>, vector<2x512xf32> -> vector<2x512xf32>
    %184 = vector.broadcast %10 : vector<1x512xf32> to vector<2x512xf32>
    %185 = arith.addf %183, %184 : vector<2x512xf32>
    %186 = arith.addf %185, %182 : vector<2x512xf32>
    %187 = arith.negf %186 : vector<2x512xf32>
    %188 = math.exp %187 : vector<2x512xf32>
    %cst_55 = arith.constant 1.000000e+00 : f32
    %189 = vector.broadcast %cst_55 : f32 to vector<2x512xf32>
    %190 = arith.addf %189, %188 : vector<2x512xf32>
    %191 = arith.divf %189, %190 : vector<2x512xf32>
    %192 = vector.extract_strided_slice %191 {offsets = [0, 0], sizes = [2, 128], strides = [1, 1]} : vector<2x512xf32> to vector<2x128xf32>
    %193 = vector.extract_strided_slice %191 {offsets = [0, 128], sizes = [2, 128], strides = [1, 1]} : vector<2x512xf32> to vector<2x128xf32>
    %194 = vector.extract_strided_slice %191 {offsets = [0, 256], sizes = [2, 128], strides = [1, 1]} : vector<2x512xf32> to vector<2x128xf32>
    %cst_56 = arith.constant 2.000000e+00 : f32
    %195 = vector.broadcast %cst_56 : f32 to vector<2x128xf32>
    %196 = arith.mulf %195, %194 : vector<2x128xf32>
    %cst_57 = arith.constant 1.000000e+00 : f32
    %197 = vector.broadcast %cst_57 : f32 to vector<2x128xf32>
    %198 = arith.subf %196, %197 : vector<2x128xf32>
    %199 = vector.extract_strided_slice %191 {offsets = [0, 384], sizes = [2, 128], strides = [1, 1]} : vector<2x512xf32> to vector<2x128xf32>
    %200 = arith.mulf %193, %172 : vector<2x128xf32>
    %201 = arith.mulf %192, %198 : vector<2x128xf32>
    %202 = arith.addf %200, %201 : vector<2x128xf32>
    %203 = math.tanh %202 : vector<2x128xf32>
    %204 = arith.mulf %199, %203 : vector<2x128xf32>
    %205 = arith.addf %175, %204 : vector<2x128xf32>
    %206 = vector.extract_strided_slice %1 {offsets = [0, 6], sizes = [2, 1], strides = [1, 1]} : vector<2x8xi32> to vector<2x1xi32>
    %207 = vector.broadcast %206 : vector<2x1xi32> to vector<2x20xi32>
    %208 = arith.cmpi eq, %207, %7 : vector<2x20xi32>
    %cst_58 = arith.constant 1.000000e+00 : f32
    %cst_59 = arith.constant 0.000000e+00 : f32
    %209 = vector.broadcast %cst_58 : f32 to vector<2x20xf32>
    %210 = vector.broadcast %cst_59 : f32 to vector<2x20xf32>
    %211 = arith.select %208, %209, %210 : vector<2x20xi1>, vector<2x20xf32>
    %cst_60 = arith.constant dense<0.000000e+00> : vector<2x512xf32>
    %212 = tpu.matmul %211, %6, %cst_60 {dimension_numbers = #tpu.dot_dimension_numbers<[1], [0], [0], [1], [0, 0, 1, 1], [], []>} : vector<2x20xf32>, vector<20x512xf32>, vector<2x512xf32> -> vector<2x512xf32>
    %cst_61 = arith.constant dense<0.000000e+00> : vector<2x512xf32>
    %213 = tpu.matmul %204, %9, %cst_61 {dimension_numbers = #tpu.dot_dimension_numbers<[1], [0], [0], [1], [0, 0, 1, 1], [], []>} : vector<2x128xf32>, vector<128x512xf32>, vector<2x512xf32> -> vector<2x512xf32>
    %214 = vector.broadcast %10 : vector<1x512xf32> to vector<2x512xf32>
    %215 = arith.addf %213, %214 : vector<2x512xf32>
    %216 = arith.addf %215, %212 : vector<2x512xf32>
    %217 = arith.negf %216 : vector<2x512xf32>
    %218 = math.exp %217 : vector<2x512xf32>
    %cst_62 = arith.constant 1.000000e+00 : f32
    %219 = vector.broadcast %cst_62 : f32 to vector<2x512xf32>
    %220 = arith.addf %219, %218 : vector<2x512xf32>
    %221 = arith.divf %219, %220 : vector<2x512xf32>
    %222 = vector.extract_strided_slice %221 {offsets = [0, 0], sizes = [2, 128], strides = [1, 1]} : vector<2x512xf32> to vector<2x128xf32>
    %223 = vector.extract_strided_slice %221 {offsets = [0, 128], sizes = [2, 128], strides = [1, 1]} : vector<2x512xf32> to vector<2x128xf32>
    %224 = vector.extract_strided_slice %221 {offsets = [0, 256], sizes = [2, 128], strides = [1, 1]} : vector<2x512xf32> to vector<2x128xf32>
    %cst_63 = arith.constant 2.000000e+00 : f32
    %225 = vector.broadcast %cst_63 : f32 to vector<2x128xf32>
    %226 = arith.mulf %225, %224 : vector<2x128xf32>
    %cst_64 = arith.constant 1.000000e+00 : f32
    %227 = vector.broadcast %cst_64 : f32 to vector<2x128xf32>
    %228 = arith.subf %226, %227 : vector<2x128xf32>
    %229 = vector.extract_strided_slice %221 {offsets = [0, 384], sizes = [2, 128], strides = [1, 1]} : vector<2x512xf32> to vector<2x128xf32>
    %230 = arith.mulf %223, %202 : vector<2x128xf32>
    %231 = arith.mulf %222, %228 : vector<2x128xf32>
    %232 = arith.addf %230, %231 : vector<2x128xf32>
    %233 = math.tanh %232 : vector<2x128xf32>
    %234 = arith.mulf %229, %233 : vector<2x128xf32>
    %235 = arith.addf %205, %234 : vector<2x128xf32>
    %236 = vector.extract_strided_slice %1 {offsets = [0, 7], sizes = [2, 1], strides = [1, 1]} : vector<2x8xi32> to vector<2x1xi32>
    %237 = vector.broadcast %236 : vector<2x1xi32> to vector<2x20xi32>
    %238 = arith.cmpi eq, %237, %7 : vector<2x20xi32>
    %cst_65 = arith.constant 1.000000e+00 : f32
    %cst_66 = arith.constant 0.000000e+00 : f32
    %239 = vector.broadcast %cst_65 : f32 to vector<2x20xf32>
    %240 = vector.broadcast %cst_66 : f32 to vector<2x20xf32>
    %241 = arith.select %238, %239, %240 : vector<2x20xi1>, vector<2x20xf32>
    %cst_67 = arith.constant dense<0.000000e+00> : vector<2x512xf32>
    %242 = tpu.matmul %241, %6, %cst_67 {dimension_numbers = #tpu.dot_dimension_numbers<[1], [0], [0], [1], [0, 0, 1, 1], [], []>} : vector<2x20xf32>, vector<20x512xf32>, vector<2x512xf32> -> vector<2x512xf32>
    %cst_68 = arith.constant dense<0.000000e+00> : vector<2x512xf32>
    %243 = tpu.matmul %234, %9, %cst_68 {dimension_numbers = #tpu.dot_dimension_numbers<[1], [0], [0], [1], [0, 0, 1, 1], [], []>} : vector<2x128xf32>, vector<128x512xf32>, vector<2x512xf32> -> vector<2x512xf32>
    %244 = vector.broadcast %10 : vector<1x512xf32> to vector<2x512xf32>
    %245 = arith.addf %243, %244 : vector<2x512xf32>
    %246 = arith.addf %245, %242 : vector<2x512xf32>
    %247 = arith.negf %246 : vector<2x512xf32>
    %248 = math.exp %247 : vector<2x512xf32>
    %cst_69 = arith.constant 1.000000e+00 : f32
    %249 = vector.broadcast %cst_69 : f32 to vector<2x512xf32>
    %250 = arith.addf %249, %248 : vector<2x512xf32>
    %251 = arith.divf %249, %250 : vector<2x512xf32>
    %252 = vector.extract_strided_slice %251 {offsets = [0, 0], sizes = [2, 128], strides = [1, 1]} : vector<2x512xf32> to vector<2x128xf32>
    %253 = vector.extract_strided_slice %251 {offsets = [0, 128], sizes = [2, 128], strides = [1, 1]} : vector<2x512xf32> to vector<2x128xf32>
    %254 = vector.extract_strided_slice %251 {offsets = [0, 256], sizes = [2, 128], strides = [1, 1]} : vector<2x512xf32> to vector<2x128xf32>
    %cst_70 = arith.constant 2.000000e+00 : f32
    %255 = vector.broadcast %cst_70 : f32 to vector<2x128xf32>
    %256 = arith.mulf %255, %254 : vector<2x128xf32>
    %cst_71 = arith.constant 1.000000e+00 : f32
    %257 = vector.broadcast %cst_71 : f32 to vector<2x128xf32>
    %258 = arith.subf %256, %257 : vector<2x128xf32>
    %259 = vector.extract_strided_slice %251 {offsets = [0, 384], sizes = [2, 128], strides = [1, 1]} : vector<2x512xf32> to vector<2x128xf32>
    %260 = arith.mulf %253, %232 : vector<2x128xf32>
    %261 = arith.mulf %252, %258 : vector<2x128xf32>
    %262 = arith.addf %260, %261 : vector<2x128xf32>
    %263 = math.tanh %262 : vector<2x128xf32>
    %264 = arith.mulf %259, %263 : vector<2x128xf32>
    %265 = arith.addf %235, %264 : vector<2x128xf32>
    %cst_72 = arith.constant dense<0.000000e+00> : vector<2x512xf32>
    %266 = tpu.matmul %264, %9, %cst_72 {dimension_numbers = #tpu.dot_dimension_numbers<[1], [0], [0], [1], [0, 0, 1, 1], [], []>} : vector<2x128xf32>, vector<128x512xf32>, vector<2x512xf32> -> vector<2x512xf32>
    %267 = vector.broadcast %10 : vector<1x512xf32> to vector<2x512xf32>
    %268 = arith.addf %266, %267 : vector<2x512xf32>
    %269 = arith.negf %268 : vector<2x512xf32>
    %270 = math.exp %269 : vector<2x512xf32>
    %cst_73 = arith.constant 1.000000e+00 : f32
    %271 = vector.broadcast %cst_73 : f32 to vector<2x512xf32>
    %272 = arith.addf %271, %270 : vector<2x512xf32>
    %273 = arith.divf %271, %272 : vector<2x512xf32>
    %274 = vector.extract_strided_slice %273 {offsets = [0, 0], sizes = [2, 128], strides = [1, 1]} : vector<2x512xf32> to vector<2x128xf32>
    %275 = vector.extract_strided_slice %273 {offsets = [0, 128], sizes = [2, 128], strides = [1, 1]} : vector<2x512xf32> to vector<2x128xf32>
    %276 = vector.extract_strided_slice %273 {offsets = [0, 256], sizes = [2, 128], strides = [1, 1]} : vector<2x512xf32> to vector<2x128xf32>
    %cst_74 = arith.constant 2.000000e+00 : f32
    %277 = vector.broadcast %cst_74 : f32 to vector<2x128xf32>
    %278 = arith.mulf %277, %276 : vector<2x128xf32>
    %cst_75 = arith.constant 1.000000e+00 : f32
    %279 = vector.broadcast %cst_75 : f32 to vector<2x128xf32>
    %280 = arith.subf %278, %279 : vector<2x128xf32>
    %281 = vector.extract_strided_slice %273 {offsets = [0, 384], sizes = [2, 128], strides = [1, 1]} : vector<2x512xf32> to vector<2x128xf32>
    %282 = arith.mulf %275, %262 : vector<2x128xf32>
    %283 = arith.mulf %274, %280 : vector<2x128xf32>
    %284 = arith.addf %282, %283 : vector<2x128xf32>
    %285 = math.tanh %284 : vector<2x128xf32>
    %286 = arith.mulf %281, %285 : vector<2x128xf32>
    %287 = arith.addf %265, %286 : vector<2x128xf32>
    %cst_76 = arith.constant dense<0.000000e+00> : vector<2x512xf32>
    %288 = tpu.matmul %286, %9, %cst_76 {dimension_numbers = #tpu.dot_dimension_numbers<[1], [0], [0], [1], [0, 0, 1, 1], [], []>} : vector<2x128xf32>, vector<128x512xf32>, vector<2x512xf32> -> vector<2x512xf32>
    %289 = vector.broadcast %10 : vector<1x512xf32> to vector<2x512xf32>
    %290 = arith.addf %288, %289 : vector<2x512xf32>
    %291 = arith.negf %290 : vector<2x512xf32>
    %292 = math.exp %291 : vector<2x512xf32>
    %cst_77 = arith.constant 1.000000e+00 : f32
    %293 = vector.broadcast %cst_77 : f32 to vector<2x512xf32>
    %294 = arith.addf %293, %292 : vector<2x512xf32>
    %295 = arith.divf %293, %294 : vector<2x512xf32>
    %296 = vector.extract_strided_slice %295 {offsets = [0, 0], sizes = [2, 128], strides = [1, 1]} : vector<2x512xf32> to vector<2x128xf32>
    %297 = vector.extract_strided_slice %295 {offsets = [0, 128], sizes = [2, 128], strides = [1, 1]} : vector<2x512xf32> to vector<2x128xf32>
    %298 = vector.extract_strided_slice %295 {offsets = [0, 256], sizes = [2, 128], strides = [1, 1]} : vector<2x512xf32> to vector<2x128xf32>
    %cst_78 = arith.constant 2.000000e+00 : f32
    %299 = vector.broadcast %cst_78 : f32 to vector<2x128xf32>
    %300 = arith.mulf %299, %298 : vector<2x128xf32>
    %cst_79 = arith.constant 1.000000e+00 : f32
    %301 = vector.broadcast %cst_79 : f32 to vector<2x128xf32>
    %302 = arith.subf %300, %301 : vector<2x128xf32>
    %303 = vector.extract_strided_slice %295 {offsets = [0, 384], sizes = [2, 128], strides = [1, 1]} : vector<2x512xf32> to vector<2x128xf32>
    %304 = arith.mulf %297, %284 : vector<2x128xf32>
    %305 = arith.mulf %296, %302 : vector<2x128xf32>
    %306 = arith.addf %304, %305 : vector<2x128xf32>
    %307 = math.tanh %306 : vector<2x128xf32>
    %308 = arith.mulf %303, %307 : vector<2x128xf32>
    %309 = arith.addf %287, %308 : vector<2x128xf32>
    %cst_80 = arith.constant dense<0.000000e+00> : vector<2x512xf32>
    %310 = tpu.matmul %308, %9, %cst_80 {dimension_numbers = #tpu.dot_dimension_numbers<[1], [0], [0], [1], [0, 0, 1, 1], [], []>} : vector<2x128xf32>, vector<128x512xf32>, vector<2x512xf32> -> vector<2x512xf32>
    %311 = vector.broadcast %10 : vector<1x512xf32> to vector<2x512xf32>
    %312 = arith.addf %310, %311 : vector<2x512xf32>
    %313 = arith.negf %312 : vector<2x512xf32>
    %314 = math.exp %313 : vector<2x512xf32>
    %cst_81 = arith.constant 1.000000e+00 : f32
    %315 = vector.broadcast %cst_81 : f32 to vector<2x512xf32>
    %316 = arith.addf %315, %314 : vector<2x512xf32>
    %317 = arith.divf %315, %316 : vector<2x512xf32>
    %318 = vector.extract_strided_slice %317 {offsets = [0, 0], sizes = [2, 128], strides = [1, 1]} : vector<2x512xf32> to vector<2x128xf32>
    %319 = vector.extract_strided_slice %317 {offsets = [0, 128], sizes = [2, 128], strides = [1, 1]} : vector<2x512xf32> to vector<2x128xf32>
    %320 = vector.extract_strided_slice %317 {offsets = [0, 256], sizes = [2, 128], strides = [1, 1]} : vector<2x512xf32> to vector<2x128xf32>
    %cst_82 = arith.constant 2.000000e+00 : f32
    %321 = vector.broadcast %cst_82 : f32 to vector<2x128xf32>
    %322 = arith.mulf %321, %320 : vector<2x128xf32>
    %cst_83 = arith.constant 1.000000e+00 : f32
    %323 = vector.broadcast %cst_83 : f32 to vector<2x128xf32>
    %324 = arith.subf %322, %323 : vector<2x128xf32>
    %325 = vector.extract_strided_slice %317 {offsets = [0, 384], sizes = [2, 128], strides = [1, 1]} : vector<2x512xf32> to vector<2x128xf32>
    %326 = arith.mulf %319, %306 : vector<2x128xf32>
    %327 = arith.mulf %318, %324 : vector<2x128xf32>
    %328 = arith.addf %326, %327 : vector<2x128xf32>
    %329 = math.tanh %328 : vector<2x128xf32>
    %330 = arith.mulf %325, %329 : vector<2x128xf32>
    %331 = arith.addf %309, %330 : vector<2x128xf32>
    %332 = vector.extract_strided_slice %331 {offsets = [0, 96], sizes = [2, 32], strides = [1, 1]} : vector<2x128xf32> to vector<2x32xf32>
    %cst_84 = arith.constant 1.250000e-01 : f32
    %333 = vector.broadcast %cst_84 : f32 to vector<2x32xf32>
    %334 = arith.mulf %332, %333 : vector<2x32xf32>
    %c0_85 = arith.constant 0 : index
    %c0_86 = arith.constant 0 : index
    %335 = vector.load %arg6[%c0_85, %c0_86] : memref<1x32xf32, #tpu.memory_space<vmem>>, vector<1x32xf32>
    %336 = vector.broadcast %335 : vector<1x32xf32> to vector<2x32xf32>
    %337 = arith.mulf %334, %336 : vector<2x32xf32>
    %cst_87 = arith.constant dense<0.000000e+00> : vector<2xf32>
    %338 = vector.multi_reduction <add>, %337, %cst_87 [1] : vector<2x32xf32> to vector<2xf32>
    %339 = vector.shape_cast %338 : vector<2xf32> to vector<2x1xf32>
    %c0_88 = arith.constant 0 : index
    %c0_89 = arith.constant 0 : index
    %340 = vector.load %arg7[%c0_88, %c0_89] : memref<1x21xf32, #tpu.memory_space<vmem>>, vector<1x21xf32>
    %341 = vector.broadcast %340 : vector<1x21xf32> to vector<2x21xf32>
    %342 = arith.mulf %3, %341 : vector<2x21xf32>
    %cst_90 = arith.constant dense<0.000000e+00> : vector<2xf32>
    %343 = vector.multi_reduction <add>, %342, %cst_90 [1] : vector<2x21xf32> to vector<2xf32>
    %344 = vector.shape_cast %343 : vector<2xf32> to vector<2x1xf32>
    %345 = arith.addf %339, %344 : vector<2x1xf32>
    %c0_91 = arith.constant 0 : index
    %c0_92 = arith.constant 0 : index
    %346 = vector.load %arg8[%c0_91, %c0_92] : memref<1x1xf32, #tpu.memory_space<vmem>>, vector<1x1xf32>
    %347 = vector.broadcast %346 : vector<1x1xf32> to vector<2x1xf32>
    %348 = arith.addf %345, %347 : vector<2x1xf32>
    %c0_93 = arith.constant 0 : index
    %c0_94 = arith.constant 0 : index
    %349 = vector.load %arg9[%c0_93, %c0_94] : memref<2x1xf32, #tpu.memory_space<vmem>>, vector<2x1xf32>
    tpu.vector_store %arg9[%c0_93, %c0_94], %348 {strides = array<i32>} : memref<2x1xf32, #tpu.memory_space<vmem>>, vector<2x1xf32>,
    return
  }
  func.func @transform_0(%arg0: i32) -> (i32, i32) {
    %c0_i32 = arith.constant 0 : i32
    %c0_i32_0 = arith.constant 0 : i32
    %c0_i32_1 = arith.constant 0 : i32
    return %c0_i32, %c0_i32_0 : i32, i32
  }
  func.func @transform_1(%arg0: i32) -> (i32, i32) {
    %c0_i32 = arith.constant 0 : i32
    %c0_i32_0 = arith.constant 0 : i32
    %c0_i32_1 = arith.constant 0 : i32
    return %c0_i32, %c0_i32_0 : i32, i32
  }
  func.func @transform_2(%arg0: i32) -> (i32, i32) {
    %c0_i32 = arith.constant 0 : i32
    %c0_i32_0 = arith.constant 0 : i32
    %c0_i32_1 = arith.constant 0 : i32
    return %c0_i32, %c0_i32_0 : i32, i32
  }
  func.func @transform_3(%arg0: i32) -> (i32, i32) {
    %c0_i32 = arith.constant 0 : i32
    %c0_i32_0 = arith.constant 0 : i32
    %c0_i32_1 = arith.constant 0 : i32
    return %c0_i32, %c0_i32_0 : i32, i32
  }
  func.func @transform_4(%arg0: i32) -> (i32, i32) {
    %c0_i32 = arith.constant 0 : i32
    %c0_i32_0 = arith.constant 0 : i32
    %c0_i32_1 = arith.constant 0 : i32
    return %c0_i32, %c0_i32_0 : i32, i32
  }
  func.func @transform_5(%arg0: i32) -> (i32, i32) {
    %c0_i32 = arith.constant 0 : i32
    %c0_i32_0 = arith.constant 0 : i32
    %c0_i32_1 = arith.constant 0 : i32
    return %c0_i32, %c0_i32_0 : i32, i32
  }
  func.func @transform_6(%arg0: i32) -> (i32, i32) {
    %c0_i32 = arith.constant 0 : i32
    %c0_i32_0 = arith.constant 0 : i32
    %c0_i32_1 = arith.constant 0 : i32
    return %c0_i32, %c0_i32_0 : i32, i32
  }
  func.func @transform_7(%arg0: i32) -> (i32, i32) {
    %c0_i32 = arith.constant 0 : i32
    %c0_i32_0 = arith.constant 0 : i32
    %c0_i32_1 = arith.constant 0 : i32
    return %c0_i32, %c0_i32_0 : i32, i32
  }
  func.func @transform_8(%arg0: i32) -> (i32, i32) {
    %c0_i32 = arith.constant 0 : i32
    %c0_i32_0 = arith.constant 0 : i32
    %c0_i32_1 = arith.constant 0 : i32
    return %c0_i32, %c0_i32_0 : i32, i32
  }
}

</mosaic_0001>

<llo_original>
// kernel: rnn_model_forward.1
$region0: #{rnn_model_forward.1}
  #allocation0 [shape = 'u32[]', space=smem, size = 0x4, offset = 0x4, fixed_abs, tag = 'smem constant byte address 0x4 - core index']
  #allocation1 [shape = 'u32[144,128]{1,0:T(1,128)}', space=vmem, size = 0x12000, scoped, tag = 'internal scratch']
  #allocation2 [shape = 'f32[1,1]{1,0:T(1,128)S(1)}', space=vmem, size = 0x200, scoped, tag = 'scoped memory for rnn_model_forward.1']
  %s0 = inlined_call_operand.vmem [shape: s32[2,29], index: 0, kind: input, shape index: {}]
  %s1 = inlined_call_operand.hbm [shape: f32[20,50], index: 1, kind: input, shape index: {}]
  %s2 = inlined_call_operand.hbm [shape: f32[50,512], index: 2, kind: input, shape index: {}]
  %s3 = inlined_call_operand.hbm [shape: f32[128,512], index: 3, kind: input, shape index: {}]
  %s4 = inlined_call_operand.hbm [shape: f32[1,512], index: 4, kind: input, shape index: {}]
  %s5 = inlined_call_operand.vmem [shape: f32[1,32], index: 5, kind: input, shape index: {}]
  %s6 = inlined_call_operand.vmem [shape: f32[1,21], index: 6, kind: input, shape index: {}]
  %s7 = inlined_call_operand.<no memory space> [shape: f32[1,1], index: 7, kind: input, shape index: {}]
  %s8 = inlined_call_operand.vmem [shape: f32[2,1], index: 8, kind: output, shape index: {}]
  %s9 = sld [smem:[#allocation0]]
  $region58: #{rnn_model_forward.1} parent=0
    _
  %s11 = ssub.s32 1, %s9
  %s12 = scalar_select 0, %s11, %s9
  %v13 = vstv %s7
  %14 = vst [vmem:[#allocation2] sm:$0x1] %v13
  $region1: #{rnn_model_forward.1} parent=0
    #allocation3 [shape = 'u8[12288]{0}', space=vmem, size = 0x3000, scoped, tag = 'input window, operand 1, single buffered']
    #allocation4 [shape = 's32[1]{0}', space=sflag, size = 0x4, scoped, tag = 'scoped memory for rnn_model_forward.1']
    #allocation5 [shape = 'u8[114688]{0}', space=vmem, size = 0x1c000, scoped, tag = 'input window, operand 2, single buffered']
    #allocation6 [shape = 's32[1]{0}', space=sflag, size = 0x4, scoped, tag = 'scoped memory for rnn_model_forward.1']
    #allocation7 [shape = 'u8[262144]{0}', space=vmem, size = 0x40000, scoped, tag = 'input window, operand 3, single buffered']
    #allocation8 [shape = 'u8[2048]{0}', space=vmem, size = 0x800, scoped, tag = 'input window, operand 4, single buffered']
    #allocation9 [shape = 's32[1]{0}', space=sflag, size = 0x4, scoped, tag = 'scoped memory for rnn_model_forward.1']
    %15 = vsyncpa [#allocation4], 0
    %16 = vsyncpa [#allocation6], 0
    %17 = vsyncpa [#allocation9], 0
    // Predicated region
    $region2: #{rnn_model_forward.1} parent=1 // pred_check
      _
    $region3: #{rnn_model_forward.1} parent=1 // pred_check_branch
      %19 = sbr.rel (0) target = $region5
    $region4: #{rnn_model_forward.1} parent=1 // pred_region
      _
    $region5: #{rnn_model_forward.1} parent=1 // pred_fallthru
      _
    // Predicated region
    $region6: #{rnn_model_forward.1} parent=1 // pred_check
      _
    $region7: #{rnn_model_forward.1} parent=1 // pred_check_branch
      %21 = sbr.rel (0) target = $region9
    $region8: #{rnn_model_forward.1} parent=1 // pred_region
      %s23 = ssub.s32 384, 384
      %24 = vsyncadd [#allocation4], %s23
      %s25 = sshll.u32 [#allocation3], 4
      %s26 = int_to_ptr.vmem [resolvable:$true] %s25
      %31 = dma.hbm_to_vmem [thread:$0]  %s1, 384, %s26, [#allocation4], 128, 128, 8
    $region9: #{rnn_model_forward.1} parent=1 // pred_fallthru
      _
    // Predicated region
    $region10: #{rnn_model_forward.1} parent=1 // pred_check
      _
    $region11: #{rnn_model_forward.1} parent=1 // pred_check_branch
      %33 = sbr.rel (0) target = $region13
    $region12: #{rnn_model_forward.1} parent=1 // pred_region
      %s35 = ssub.s32 3584, 3584
      %36 = vsyncadd [#allocation6], %s35
      %s37 = sshll.u32 [#allocation5], 4
      %s38 = int_to_ptr.vmem [resolvable:$true] %s37
      %43 = dma.hbm_to_vmem [thread:$0]  %s2, 3584, %s38, [#allocation6], 512, 512, 32
    $region13: #{rnn_model_forward.1} parent=1 // pred_fallthru
      _
    // Predicated region
    $region14: #{rnn_model_forward.1} parent=1 // pred_check
      _
    $region15: #{rnn_model_forward.1} parent=1 // pred_check_branch
      %45 = sbr.rel (0) target = $region17
    $region16: #{rnn_model_forward.1} parent=1 // pred_region
      %s47 = ssub.s32 8192, 8192
      %48 = vsyncadd [#allocation6], %s47
      %s49 = sshll.u32 [#allocation7], 4
      %s50 = int_to_ptr.vmem [resolvable:$true] %s49
      %55 = dma.hbm_to_vmem [thread:$0]  %s3, 8192, %s50, [#allocation6], 512, 512, 32
    $region17: #{rnn_model_forward.1} parent=1 // pred_fallthru
      _
    // Predicated region
    $region18: #{rnn_model_forward.1} parent=1 // pred_check
      _
    $region19: #{rnn_model_forward.1} parent=1 // pred_check_branch
      %57 = sbr.rel (0) target = $region21
    $region20: #{rnn_model_forward.1} parent=1 // pred_region
      %s59 = ssub.s32 64, 64
      %60 = vsyncadd [#allocation9], %s59
      %s62 = sshll.u32 [#allocation8], 4
      %s63 = int_to_ptr.vmem [resolvable:$true] %s62
      %65 = dma.hbm_to_vmem [thread:$0]  %s4, 64, %s63, [#allocation9]
    $region21: #{rnn_model_forward.1} parent=1 // pred_fallthru
      _
    // Predicated region
    $region22: #{rnn_model_forward.1} parent=1 // pred_check
      _
    $region23: #{rnn_model_forward.1} parent=1 // pred_check_branch
      %67 = sbr.rel (0) target = $region25
    $region24: #{rnn_model_forward.1} parent=1 // pred_region
      _
    $region25: #{rnn_model_forward.1} parent=1 // pred_fallthru
      _
    // Predicated region
    $region26: #{rnn_model_forward.1} parent=1 // pred_check
      _
    $region27: #{rnn_model_forward.1} parent=1 // pred_check_branch
      %69 = sbr.rel (0) target = $region29
    $region28: #{rnn_model_forward.1} parent=1 // pred_region
      _
    $region29: #{rnn_model_forward.1} parent=1 // pred_fallthru
      _
    // Predicated region
    $region30: #{rnn_model_forward.1} parent=1 // pred_check
      _
    $region31: #{rnn_model_forward.1} parent=1 // pred_check_branch
      %71 = sbr.rel (0) target = $region33
    $region32: #{rnn_model_forward.1} parent=1 // pred_region
      _
    $region33: #{rnn_model_forward.1} parent=1 // pred_fallthru
      _
    // Predicated region
    $region34: #{rnn_model_forward.1} parent=1 // pred_check
      _
    $region35: #{rnn_model_forward.1} parent=1 // pred_check_branch
      %73 = sbr.rel (0) target = $region37
    $region36: #{rnn_model_forward.1} parent=1 // pred_region
      %74 = dma.done [#allocation4], 384
    $region37: #{rnn_model_forward.1} parent=1 // pred_fallthru
      _
    // Predicated region
    $region38: #{rnn_model_forward.1} parent=1 // pred_check
      _
    $region39: #{rnn_model_forward.1} parent=1 // pred_check_branch
      %76 = sbr.rel (0) target = $region41
    $region40: #{rnn_model_forward.1} parent=1 // pred_region
      %77 = dma.done [#allocation6], 3584
    $region41: #{rnn_model_forward.1} parent=1 // pred_fallthru
      _
    // Predicated region
    $region42: #{rnn_model_forward.1} parent=1 // pred_check
      _
    $region43: #{rnn_model_forward.1} parent=1 // pred_check_branch
      %79 = sbr.rel (0) target = $region45
    $region44: #{rnn_model_forward.1} parent=1 // pred_region
      %80 = dma.done [#allocation6], 8192
    $region45: #{rnn_model_forward.1} parent=1 // pred_fallthru
      _
    // Predicated region
    $region46: #{rnn_model_forward.1} parent=1 // pred_check
      _
    $region47: #{rnn_model_forward.1} parent=1 // pred_check_branch
      %82 = sbr.rel (0) target = $region49
    $region48: #{rnn_model_forward.1} parent=1 // pred_region
      %83 = dma.done [#allocation9], 64
    $region49: #{rnn_model_forward.1} parent=1 // pred_fallthru
      _
    %v84 = vld [vmem:[%s0] sm:$0x3]
    %v85 = vcvt.s32.f32 %v84
    %v86 = vld [vmem:[#allocation3] sm:$0xff]
    %v87 = vld [vmem:[#allocation3 + $0x8] sm:$0xff]
    %v88 = vld [vmem:[#allocation3 + $0x10] sm:$0xf]
    %v89 = vld [vmem:[#allocation5] sm:$0xff]
    %v90 = vld [vmem:[#allocation5 + $0x8] sm:$0xff]
    %v91 = vld [vmem:[#allocation5 + $0x10] sm:$0xff]
    %v92 = vld [vmem:[#allocation5 + $0x18] sm:$0xff]
    %v93 = vld [vmem:[#allocation5 + $0x20] sm:$0xff]
    %v94 = vld [vmem:[#allocation5 + $0x28] sm:$0xff]
    %v95 = vld [vmem:[#allocation5 + $0x30] sm:$0xff]
    %v96 = vld [vmem:[#allocation5 + $0x38] sm:$0xff]
    %v97 = vld [vmem:[#allocation5 + $0x40] sm:$0xff]
    %v98 = vld [vmem:[#allocation5 + $0x48] sm:$0xff]
    %v99 = vld [vmem:[#allocation5 + $0x50] sm:$0xff]
    %v100 = vld [vmem:[#allocation5 + $0x58] sm:$0xff]
    %v101 = vld [vmem:[#allocation5 + $0x60] sm:$0xff]
    %v102 = vld [vmem:[#allocation5 + $0x68] sm:$0xff]
    %v103 = vld [vmem:[#allocation5 + $0x70] sm:$0xff]
    %v104 = vld [vmem:[#allocation5 + $0x78] sm:$0xff]
    %v105 = vld [vmem:[#allocation5 + $0x80] sm:$0xff]
    %v106 = vld [vmem:[#allocation5 + $0x88] sm:$0xff]
    %v107 = vld [vmem:[#allocation5 + $0x90] sm:$0xff]
    %v108 = vld [vmem:[#allocation5 + $0x98] sm:$0xff]
    %v109 = vld [vmem:[#allocation5 + $0xa0] sm:$0xff]
    %v110 = vld [vmem:[#allocation5 + $0xa8] sm:$0xff]
    %v111 = vld [vmem:[#allocation5 + $0xb0] sm:$0xff]
    %v112 = vld [vmem:[#allocation5 + $0xb8] sm:$0xff]
    %v113 = vld [vmem:[#allocation5 + $0xc0] sm:$0x3]
    %v114 = vld [vmem:[#allocation5 + $0xc8] sm:$0x3]
    %v115 = vld [vmem:[#allocation5 + $0xd0] sm:$0x3]
    %v116 = vld [vmem:[#allocation5 + $0xd8] sm:$0x3]
    %vm117 = vcmask 408576
    %v119 = vsel %vm117, %v86, 0
    %v122 = vsel %vm117, %v87, 0
    %v125 = vsel %vm117, %v88, 0
    %vm127 = vcmask 1041408
    %v129 = vsel %vm127, %v113, 0
    %v132 = vsel %vm127, %v114, 0
    %v135 = vsel %vm127, %v115, 0
    %v138 = vsel %vm127, %v116, 0
    %140 = vmatprep.subr.mxu0 %v90
    %141 = vmatpush1.msra.mxu0 %v89
    %142 = vmatprep.subr.mxu0 %v94
    %143 = vmatpush1.msra.mxu0 %v93
    %144 = vmatprep.subr.mxu0 %v98
    %145 = vmatpush1.msra.mxu0 %v97
    %146 = vmatprep.subr.mxu0 %v102
    %147 = vmatpush1.msra.mxu0 %v101
    %148 = vmatprep.subr.mxu0 %v106
    %149 = vmatpush1.msra.mxu0 %v105
    %150 = vmatprep.subr.mxu0 %v110
    %151 = vmatpush1.msra.mxu0 %v109
    %152 = vmatprep.subr.mxu0 %v132
    %153 = vmatpush1.msra.mxu0 %v129
    %154 = vmatprep.subr.mxu0 0.0
    %155 = vmatpush1.msra.mxu0 0.0
    %156 = vmatprep.subr.mxu0 0.0
    %157 = vmatpush1.msra.mxu0 0.0
    %158 = vmatprep.subr.mxu0 0.0
    %159 = vmatpush1.msra.mxu0 0.0
    %160 = vmatprep.subr.mxu0 0.0
    %161 = vmatpush1.msra.mxu0 0.0
    %162 = vmatprep.subr.mxu0 0.0
    %163 = vmatpush1.msra.mxu0 0.0
    %164 = vmatprep.subr.mxu0 0.0
    %165 = vmatpush1.msra.mxu0 0.0
    %166 = vmatprep.subr.mxu0 0.0
    %167 = vmatpush1.msra.mxu0 0.0
    %168 = vmatprep.subr.mxu0 0.0
    %169 = vmatpush1.msra.mxu0 0.0
    %170 = vmatprep.subr.mxu0 0.0
    %171 = vmatpush1.msra.mxu0 0.0
    %172 = vmatprep.subr.mxu0 0.0
    %173 = vmatpush1.msra.mxu0 0.0
    %174 = vmatprep.subr.mxu0 0.0
    %175 = vmatpush1.msra.mxu0 0.0
    %176 = vmatprep.subr.mxu0 0.0
    %177 = vmatpush1.msra.mxu0 0.0
    %178 = vmatprep.subr.mxu0 0.0
    %179 = vmatpush1.msra.mxu0 0.0
    %180 = vmatprep.subr.mxu0 0.0
    %181 = vmatpush1.msra.mxu0 0.0
    %182 = vmatprep.subr.mxu0 0.0
    %183 = vmatpush1.msra.mxu0 0.0
    %184 = vmatprep.subr.mxu0 0.0
    %185 = vmatpush1.msra.mxu0 0.0
    %186 = vmatprep.subr.mxu0 0.0
    %187 = vmatpush1.msra.mxu0 0.0
    %188 = vmatprep.subr.mxu0 0.0
    %189 = vmatpush1.msra.mxu0 0.0
    %190 = vmatprep.subr.mxu0 0.0
    %191 = vmatpush1.msra.mxu0 0.0
    %192 = vmatprep.subr.mxu0 0.0
    %193 = vmatpush1.msra.mxu0 0.0
    %194 = vmatprep.subr.mxu0 0.0
    %195 = vmatpush1.msra.mxu0 0.0
    %196 = vmatprep.subr.mxu0 0.0
    %197 = vmatpush1.msra.mxu0 0.0
    %198 = vmatprep.subr.mxu0 0.0
    %199 = vmatpush1.msra.mxu0 0.0
    %200 = vmatprep.subr.mxu0 0.0
    %201 = vmatpush1.msra.mxu0 0.0
    %202 = vmatprep.subr.mxu0 0.0
    %203 = vmatpush1.msra.mxu0 0.0
    %204 = vmatprep.mubr.f32.mxu0 0.0
    %205 = vmatmul.mubr.f32.gmra.mrb[0].mxu0 %v119
    %v206 = vpop.f32.mrb[0].mxu0
    %v207 = vadd.f32 0.0, %v206
    %v208 = vpop.f32.mrb[0].mxu0
    %v209 = vadd.f32 0.0, %v208
    %210 = vmatprep.mubr.f32.mxu0 0.0
    %211 = vmatmul.mubr.f32.gmra.mrb[0].mxu0 %v122
    %v212 = vpop.f32.mrb[0].mxu0
    %v213 = vadd.f32 0.0, %v212
    %v214 = vpop.f32.mrb[0].mxu0
    %v215 = vadd.f32 0.0, %v214
    %216 = vmatprep.mubr.f32.mxu0 0.0
    %217 = vmatmul.mubr.f32.gmra.mrb[0].mxu0 %v125
    %v218 = vpop.f32.mrb[0].mxu0
    %v219 = vadd.f32 0.0, %v218
    %v220 = vpop.f32.mrb[0].mxu0
    %v221 = vadd.f32 0.0, %v220
    %222 = vdwg.mxu0
    %223 = vmatprep.subr.mxu0 %v92
    %224 = vmatpush1.msra.mxu0 %v91
    %225 = vmatprep.subr.mxu0 %v96
    %226 = vmatpush1.msra.mxu0 %v95
    %227 = vmatprep.subr.mxu0 %v100
    %228 = vmatpush1.msra.mxu0 %v99
    %229 = vmatprep.subr.mxu0 %v104
    %230 = vmatpush1.msra.mxu0 %v103
    %231 = vmatprep.subr.mxu0 %v108
    %232 = vmatpush1.msra.mxu0 %v107
    %233 = vmatprep.subr.mxu0 %v112
    %234 = vmatpush1.msra.mxu0 %v111
    %235 = vmatprep.subr.mxu0 %v138
    %236 = vmatpush1.msra.mxu0 %v135
    %237 = vmatprep.subr.mxu0 0.0
    %238 = vmatpush1.msra.mxu0 0.0
    %239 = vmatprep.subr.mxu0 0.0
    %240 = vmatpush1.msra.mxu0 0.0
    %241 = vmatprep.subr.mxu0 0.0
    %242 = vmatpush1.msra.mxu0 0.0
    %243 = vmatprep.subr.mxu0 0.0
    %244 = vmatpush1.msra.mxu0 0.0
    %245 = vmatprep.subr.mxu0 0.0
    %246 = vmatpush1.msra.mxu0 0.0
    %247 = vmatprep.subr.mxu0 0.0
    %248 = vmatpush1.msra.mxu0 0.0
    %249 = vmatprep.subr.mxu0 0.0
    %250 = vmatpush1.msra.mxu0 0.0
    %251 = vmatprep.subr.mxu0 0.0
    %252 = vmatpush1.msra.mxu0 0.0
    %253 = vmatprep.subr.mxu0 0.0
    %254 = vmatpush1.msra.mxu0 0.0
    %255 = vmatprep.subr.mxu0 0.0
    %256 = vmatpush1.msra.mxu0 0.0
    %257 = vmatprep.subr.mxu0 0.0
    %258 = vmatpush1.msra.mxu0 0.0
    %259 = vmatprep.subr.mxu0 0.0
    %260 = vmatpush1.msra.mxu0 0.0
    %261 = vmatprep.subr.mxu0 0.0
    %262 = vmatpush1.msra.mxu0 0.0
    %263 = vmatprep.subr.mxu0 0.0
    %264 = vmatpush1.msra.mxu0 0.0
    %265 = vmatprep.subr.mxu0 0.0
    %266 = vmatpush1.msra.mxu0 0.0
    %267 = vmatprep.subr.mxu0 0.0
    %268 = vmatpush1.msra.mxu0 0.0
    %269 = vmatprep.subr.mxu0 0.0
    %270 = vmatpush1.msra.mxu0 0.0
    %271 = vmatprep.subr.mxu0 0.0
    %272 = vmatpush1.msra.mxu0 0.0
    %273 = vmatprep.subr.mxu0 0.0
    %274 = vmatpush1.msra.mxu0 0.0
    %275 = vmatprep.subr.mxu0 0.0
    %276 = vmatpush1.msra.mxu0 0.0
    %277 = vmatprep.subr.mxu0 0.0
    %278 = vmatpush1.msra.mxu0 0.0
    %279 = vmatprep.subr.mxu0 0.0
    %280 = vmatpush1.msra.mxu0 0.0
    %281 = vmatprep.subr.mxu0 0.0
    %282 = vmatpush1.msra.mxu0 0.0
    %283 = vmatprep.subr.mxu0 0.0
    %284 = vmatpush1.msra.mxu0 0.0
    %285 = vmatprep.subr.mxu0 0.0
    %286 = vmatpush1.msra.mxu0 0.0
    %287 = vmatprep.mubr.f32.mxu0 0.0
    %288 = vmatmul.mubr.f32.gmra.mrb[0].mxu0 %v119
    %v289 = vpop.f32.mrb[0].mxu0
    %v290 = vadd.f32 0.0, %v289
    %v291 = vpop.f32.mrb[0].mxu0
    %v292 = vadd.f32 0.0, %v291
    %293 = vmatprep.mubr.f32.mxu0 0.0
    %294 = vmatmul.mubr.f32.gmra.mrb[0].mxu0 %v122
    %v295 = vpop.f32.mrb[0].mxu0
    %v296 = vadd.f32 0.0, %v295
    %v297 = vpop.f32.mrb[0].mxu0
    %v298 = vadd.f32 0.0, %v297
    %299 = vmatprep.mubr.f32.mxu0 0.0
    %300 = vmatmul.mubr.f32.gmra.mrb[0].mxu0 %v125
    %v301 = vpop.f32.mrb[0].mxu0
    %v302 = vadd.f32 0.0, %v301
    %v303 = vpop.f32.mrb[0].mxu0
    %v304 = vadd.f32 0.0, %v303
    %305 = vdwg.mxu0
    %v306 = vlaneseq
    %v307 = vand.u32 %v306, 127
    %v308 = vld [vmem:[#allocation7] sm:$0xff]
    %v309 = vld [vmem:[#allocation7 + $0x8] sm:$0xff]
    %v310 = vld [vmem:[#allocation7 + $0x10] sm:$0xff]
    %v311 = vld [vmem:[#allocation7 + $0x18] sm:$0xff]
    %v312 = vld [vmem:[#allocation7 + $0x20] sm:$0xff]
    %v313 = vld [vmem:[#allocation7 + $0x28] sm:$0xff]
    %v314 = vld [vmem:[#allocation7 + $0x30] sm:$0xff]
    %v315 = vld [vmem:[#allocation7 + $0x38] sm:$0xff]
    %v316 = vld [vmem:[#allocation7 + $0x40] sm:$0xff]
    %v317 = vld [vmem:[#allocation7 + $0x48] sm:$0xff]
    %v318 = vld [vmem:[#allocation7 + $0x50] sm:$0xff]
    %v319 = vld [vmem:[#allocation7 + $0x58] sm:$0xff]
    %v320 = vld [vmem:[#allocation7 + $0x60] sm:$0xff]
    %v321 = vld [vmem:[#allocation7 + $0x68] sm:$0xff]
    %v322 = vld [vmem:[#allocation7 + $0x70] sm:$0xff]
    %v323 = vld [vmem:[#allocation7 + $0x78] sm:$0xff]
    %v324 = vld [vmem:[#allocation7 + $0x80] sm:$0xff]
    %v325 = vld [vmem:[#allocation7 + $0x88] sm:$0xff]
    %v326 = vld [vmem:[#allocation7 + $0x90] sm:$0xff]
    %v327 = vld [vmem:[#allocation7 + $0x98] sm:$0xff]
    %v328 = vld [vmem:[#allocation7 + $0xa0] sm:$0xff]
    %v329 = vld [vmem:[#allocation7 + $0xa8] sm:$0xff]
    %v330 = vld [vmem:[#allocation7 + $0xb0] sm:$0xff]
    %v331 = vld [vmem:[#allocation7 + $0xb8] sm:$0xff]
    %v332 = vld [vmem:[#allocation7 + $0xc0] sm:$0xff]
    %v333 = vld [vmem:[#allocation7 + $0xc8] sm:$0xff]
    %v334 = vld [vmem:[#allocation7 + $0xd0] sm:$0xff]
    %v335 = vld [vmem:[#allocation7 + $0xd8] sm:$0xff]
    %v336 = vld [vmem:[#allocation7 + $0xe0] sm:$0xff]
    %v337 = vld [vmem:[#allocation7 + $0xe8] sm:$0xff]
    %v338 = vld [vmem:[#allocation7 + $0xf0] sm:$0xff]
    %v339 = vld [vmem:[#allocation7 + $0xf8] sm:$0xff]
    %v340 = vld [vmem:[#allocation7 + $0x100] sm:$0xff]
    %v341 = vld [vmem:[#allocation7 + $0x108] sm:$0xff]
    %v342 = vld [vmem:[#allocation7 + $0x110] sm:$0xff]
    %v343 = vld [vmem:[#allocation7 + $0x118] sm:$0xff]
    %v344 = vld [vmem:[#allocation7 + $0x120] sm:$0xff]
    %v345 = vld [vmem:[#allocation7 + $0x128] sm:$0xff]
    %v346 = vld [vmem:[#allocation7 + $0x130] sm:$0xff]
    %v347 = vld [vmem:[#allocation7 + $0x138] sm:$0xff]
    %v348 = vld [vmem:[#allocation7 + $0x140] sm:$0xff]
    %v349 = vld [vmem:[#allocation7 + $0x148] sm:$0xff]
    %v350 = vld [vmem:[#allocation7 + $0x150] sm:$0xff]
    %v351 = vld [vmem:[#allocation7 + $0x158] sm:$0xff]
    %v352 = vld [vmem:[#allocation7 + $0x160] sm:$0xff]
    %v353 = vld [vmem:[#allocation7 + $0x168] sm:$0xff]
    %v354 = vld [vmem:[#allocation7 + $0x170] sm:$0xff]
    %v355 = vld [vmem:[#allocation7 + $0x178] sm:$0xff]
    %v356 = vld [vmem:[#allocation7 + $0x180] sm:$0xff]
    %v357 = vld [vmem:[#allocation7 + $0x188] sm:$0xff]
    %v358 = vld [vmem:[#allocation7 + $0x190] sm:$0xff]
    %v359 = vld [vmem:[#allocation7 + $0x198] sm:$0xff]
    %v360 = vld [vmem:[#allocation7 + $0x1a0] sm:$0xff]
    %v361 = vld [vmem:[#allocation7 + $0x1a8] sm:$0xff]
    %v362 = vld [vmem:[#allocation7 + $0x1b0] sm:$0xff]
    %v363 = vld [vmem:[#allocation7 + $0x1b8] sm:$0xff]
    %v364 = vld [vmem:[#allocation7 + $0x1c0] sm:$0xff]
    %v365 = vld [vmem:[#allocation7 + $0x1c8] sm:$0xff]
    %v366 = vld [vmem:[#allocation7 + $0x1d0] sm:$0xff]
    %v367 = vld [vmem:[#allocation7 + $0x1d8] sm:$0xff]
    %v368 = vld [vmem:[#allocation7 + $0x1e0] sm:$0xff]
    %v369 = vld [vmem:[#allocation7 + $0x1e8] sm:$0xff]
    %v370 = vld [vmem:[#allocation7 + $0x1f0] sm:$0xff]
    %v371 = vld [vmem:[#allocation7 + $0x1f8] sm:$0xff]
    %v372 = vld [vmem:[#allocation8] sm:$0xf]
    %373 = vset.pattern.permute.xlu0 0
    %374 = vperm.xlu0 %373, %v84
    %v375 = vpop.permute.xlu0 %374
    %vm376 = vcmp.eq.s32.totalorder %v375, %v307
    %v377 = vsel %vm376, 1.0, 0.0
    %vm378 = vcmask 162816
    %v380 = vsel %vm378, %v377, 0
    %vm382 = vcmask 1043456
    %v384 = vsel %vm382, %v219, 0
    %v387 = vsel %vm382, %v221, 0
    %v390 = vsel %vm382, %v302, 0
    %v393 = vsel %vm382, %v304, 0
    %395 = vmatprep.subr.mxu0 %v209
    %396 = vmatpush1.msra.mxu0 %v207
    %397 = vmatprep.subr.mxu0 %v215
    %398 = vmatpush1.msra.mxu0 %v213
    %399 = vmatprep.subr.mxu0 %v387
    %400 = vmatpush1.msra.mxu0 %v384
    %401 = vmatprep.subr.mxu0 0.0
    %402 = vmatpush1.msra.mxu0 0.0
    %403 = vmatprep.subr.mxu0 0.0
    %404 = vmatpush1.msra.mxu0 0.0
    %405 = vmatprep.subr.mxu0 0.0
    %406 = vmatpush1.msra.mxu0 0.0
    %407 = vmatprep.subr.mxu0 0.0
    %408 = vmatpush1.msra.mxu0 0.0
    %409 = vmatprep.subr.mxu0 0.0
    %410 = vmatpush1.msra.mxu0 0.0
    %411 = vmatprep.subr.mxu0 0.0
    %412 = vmatpush1.msra.mxu0 0.0
    %413 = vmatprep.subr.mxu0 0.0
    %414 = vmatpush1.msra.mxu0 0.0
    %415 = vmatprep.subr.mxu0 0.0
    %416 = vmatpush1.msra.mxu0 0.0
    %417 = vmatprep.subr.mxu0 0.0
    %418 = vmatpush1.msra.mxu0 0.0
    %419 = vmatprep.subr.mxu0 0.0
    %420 = vmatpush1.msra.mxu0 0.0
    %421 = vmatprep.subr.mxu0 0.0
    %422 = vmatpush1.msra.mxu0 0.0
    %423 = vmatprep.subr.mxu0 0.0
    %424 = vmatpush1.msra.mxu0 0.0
    %425 = vmatprep.subr.mxu0 0.0
    %426 = vmatpush1.msra.mxu0 0.0
    %427 = vmatprep.subr.mxu0 0.0
    %428 = vmatpush1.msra.mxu0 0.0
    %429 = vmatprep.subr.mxu0 0.0
    %430 = vmatpush1.msra.mxu0 0.0
    %431 = vmatprep.subr.mxu0 0.0
    %432 = vmatpush1.msra.mxu0 0.0
    %433 = vmatprep.subr.mxu0 0.0
    %434 = vmatpush1.msra.mxu0 0.0
    %435 = vmatprep.subr.mxu0 0.0
    %436 = vmatpush1.msra.mxu0 0.0
    %437 = vmatprep.subr.mxu0 0.0
    %438 = vmatpush1.msra.mxu0 0.0
    %439 = vmatprep.subr.mxu0 0.0
    %440 = vmatpush1.msra.mxu0 0.0
    %441 = vmatprep.subr.mxu0 0.0
    %442 = vmatpush1.msra.mxu0 0.0
    %443 = vmatprep.subr.mxu0 0.0
    %444 = vmatpush1.msra.mxu0 0.0
    %445 = vmatprep.subr.mxu0 0.0
    %446 = vmatpush1.msra.mxu0 0.0
    %447 = vmatprep.subr.mxu0 0.0
    %448 = vmatpush1.msra.mxu0 0.0
    %449 = vmatprep.subr.mxu0 0.0
    %450 = vmatpush1.msra.mxu0 0.0
    %451 = vmatprep.subr.mxu0 0.0
    %452 = vmatpush1.msra.mxu0 0.0
    %453 = vmatprep.subr.mxu0 0.0
    %454 = vmatpush1.msra.mxu0 0.0
    %455 = vmatprep.subr.mxu0 0.0
    %456 = vmatpush1.msra.mxu0 0.0
    %457 = vmatprep.subr.mxu0 0.0
    %458 = vmatpush1.msra.mxu0 0.0
    %459 = vmatprep.mubr.f32.mxu0 0.0
    %460 = vmatmul.mubr.f32.gmra.mrb[0].mxu0 %v380
    %v461 = vpop.f32.mrb[0].mxu0
    %v462 = vadd.f32 0.0, %v461
    %v463 = vpop.f32.mrb[0].mxu0
    %v464 = vadd.f32 0.0, %v463
    %465 = vdwg.mxu0
    %466 = vmatprep.subr.mxu0 %v292
    %467 = vmatpush1.msra.mxu0 %v290
    %468 = vmatprep.subr.mxu0 %v298
    %469 = vmatpush1.msra.mxu0 %v296
    %470 = vmatprep.subr.mxu0 %v393
    %471 = vmatpush1.msra.mxu0 %v390
    %472 = vmatprep.subr.mxu0 0.0
    %473 = vmatpush1.msra.mxu0 0.0
    %474 = vmatprep.subr.mxu0 0.0
    %475 = vmatpush1.msra.mxu0 0.0
    %476 = vmatprep.subr.mxu0 0.0
    %477 = vmatpush1.msra.mxu0 0.0
    %478 = vmatprep.subr.mxu0 0.0
    %479 = vmatpush1.msra.mxu0 0.0
    %480 = vmatprep.subr.mxu0 0.0
    %481 = vmatpush1.msra.mxu0 0.0
    %482 = vmatprep.subr.mxu0 0.0
    %483 = vmatpush1.msra.mxu0 0.0
    %484 = vmatprep.subr.mxu0 0.0
    %485 = vmatpush1.msra.mxu0 0.0
    %486 = vmatprep.subr.mxu0 0.0
    %487 = vmatpush1.msra.mxu0 0.0
    %488 = vmatprep.subr.mxu0 0.0
    %489 = vmatpush1.msra.mxu0 0.0
    %490 = vmatprep.subr.mxu0 0.0
    %491 = vmatpush1.msra.mxu0 0.0
    %492 = vmatprep.subr.mxu0 0.0
    %493 = vmatpush1.msra.mxu0 0.0
    %494 = vmatprep.subr.mxu0 0.0
    %495 = vmatpush1.msra.mxu0 0.0
    %496 = vmatprep.subr.mxu0 0.0
    %497 = vmatpush1.msra.mxu0 0.0
    %498 = vmatprep.subr.mxu0 0.0
    %499 = vmatpush1.msra.mxu0 0.0
    %500 = vmatprep.subr.mxu0 0.0
    %501 = vmatpush1.msra.mxu0 0.0
    %502 = vmatprep.subr.mxu0 0.0
    %503 = vmatpush1.msra.mxu0 0.0
    %504 = vmatprep.subr.mxu0 0.0
    %505 = vmatpush1.msra.mxu0 0.0
    %506 = vmatprep.subr.mxu0 0.0
    %507 = vmatpush1.msra.mxu0 0.0
    %508 = vmatprep.subr.mxu0 0.0
    %509 = vmatpush1.msra.mxu0 0.0
    %510 = vmatprep.subr.mxu0 0.0
    %511 = vmatpush1.msra.mxu0 0.0
    %512 = vmatprep.subr.mxu0 0.0
    %513 = vmatpush1.msra.mxu0 0.0
    %514 = vmatprep.subr.mxu0 0.0
    %515 = vmatpush1.msra.mxu0 0.0
    %516 = vmatprep.subr.mxu0 0.0
    %517 = vmatpush1.msra.mxu0 0.0
    %518 = vmatprep.subr.mxu0 0.0
    %519 = vmatpush1.msra.mxu0 0.0
    %520 = vmatprep.subr.mxu0 0.0
    %521 = vmatpush1.msra.mxu0 0.0
    %522 = vmatprep.subr.mxu0 0.0
    %523 = vmatpush1.msra.mxu0 0.0
    %524 = vmatprep.subr.mxu0 0.0
    %525 = vmatpush1.msra.mxu0 0.0
    %526 = vmatprep.subr.mxu0 0.0
    %527 = vmatpush1.msra.mxu0 0.0
    %528 = vmatprep.subr.mxu0 0.0
    %529 = vmatpush1.msra.mxu0 0.0
    %530 = vmatprep.mubr.f32.mxu0 0.0
    %531 = vmatmul.mubr.f32.gmra.mrb[0].mxu0 %v380
    %v532 = vpop.f32.mrb[0].mxu0
    %v533 = vadd.f32 0.0, %v532
    %v534 = vpop.f32.mrb[0].mxu0
    %v535 = vadd.f32 0.0, %v534
    %536 = vdwg.mxu0
    %v538 = vlaneseq
    %v539 = vshrl.u32 %v538, 7
    %v540 = vsub.s32 0, %v539
    %v541 = vrot.slane %v372, %v540
    %v542 = vlaneseq
    %v543 = vshrl.u32 %v542, 7
    %v544 = vsub.s32 1, %v543
    %v545 = vrot.slane %v372, %v544
    %v546 = vlaneseq
    %v547 = vshrl.u32 %v546, 7
    %v548 = vsub.s32 2, %v547
    %v549 = vrot.slane %v372, %v548
    %v550 = vlaneseq
    %v551 = vshrl.u32 %v550, 7
    %v552 = vsub.s32 3, %v551
    %v553 = vrot.slane %v372, %v552
    %v558 = vadd.f32 %v541, %v462
    %v559 = vadd.f32 %v545, %v464
    %v560 = vadd.f32 %v549, %v533
    %v561 = vadd.f32 %v553, %v535
    %v562 = vxor.u32 %v558, 2147483648
    %v563 = vxor.u32 %v559, 2147483648
    %v564 = vxor.u32 %v560, 2147483648
    %v565 = vxor.u32 %v561, 2147483648
    %v566 = vmul.f32 %v562, 1.442695
    %v567 = vpow.pop %v566
    %v568 = vmul.f32 %v563, 1.442695
    %v569 = vpow.pop %v568
    %v570 = vmul.f32 %v564, 1.442695
    %v571 = vpow.pop %v570
    %v572 = vmul.f32 %v565, 1.442695
    %v573 = vpow.pop %v572
    %v574 = vadd.f32 %v567, 1.0
    %v575 = vadd.f32 %v569, 1.0
    %v576 = vadd.f32 %v571, 1.0
    %v577 = vadd.f32 %v573, 1.0
    %v578 = vrcp.pop %v574
    %v579 = vmul.f32 1.0, %v578
    %v580 = vrcp.pop %v575
    %v581 = vmul.f32 1.0, %v580
    %v582 = vrcp.pop %v576
    %v583 = vmul.f32 1.0, %v582
    %v584 = vrcp.pop %v577
    %v585 = vmul.f32 1.0, %v584
    %v586 = vmul.f32 %v583, 2.0
    %v587 = vsub.f32 %v586, 1.0
    %v588 = vmul.f32 %v581, 0.0
    %v589 = vmul.f32 %v579, %v587
    %v590 = vadd.f32 %v588, %v589
    %v591 = vtanh.pop %v590
    %v592 = vmul.f32 %v585, %v591
    %vm593 = vcmp.lt.s32.totalorder %v307, 32
    %v594 = vsel %vm593, %v590, 0.0
    %v595 = vsel %vm593, %v592, 0.0
    %596 = vset.pattern.permute.xlu0 1
    %597 = vperm.xlu0 %596, %v84
    %v598 = vpop.permute.xlu0 %597
    %vm599 = vcmp.eq.s32.totalorder %v598, %v307
    %v600 = vsel %vm599, 1.0, 0.0
    %v602 = vsel %vm378, %v600, 0
    %604 = vmatprep.subr.mxu0 %v209
    %605 = vmatpush1.msra.mxu0 %v207
    %606 = vmatprep.subr.mxu0 %v215
    %607 = vmatpush1.msra.mxu0 %v213
    %608 = vmatprep.subr.mxu0 %v387
    %609 = vmatpush1.msra.mxu0 %v384
    %610 = vmatprep.subr.mxu0 0.0
    %611 = vmatpush1.msra.mxu0 0.0
    %612 = vmatprep.subr.mxu0 0.0
    %613 = vmatpush1.msra.mxu0 0.0
    %614 = vmatprep.subr.mxu0 0.0
    %615 = vmatpush1.msra.mxu0 0.0
    %616 = vmatprep.subr.mxu0 0.0
    %617 = vmatpush1.msra.mxu0 0.0
    %618 = vmatprep.subr.mxu0 0.0
    %619 = vmatpush1.msra.mxu0 0.0
    %620 = vmatprep.subr.mxu0 0.0
    %621 = vmatpush1.msra.mxu0 0.0
    %622 = vmatprep.subr.mxu0 0.0
    %623 = vmatpush1.msra.mxu0 0.0
    %624 = vmatprep.subr.mxu0 0.0
    %625 = vmatpush1.msra.mxu0 0.0
    %626 = vmatprep.subr.mxu0 0.0
    %627 = vmatpush1.msra.mxu0 0.0
    %628 = vmatprep.subr.mxu0 0.0
    %629 = vmatpush1.msra.mxu0 0.0
    %630 = vmatprep.subr.mxu0 0.0
    %631 = vmatpush1.msra.mxu0 0.0
    %632 = vmatprep.subr.mxu0 0.0
    %633 = vmatpush1.msra.mxu0 0.0
    %634 = vmatprep.subr.mxu0 0.0
    %635 = vmatpush1.msra.mxu0 0.0
    %636 = vmatprep.subr.mxu0 0.0
    %637 = vmatpush1.msra.mxu0 0.0
    %638 = vmatprep.subr.mxu0 0.0
    %639 = vmatpush1.msra.mxu0 0.0
    %640 = vmatprep.subr.mxu0 0.0
    %641 = vmatpush1.msra.mxu0 0.0
    %642 = vmatprep.subr.mxu0 0.0
    %643 = vmatpush1.msra.mxu0 0.0
    %644 = vmatprep.subr.mxu0 0.0
    %645 = vmatpush1.msra.mxu0 0.0
    %646 = vmatprep.subr.mxu0 0.0
    %647 = vmatpush1.msra.mxu0 0.0
    %648 = vmatprep.subr.mxu0 0.0
    %649 = vmatpush1.msra.mxu0 0.0
    %650 = vmatprep.subr.mxu0 0.0
    %651 = vmatpush1.msra.mxu0 0.0
    %652 = vmatprep.subr.mxu0 0.0
    %653 = vmatpush1.msra.mxu0 0.0
    %654 = vmatprep.subr.mxu0 0.0
    %655 = vmatpush1.msra.mxu0 0.0
    %656 = vmatprep.subr.mxu0 0.0
    %657 = vmatpush1.msra.mxu0 0.0
    %658 = vmatprep.subr.mxu0 0.0
    %659 = vmatpush1.msra.mxu0 0.0
    %660 = vmatprep.subr.mxu0 0.0
    %661 = vmatpush1.msra.mxu0 0.0
    %662 = vmatprep.subr.mxu0 0.0
    %663 = vmatpush1.msra.mxu0 0.0
    %664 = vmatprep.subr.mxu0 0.0
    %665 = vmatpush1.msra.mxu0 0.0
    %666 = vmatprep.subr.mxu0 0.0
    %667 = vmatpush1.msra.mxu0 0.0
    %668 = vmatprep.mubr.f32.mxu0 0.0
    %669 = vmatmul.mubr.f32.gmra.mrb[0].mxu0 %v602
    %v670 = vpop.f32.mrb[0].mxu0
    %v671 = vadd.f32 0.0, %v670
    %v672 = vpop.f32.mrb[0].mxu0
    %v673 = vadd.f32 0.0, %v672
    %674 = vdwg.mxu0
    %675 = vmatprep.subr.mxu0 %v292
    %676 = vmatpush1.msra.mxu0 %v290
    %677 = vmatprep.subr.mxu0 %v298
    %678 = vmatpush1.msra.mxu0 %v296
    %679 = vmatprep.subr.mxu0 %v393
    %680 = vmatpush1.msra.mxu0 %v390
    %681 = vmatprep.subr.mxu0 0.0
    %682 = vmatpush1.msra.mxu0 0.0
    %683 = vmatprep.subr.mxu0 0.0
    %684 = vmatpush1.msra.mxu0 0.0
    %685 = vmatprep.subr.mxu0 0.0
    %686 = vmatpush1.msra.mxu0 0.0
    %687 = vmatprep.subr.mxu0 0.0
    %688 = vmatpush1.msra.mxu0 0.0
    %689 = vmatprep.subr.mxu0 0.0
    %690 = vmatpush1.msra.mxu0 0.0
    %691 = vmatprep.subr.mxu0 0.0
    %692 = vmatpush1.msra.mxu0 0.0
    %693 = vmatprep.subr.mxu0 0.0
    %694 = vmatpush1.msra.mxu0 0.0
    %695 = vmatprep.subr.mxu0 0.0
    %696 = vmatpush1.msra.mxu0 0.0
    %697 = vmatprep.subr.mxu0 0.0
    %698 = vmatpush1.msra.mxu0 0.0
    %699 = vmatprep.subr.mxu0 0.0
    %700 = vmatpush1.msra.mxu0 0.0
    %701 = vmatprep.subr.mxu0 0.0
    %702 = vmatpush1.msra.mxu0 0.0
    %703 = vmatprep.subr.mxu0 0.0
    %704 = vmatpush1.msra.mxu0 0.0
    %705 = vmatprep.subr.mxu0 0.0
    %706 = vmatpush1.msra.mxu0 0.0
    %707 = vmatprep.subr.mxu0 0.0
    %708 = vmatpush1.msra.mxu0 0.0
    %709 = vmatprep.subr.mxu0 0.0
    %710 = vmatpush1.msra.mxu0 0.0
    %711 = vmatprep.subr.mxu0 0.0
    %712 = vmatpush1.msra.mxu0 0.0
    %713 = vmatprep.subr.mxu0 0.0
    %714 = vmatpush1.msra.mxu0 0.0
    %715 = vmatprep.subr.mxu0 0.0
    %716 = vmatpush1.msra.mxu0 0.0
    %717 = vmatprep.subr.mxu0 0.0
    %718 = vmatpush1.msra.mxu0 0.0
    %719 = vmatprep.subr.mxu0 0.0
    %720 = vmatpush1.msra.mxu0 0.0
    %721 = vmatprep.subr.mxu0 0.0
    %722 = vmatpush1.msra.mxu0 0.0
    %723 = vmatprep.subr.mxu0 0.0
    %724 = vmatpush1.msra.mxu0 0.0
    %725 = vmatprep.subr.mxu0 0.0
    %726 = vmatpush1.msra.mxu0 0.0
    %727 = vmatprep.subr.mxu0 0.0
    %728 = vmatpush1.msra.mxu0 0.0
    %729 = vmatprep.subr.mxu0 0.0
    %730 = vmatpush1.msra.mxu0 0.0
    %731 = vmatprep.subr.mxu0 0.0
    %732 = vmatpush1.msra.mxu0 0.0
    %733 = vmatprep.subr.mxu0 0.0
    %734 = vmatpush1.msra.mxu0 0.0
    %735 = vmatprep.subr.mxu0 0.0
    %736 = vmatpush1.msra.mxu0 0.0
    %737 = vmatprep.subr.mxu0 0.0
    %738 = vmatpush1.msra.mxu0 0.0
    %739 = vmatprep.mubr.f32.mxu0 0.0
    %740 = vmatmul.mubr.f32.gmra.mrb[0].mxu0 %v602
    %v741 = vpop.f32.mrb[0].mxu0
    %v742 = vadd.f32 0.0, %v741
    %v743 = vpop.f32.mrb[0].mxu0
    %v744 = vadd.f32 0.0, %v743
    %745 = vdwg.mxu0
    %746 = vmatprep.subr.mxu0 %v309
    %747 = vmatpush1.msra.mxu0 %v308
    %748 = vmatprep.subr.mxu0 %v313
    %749 = vmatpush1.msra.mxu0 %v312
    %750 = vmatprep.subr.mxu0 %v317
    %751 = vmatpush1.msra.mxu0 %v316
    %752 = vmatprep.subr.mxu0 %v321
    %753 = vmatpush1.msra.mxu0 %v320
    %754 = vmatprep.subr.mxu0 %v325
    %755 = vmatpush1.msra.mxu0 %v324
    %756 = vmatprep.subr.mxu0 %v329
    %757 = vmatpush1.msra.mxu0 %v328
    %758 = vmatprep.subr.mxu0 %v333
    %759 = vmatpush1.msra.mxu0 %v332
    %760 = vmatprep.subr.mxu0 %v337
    %761 = vmatpush1.msra.mxu0 %v336
    %762 = vmatprep.subr.mxu0 %v341
    %763 = vmatpush1.msra.mxu0 %v340
    %764 = vmatprep.subr.mxu0 %v345
    %765 = vmatpush1.msra.mxu0 %v344
    %766 = vmatprep.subr.mxu0 %v349
    %767 = vmatpush1.msra.mxu0 %v348
    %768 = vmatprep.subr.mxu0 %v353
    %769 = vmatpush1.msra.mxu0 %v352
    %770 = vmatprep.subr.mxu0 %v357
    %771 = vmatpush1.msra.mxu0 %v356
    %772 = vmatprep.subr.mxu0 %v361
    %773 = vmatpush1.msra.mxu0 %v360
    %774 = vmatprep.subr.mxu0 %v365
    %775 = vmatpush1.msra.mxu0 %v364
    %776 = vmatprep.subr.mxu0 %v369
    %777 = vmatpush1.msra.mxu0 %v368
    %778 = vmatprep.subr.mxu0 0.0
    %779 = vmatpush1.msra.mxu0 0.0
    %780 = vmatprep.subr.mxu0 0.0
    %781 = vmatpush1.msra.mxu0 0.0
    %782 = vmatprep.subr.mxu0 0.0
    %783 = vmatpush1.msra.mxu0 0.0
    %784 = vmatprep.subr.mxu0 0.0
    %785 = vmatpush1.msra.mxu0 0.0
    %786 = vmatprep.subr.mxu0 0.0
    %787 = vmatpush1.msra.mxu0 0.0
    %788 = vmatprep.subr.mxu0 0.0
    %789 = vmatpush1.msra.mxu0 0.0
    %790 = vmatprep.subr.mxu0 0.0
    %791 = vmatpush1.msra.mxu0 0.0
    %792 = vmatprep.subr.mxu0 0.0
    %793 = vmatpush1.msra.mxu0 0.0
    %794 = vmatprep.subr.mxu0 0.0
    %795 = vmatpush1.msra.mxu0 0.0
    %796 = vmatprep.subr.mxu0 0.0
    %797 = vmatpush1.msra.mxu0 0.0
    %798 = vmatprep.subr.mxu0 0.0
    %799 = vmatpush1.msra.mxu0 0.0
    %800 = vmatprep.subr.mxu0 0.0
    %801 = vmatpush1.msra.mxu0 0.0
    %802 = vmatprep.subr.mxu0 0.0
    %803 = vmatpush1.msra.mxu0 0.0
    %804 = vmatprep.subr.mxu0 0.0
    %805 = vmatpush1.msra.mxu0 0.0
    %806 = vmatprep.subr.mxu0 0.0
    %807 = vmatpush1.msra.mxu0 0.0
    %808 = vmatprep.subr.mxu0 0.0
    %809 = vmatpush1.msra.mxu0 0.0
    %810 = vmatprep.mubr.f32.mxu0 0.0
    %811 = vmatmul.mubr.f32.gmra.mrb[0].mxu0 %v595
    %v812 = vpop.f32.mrb[0].mxu0
    %v813 = vadd.f32 %v541, %v812
    %v814 = vpop.f32.mrb[0].mxu0
    %v815 = vadd.f32 %v545, %v814
    %816 = vdwg.mxu0
    %817 = vmatprep.subr.mxu0 %v311
    %818 = vmatpush1.msra.mxu0 %v310
    %819 = vmatprep.subr.mxu0 %v315
    %820 = vmatpush1.msra.mxu0 %v314
    %821 = vmatprep.subr.mxu0 %v319
    %822 = vmatpush1.msra.mxu0 %v318
    %823 = vmatprep.subr.mxu0 %v323
    %824 = vmatpush1.msra.mxu0 %v322
    %825 = vmatprep.subr.mxu0 %v327
    %826 = vmatpush1.msra.mxu0 %v326
    %827 = vmatprep.subr.mxu0 %v331
    %828 = vmatpush1.msra.mxu0 %v330
    %829 = vmatprep.subr.mxu0 %v335
    %830 = vmatpush1.msra.mxu0 %v334
    %831 = vmatprep.subr.mxu0 %v339
    %832 = vmatpush1.msra.mxu0 %v338
    %833 = vmatprep.subr.mxu0 %v343
    %834 = vmatpush1.msra.mxu0 %v342
    %835 = vmatprep.subr.mxu0 %v347
    %836 = vmatpush1.msra.mxu0 %v346
    %837 = vmatprep.subr.mxu0 %v351
    %838 = vmatpush1.msra.mxu0 %v350
    %839 = vmatprep.subr.mxu0 %v355
    %840 = vmatpush1.msra.mxu0 %v354
    %841 = vmatprep.subr.mxu0 %v359
    %842 = vmatpush1.msra.mxu0 %v358
    %843 = vmatprep.subr.mxu0 %v363
    %844 = vmatpush1.msra.mxu0 %v362
    %845 = vmatprep.subr.mxu0 %v367
    %846 = vmatpush1.msra.mxu0 %v366
    %847 = vmatprep.subr.mxu0 %v371
    %848 = vmatpush1.msra.mxu0 %v370
    %849 = vmatprep.subr.mxu0 0.0
    %850 = vmatpush1.msra.mxu0 0.0
    %851 = vmatprep.subr.mxu0 0.0
    %852 = vmatpush1.msra.mxu0 0.0
    %853 = vmatprep.subr.mxu0 0.0
    %854 = vmatpush1.msra.mxu0 0.0
    %855 = vmatprep.subr.mxu0 0.0
    %856 = vmatpush1.msra.mxu0 0.0
    %857 = vmatprep.subr.mxu0 0.0
    %858 = vmatpush1.msra.mxu0 0.0
    %859 = vmatprep.subr.mxu0 0.0
    %860 = vmatpush1.msra.mxu0 0.0
    %861 = vmatprep.subr.mxu0 0.0
    %862 = vmatpush1.msra.mxu0 0.0
    %863 = vmatprep.subr.mxu0 0.0
    %864 = vmatpush1.msra.mxu0 0.0
    %865 = vmatprep.subr.mxu0 0.0
    %866 = vmatpush1.msra.mxu0 0.0
    %867 = vmatprep.subr.mxu0 0.0
    %868 = vmatpush1.msra.mxu0 0.0
    %869 = vmatprep.subr.mxu0 0.0
    %870 = vmatpush1.msra.mxu0 0.0
    %871 = vmatprep.subr.mxu0 0.0
    %872 = vmatpush1.msra.mxu0 0.0
    %873 = vmatprep.subr.mxu0 0.0
    %874 = vmatpush1.msra.mxu0 0.0
    %875 = vmatprep.subr.mxu0 0.0
    %876 = vmatpush1.msra.mxu0 0.0
    %877 = vmatprep.subr.mxu0 0.0
    %878 = vmatpush1.msra.mxu0 0.0
    %879 = vmatprep.subr.mxu0 0.0
    %880 = vmatpush1.msra.mxu0 0.0
    %881 = vmatprep.mubr.f32.mxu0 0.0
    %882 = vmatmul.mubr.f32.gmra.mrb[0].mxu0 %v595
    %v883 = vpop.f32.mrb[0].mxu0
    %v884 = vadd.f32 %v549, %v883
    %v885 = vpop.f32.mrb[0].mxu0
    %v886 = vadd.f32 %v553, %v885
    %887 = vdwg.mxu0
    %v888 = vadd.f32 %v813, %v671
    %v889 = vadd.f32 %v815, %v673
    %v890 = vadd.f32 %v884, %v742
    %v891 = vadd.f32 %v886, %v744
    %v892 = vxor.u32 %v888, 2147483648
    %v893 = vxor.u32 %v889, 2147483648
    %v894 = vxor.u32 %v890, 2147483648
    %v895 = vxor.u32 %v891, 2147483648
    %v896 = vmul.f32 %v892, 1.442695
    %v897 = vpow.pop %v896
    %v898 = vmul.f32 %v893, 1.442695
    %v899 = vpow.pop %v898
    %v900 = vmul.f32 %v894, 1.442695
    %v901 = vpow.pop %v900
    %v902 = vmul.f32 %v895, 1.442695
    %v903 = vpow.pop %v902
    %v904 = vadd.f32 %v897, 1.0
    %v905 = vadd.f32 %v899, 1.0
    %v906 = vadd.f32 %v901, 1.0
    %v907 = vadd.f32 %v903, 1.0
    %v908 = vrcp.pop %v904
    %v909 = vmul.f32 1.0, %v908
    %v910 = vrcp.pop %v905
    %v911 = vmul.f32 1.0, %v910
    %v912 = vrcp.pop %v906
    %v913 = vmul.f32 1.0, %v912
    %v914 = vrcp.pop %v907
    %v915 = vmul.f32 1.0, %v914
    %v916 = vmul.f32 %v913, 2.0
    %v917 = vsub.f32 %v916, 1.0
    %v918 = vmul.f32 %v911, %v594
    %v919 = vmul.f32 %v909, %v917
    %v920 = vadd.f32 %v918, %v919
    %v921 = vtanh.pop %v920
    %v922 = vmul.f32 %v915, %v921
    %vm923 = vcmp.lt.s32.totalorder %v307, 64
    %v924 = vsel %vm923, %v920, 0.0
    %v925 = vsel %vm923, %v922, 0.0
    %926 = vset.pattern.permute.xlu0 2
    %927 = vperm.xlu0 %926, %v84
    %v928 = vpop.permute.xlu0 %927
    %vm929 = vcmp.eq.s32.totalorder %v928, %v307
    %v930 = vsel %vm929, 1.0, 0.0
    %v932 = vsel %vm378, %v930, 0
    %934 = vmatprep.subr.mxu0 %v209
    %935 = vmatpush1.msra.mxu0 %v207
    %936 = vmatprep.subr.mxu0 %v215
    %937 = vmatpush1.msra.mxu0 %v213
    %938 = vmatprep.subr.mxu0 %v387
    %939 = vmatpush1.msra.mxu0 %v384
    %940 = vmatprep.subr.mxu0 0.0
    %941 = vmatpush1.msra.mxu0 0.0
    %942 = vmatprep.subr.mxu0 0.0
    %943 = vmatpush1.msra.mxu0 0.0
    %944 = vmatprep.subr.mxu0 0.0
    %945 = vmatpush1.msra.mxu0 0.0
    %946 = vmatprep.subr.mxu0 0.0
    %947 = vmatpush1.msra.mxu0 0.0
    %948 = vmatprep.subr.mxu0 0.0
    %949 = vmatpush1.msra.mxu0 0.0
    %950 = vmatprep.subr.mxu0 0.0
    %951 = vmatpush1.msra.mxu0 0.0
    %952 = vmatprep.subr.mxu0 0.0
    %953 = vmatpush1.msra.mxu0 0.0
    %954 = vmatprep.subr.mxu0 0.0
    %955 = vmatpush1.msra.mxu0 0.0
    %956 = vmatprep.subr.mxu0 0.0
    %957 = vmatpush1.msra.mxu0 0.0
    %958 = vmatprep.subr.mxu0 0.0
    %959 = vmatpush1.msra.mxu0 0.0
    %960 = vmatprep.subr.mxu0 0.0
    %961 = vmatpush1.msra.mxu0 0.0
    %962 = vmatprep.subr.mxu0 0.0
    %963 = vmatpush1.msra.mxu0 0.0
    %964 = vmatprep.subr.mxu0 0.0
    %965 = vmatpush1.msra.mxu0 0.0
    %966 = vmatprep.subr.mxu0 0.0
    %967 = vmatpush1.msra.mxu0 0.0
    %968 = vmatprep.subr.mxu0 0.0
    %969 = vmatpush1.msra.mxu0 0.0
    %970 = vmatprep.subr.mxu0 0.0
    %971 = vmatpush1.msra.mxu0 0.0
    %972 = vmatprep.subr.mxu0 0.0
    %973 = vmatpush1.msra.mxu0 0.0
    %974 = vmatprep.subr.mxu0 0.0
    %975 = vmatpush1.msra.mxu0 0.0
    %976 = vmatprep.subr.mxu0 0.0
    %977 = vmatpush1.msra.mxu0 0.0
    %978 = vmatprep.subr.mxu0 0.0
    %979 = vmatpush1.msra.mxu0 0.0
    %980 = vmatprep.subr.mxu0 0.0
    %981 = vmatpush1.msra.mxu0 0.0
    %982 = vmatprep.subr.mxu0 0.0
    %983 = vmatpush1.msra.mxu0 0.0
    %984 = vmatprep.subr.mxu0 0.0
    %985 = vmatpush1.msra.mxu0 0.0
    %986 = vmatprep.subr.mxu0 0.0
    %987 = vmatpush1.msra.mxu0 0.0
    %988 = vmatprep.subr.mxu0 0.0
    %989 = vmatpush1.msra.mxu0 0.0
    %990 = vmatprep.subr.mxu0 0.0
    %991 = vmatpush1.msra.mxu0 0.0
    %992 = vmatprep.subr.mxu0 0.0
    %993 = vmatpush1.msra.mxu0 0.0
    %994 = vmatprep.subr.mxu0 0.0
    %995 = vmatpush1.msra.mxu0 0.0
    %996 = vmatprep.subr.mxu0 0.0
    %997 = vmatpush1.msra.mxu0 0.0
    %998 = vmatprep.mubr.f32.mxu0 0.0
    %999 = vmatmul.mubr.f32.gmra.mrb[0].mxu0 %v932
    %v1000 = vpop.f32.mrb[0].mxu0
    %v1001 = vadd.f32 0.0, %v1000
    %v1002 = vpop.f32.mrb[0].mxu0
    %v1003 = vadd.f32 0.0, %v1002
    %1004 = vdwg.mxu0
    %1005 = vmatprep.subr.mxu0 %v292
    %1006 = vmatpush1.msra.mxu0 %v290
    %1007 = vmatprep.subr.mxu0 %v298
    %1008 = vmatpush1.msra.mxu0 %v296
    %1009 = vmatprep.subr.mxu0 %v393
    %1010 = vmatpush1.msra.mxu0 %v390
    %1011 = vmatprep.subr.mxu0 0.0
    %1012 = vmatpush1.msra.mxu0 0.0
    %1013 = vmatprep.subr.mxu0 0.0
    %1014 = vmatpush1.msra.mxu0 0.0
    %1015 = vmatprep.subr.mxu0 0.0
    %1016 = vmatpush1.msra.mxu0 0.0
    %1017 = vmatprep.subr.mxu0 0.0
    %1018 = vmatpush1.msra.mxu0 0.0
    %1019 = vmatprep.subr.mxu0 0.0
    %1020 = vmatpush1.msra.mxu0 0.0
    %1021 = vmatprep.subr.mxu0 0.0
    %1022 = vmatpush1.msra.mxu0 0.0
    %1023 = vmatprep.subr.mxu0 0.0
    %1024 = vmatpush1.msra.mxu0 0.0
    %1025 = vmatprep.subr.mxu0 0.0
    %1026 = vmatpush1.msra.mxu0 0.0
    %1027 = vmatprep.subr.mxu0 0.0
    %1028 = vmatpush1.msra.mxu0 0.0
    %1029 = vmatprep.subr.mxu0 0.0
    %1030 = vmatpush1.msra.mxu0 0.0
    %1031 = vmatprep.subr.mxu0 0.0
    %1032 = vmatpush1.msra.mxu0 0.0
    %1033 = vmatprep.subr.mxu0 0.0
    %1034 = vmatpush1.msra.mxu0 0.0
    %1035 = vmatprep.subr.mxu0 0.0
    %1036 = vmatpush1.msra.mxu0 0.0
    %1037 = vmatprep.subr.mxu0 0.0
    %1038 = vmatpush1.msra.mxu0 0.0
    %1039 = vmatprep.subr.mxu0 0.0
    %1040 = vmatpush1.msra.mxu0 0.0
    %1041 = vmatprep.subr.mxu0 0.0
    %1042 = vmatpush1.msra.mxu0 0.0
    %1043 = vmatprep.subr.mxu0 0.0
    %1044 = vmatpush1.msra.mxu0 0.0
    %1045 = vmatprep.subr.mxu0 0.0
    %1046 = vmatpush1.msra.mxu0 0.0
    %1047 = vmatprep.subr.mxu0 0.0
    %1048 = vmatpush1.msra.mxu0 0.0
    %1049 = vmatprep.subr.mxu0 0.0
    %1050 = vmatpush1.msra.mxu0 0.0
    %1051 = vmatprep.subr.mxu0 0.0
    %1052 = vmatpush1.msra.mxu0 0.0
    %1053 = vmatprep.subr.mxu0 0.0
    %1054 = vmatpush1.msra.mxu0 0.0
    %1055 = vmatprep.subr.mxu0 0.0
    %1056 = vmatpush1.msra.mxu0 0.0
    %1057 = vmatprep.subr.mxu0 0.0
    %1058 = vmatpush1.msra.mxu0 0.0
    %1059 = vmatprep.subr.mxu0 0.0
    %1060 = vmatpush1.msra.mxu0 0.0
    %1061 = vmatprep.subr.mxu0 0.0
    %1062 = vmatpush1.msra.mxu0 0.0
    %1063 = vmatprep.subr.mxu0 0.0
    %1064 = vmatpush1.msra.mxu0 0.0
    %1065 = vmatprep.subr.mxu0 0.0
    %1066 = vmatpush1.msra.mxu0 0.0
    %1067 = vmatprep.subr.mxu0 0.0
    %1068 = vmatpush1.msra.mxu0 0.0
    %1069 = vmatprep.mubr.f32.mxu0 0.0
    %1070 = vmatmul.mubr.f32.gmra.mrb[0].mxu0 %v932
    %v1071 = vpop.f32.mrb[0].mxu0
    %v1072 = vadd.f32 0.0, %v1071
    %v1073 = vpop.f32.mrb[0].mxu0
    %v1074 = vadd.f32 0.0, %v1073
    %1075 = vdwg.mxu0
    %1076 = vmatprep.subr.mxu0 %v309
    %1077 = vmatpush1.msra.mxu0 %v308
    %1078 = vmatprep.subr.mxu0 %v313
    %1079 = vmatpush1.msra.mxu0 %v312
    %1080 = vmatprep.subr.mxu0 %v317
    %1081 = vmatpush1.msra.mxu0 %v316
    %1082 = vmatprep.subr.mxu0 %v321
    %1083 = vmatpush1.msra.mxu0 %v320
    %1084 = vmatprep.subr.mxu0 %v325
    %1085 = vmatpush1.msra.mxu0 %v324
    %1086 = vmatprep.subr.mxu0 %v329
    %1087 = vmatpush1.msra.mxu0 %v328
    %1088 = vmatprep.subr.mxu0 %v333
    %1089 = vmatpush1.msra.mxu0 %v332
    %1090 = vmatprep.subr.mxu0 %v337
    %1091 = vmatpush1.msra.mxu0 %v336
    %1092 = vmatprep.subr.mxu0 %v341
    %1093 = vmatpush1.msra.mxu0 %v340
    %1094 = vmatprep.subr.mxu0 %v345
    %1095 = vmatpush1.msra.mxu0 %v344
    %1096 = vmatprep.subr.mxu0 %v349
    %1097 = vmatpush1.msra.mxu0 %v348
    %1098 = vmatprep.subr.mxu0 %v353
    %1099 = vmatpush1.msra.mxu0 %v352
    %1100 = vmatprep.subr.mxu0 %v357
    %1101 = vmatpush1.msra.mxu0 %v356
    %1102 = vmatprep.subr.mxu0 %v361
    %1103 = vmatpush1.msra.mxu0 %v360
    %1104 = vmatprep.subr.mxu0 %v365
    %1105 = vmatpush1.msra.mxu0 %v364
    %1106 = vmatprep.subr.mxu0 %v369
    %1107 = vmatpush1.msra.mxu0 %v368
    %1108 = vmatprep.subr.mxu0 0.0
    %1109 = vmatpush1.msra.mxu0 0.0
    %1110 = vmatprep.subr.mxu0 0.0
    %1111 = vmatpush1.msra.mxu0 0.0
    %1112 = vmatprep.subr.mxu0 0.0
    %1113 = vmatpush1.msra.mxu0 0.0
    %1114 = vmatprep.subr.mxu0 0.0
    %1115 = vmatpush1.msra.mxu0 0.0
    %1116 = vmatprep.subr.mxu0 0.0
    %1117 = vmatpush1.msra.mxu0 0.0
    %1118 = vmatprep.subr.mxu0 0.0
    %1119 = vmatpush1.msra.mxu0 0.0
    %1120 = vmatprep.subr.mxu0 0.0
    %1121 = vmatpush1.msra.mxu0 0.0
    %1122 = vmatprep.subr.mxu0 0.0
    %1123 = vmatpush1.msra.mxu0 0.0
    %1124 = vmatprep.subr.mxu0 0.0
    %1125 = vmatpush1.msra.mxu0 0.0
    %1126 = vmatprep.subr.mxu0 0.0
    %1127 = vmatpush1.msra.mxu0 0.0
    %1128 = vmatprep.subr.mxu0 0.0
    %1129 = vmatpush1.msra.mxu0 0.0
    %1130 = vmatprep.subr.mxu0 0.0
    %1131 = vmatpush1.msra.mxu0 0.0
    %1132 = vmatprep.subr.mxu0 0.0
    %1133 = vmatpush1.msra.mxu0 0.0
    %1134 = vmatprep.subr.mxu0 0.0
    %1135 = vmatpush1.msra.mxu0 0.0
    %1136 = vmatprep.subr.mxu0 0.0
    %1137 = vmatpush1.msra.mxu0 0.0
    %1138 = vmatprep.subr.mxu0 0.0
    %1139 = vmatpush1.msra.mxu0 0.0
    %1140 = vmatprep.mubr.f32.mxu0 0.0
    %1141 = vmatmul.mubr.f32.gmra.mrb[0].mxu0 %v925
    %v1142 = vpop.f32.mrb[0].mxu0
    %v1143 = vadd.f32 %v541, %v1142
    %v1144 = vpop.f32.mrb[0].mxu0
    %v1145 = vadd.f32 %v545, %v1144
    %1146 = vdwg.mxu0
    %1147 = vmatprep.subr.mxu0 %v311
    %1148 = vmatpush1.msra.mxu0 %v310
    %1149 = vmatprep.subr.mxu0 %v315
    %1150 = vmatpush1.msra.mxu0 %v314
    %1151 = vmatprep.subr.mxu0 %v319
    %1152 = vmatpush1.msra.mxu0 %v318
    %1153 = vmatprep.subr.mxu0 %v323
    %1154 = vmatpush1.msra.mxu0 %v322
    %1155 = vmatprep.subr.mxu0 %v327
    %1156 = vmatpush1.msra.mxu0 %v326
    %1157 = vmatprep.subr.mxu0 %v331
    %1158 = vmatpush1.msra.mxu0 %v330
    %1159 = vmatprep.subr.mxu0 %v335
    %1160 = vmatpush1.msra.mxu0 %v334
    %1161 = vmatprep.subr.mxu0 %v339
    %1162 = vmatpush1.msra.mxu0 %v338
    %1163 = vmatprep.subr.mxu0 %v343
    %1164 = vmatpush1.msra.mxu0 %v342
    %1165 = vmatprep.subr.mxu0 %v347
    %1166 = vmatpush1.msra.mxu0 %v346
    %1167 = vmatprep.subr.mxu0 %v351
    %1168 = vmatpush1.msra.mxu0 %v350
    %1169 = vmatprep.subr.mxu0 %v355
    %1170 = vmatpush1.msra.mxu0 %v354
    %1171 = vmatprep.subr.mxu0 %v359
    %1172 = vmatpush1.msra.mxu0 %v358
    %1173 = vmatprep.subr.mxu0 %v363
    %1174 = vmatpush1.msra.mxu0 %v362
    %1175 = vmatprep.subr.mxu0 %v367
    %1176 = vmatpush1.msra.mxu0 %v366
    %1177 = vmatprep.subr.mxu0 %v371
    %1178 = vmatpush1.msra.mxu0 %v370
    %1179 = vmatprep.subr.mxu0 0.0
    %1180 = vmatpush1.msra.mxu0 0.0
    %1181 = vmatprep.subr.mxu0 0.0
    %1182 = vmatpush1.msra.mxu0 0.0
    %1183 = vmatprep.subr.mxu0 0.0
    %1184 = vmatpush1.msra.mxu0 0.0
    %1185 = vmatprep.subr.mxu0 0.0
    %1186 = vmatpush1.msra.mxu0 0.0
    %1187 = vmatprep.subr.mxu0 0.0
    %1188 = vmatpush1.msra.mxu0 0.0
    %1189 = vmatprep.subr.mxu0 0.0
    %1190 = vmatpush1.msra.mxu0 0.0
    %1191 = vmatprep.subr.mxu0 0.0
    %1192 = vmatpush1.msra.mxu0 0.0
    %1193 = vmatprep.subr.mxu0 0.0
    %1194 = vmatpush1.msra.mxu0 0.0
    %1195 = vmatprep.subr.mxu0 0.0
    %1196 = vmatpush1.msra.mxu0 0.0
    %1197 = vmatprep.subr.mxu0 0.0
    %1198 = vmatpush1.msra.mxu0 0.0
    %1199 = vmatprep.subr.mxu0 0.0
    %1200 = vmatpush1.msra.mxu0 0.0
    %1201 = vmatprep.subr.mxu0 0.0
    %1202 = vmatpush1.msra.mxu0 0.0
    %1203 = vmatprep.subr.mxu0 0.0
    %1204 = vmatpush1.msra.mxu0 0.0
    %1205 = vmatprep.subr.mxu0 0.0
    %1206 = vmatpush1.msra.mxu0 0.0
    %1207 = vmatprep.subr.mxu0 0.0
    %1208 = vmatpush1.msra.mxu0 0.0
    %1209 = vmatprep.subr.mxu0 0.0
    %1210 = vmatpush1.msra.mxu0 0.0
    %1211 = vmatprep.mubr.f32.mxu0 0.0
    %1212 = vmatmul.mubr.f32.gmra.mrb[0].mxu0 %v925
    %v1213 = vpop.f32.mrb[0].mxu0
    %v1214 = vadd.f32 %v549, %v1213
    %v1215 = vpop.f32.mrb[0].mxu0
    %v1216 = vadd.f32 %v553, %v1215
    %1217 = vdwg.mxu0
    %v1218 = vadd.f32 %v1143, %v1001
    %v1219 = vadd.f32 %v1145, %v1003
    %v1220 = vadd.f32 %v1214, %v1072
    %v1221 = vadd.f32 %v1216, %v1074
    %v1222 = vxor.u32 %v1218, 2147483648
    %v1223 = vxor.u32 %v1219, 2147483648
    %v1224 = vxor.u32 %v1220, 2147483648
    %v1225 = vxor.u32 %v1221, 2147483648
    %v1226 = vmul.f32 %v1222, 1.442695
    %v1227 = vpow.pop %v1226
    %v1228 = vmul.f32 %v1223, 1.442695
    %v1229 = vpow.pop %v1228
    %v1230 = vmul.f32 %v1224, 1.442695
    %v1231 = vpow.pop %v1230
    %v1232 = vmul.f32 %v1225, 1.442695
    %v1233 = vpow.pop %v1232
    %v1234 = vadd.f32 %v1227, 1.0
    %v1235 = vadd.f32 %v1229, 1.0
    %v1236 = vadd.f32 %v1231, 1.0
    %v1237 = vadd.f32 %v1233, 1.0
    %v1238 = vrcp.pop %v1234
    %v1239 = vmul.f32 1.0, %v1238
    %v1240 = vrcp.pop %v1235
    %v1241 = vmul.f32 1.0, %v1240
    %v1242 = vrcp.pop %v1236
    %v1243 = vmul.f32 1.0, %v1242
    %v1244 = vrcp.pop %v1237
    %v1245 = vmul.f32 1.0, %v1244
    %v1246 = vmul.f32 %v1243, 2.0
    %v1247 = vsub.f32 %v1246, 1.0
    %v1248 = vmul.f32 %v1241, %v924
    %v1249 = vmul.f32 %v1239, %v1247
    %v1250 = vadd.f32 %v1248, %v1249
    %v1251 = vtanh.pop %v1250
    %v1252 = vmul.f32 %v1245, %v1251
    %vm1253 = vcmp.lt.s32.totalorder %v307, 96
    %v1254 = vsel %vm1253, %v1250, 0.0
    %v1255 = vsel %vm1253, %v1252, 0.0
    %1256 = vset.pattern.permute.xlu0 3
    %1257 = vperm.xlu0 %1256, %v84
    %v1258 = vpop.permute.xlu0 %1257
    %vm1259 = vcmp.eq.s32.totalorder %v1258, %v307
    %v1260 = vsel %vm1259, 1.0, 0.0
    %v1262 = vsel %vm378, %v1260, 0
    %1264 = vmatprep.subr.mxu0 %v209
    %1265 = vmatpush1.msra.mxu0 %v207
    %1266 = vmatprep.subr.mxu0 %v215
    %1267 = vmatpush1.msra.mxu0 %v213
    %1268 = vmatprep.subr.mxu0 %v387
    %1269 = vmatpush1.msra.mxu0 %v384
    %1270 = vmatprep.subr.mxu0 0.0
    %1271 = vmatpush1.msra.mxu0 0.0
    %1272 = vmatprep.subr.mxu0 0.0
    %1273 = vmatpush1.msra.mxu0 0.0
    %1274 = vmatprep.subr.mxu0 0.0
    %1275 = vmatpush1.msra.mxu0 0.0
    %1276 = vmatprep.subr.mxu0 0.0
    %1277 = vmatpush1.msra.mxu0 0.0
    %1278 = vmatprep.subr.mxu0 0.0
    %1279 = vmatpush1.msra.mxu0 0.0
    %1280 = vmatprep.subr.mxu0 0.0
    %1281 = vmatpush1.msra.mxu0 0.0
    %1282 = vmatprep.subr.mxu0 0.0
    %1283 = vmatpush1.msra.mxu0 0.0
    %1284 = vmatprep.subr.mxu0 0.0
    %1285 = vmatpush1.msra.mxu0 0.0
    %1286 = vmatprep.subr.mxu0 0.0
    %1287 = vmatpush1.msra.mxu0 0.0
    %1288 = vmatprep.subr.mxu0 0.0
    %1289 = vmatpush1.msra.mxu0 0.0
    %1290 = vmatprep.subr.mxu0 0.0
    %1291 = vmatpush1.msra.mxu0 0.0
    %1292 = vmatprep.subr.mxu0 0.0
    %1293 = vmatpush1.msra.mxu0 0.0
    %1294 = vmatprep.subr.mxu0 0.0
    %1295 = vmatpush1.msra.mxu0 0.0
    %1296 = vmatprep.subr.mxu0 0.0
    %1297 = vmatpush1.msra.mxu0 0.0
    %1298 = vmatprep.subr.mxu0 0.0
    %1299 = vmatpush1.msra.mxu0 0.0
    %1300 = vmatprep.subr.mxu0 0.0
    %1301 = vmatpush1.msra.mxu0 0.0
    %1302 = vmatprep.subr.mxu0 0.0
    %1303 = vmatpush1.msra.mxu0 0.0
    %1304 = vmatprep.subr.mxu0 0.0
    %1305 = vmatpush1.msra.mxu0 0.0
    %1306 = vmatprep.subr.mxu0 0.0
    %1307 = vmatpush1.msra.mxu0 0.0
    %1308 = vmatprep.subr.mxu0 0.0
    %1309 = vmatpush1.msra.mxu0 0.0
    %1310 = vmatprep.subr.mxu0 0.0
    %1311 = vmatpush1.msra.mxu0 0.0
    %1312 = vmatprep.subr.mxu0 0.0
    %1313 = vmatpush1.msra.mxu0 0.0
    %1314 = vmatprep.subr.mxu0 0.0
    %1315 = vmatpush1.msra.mxu0 0.0
    %1316 = vmatprep.subr.mxu0 0.0
    %1317 = vmatpush1.msra.mxu0 0.0
    %1318 = vmatprep.subr.mxu0 0.0
    %1319 = vmatpush1.msra.mxu0 0.0
    %1320 = vmatprep.subr.mxu0 0.0
    %1321 = vmatpush1.msra.mxu0 0.0
    %1322 = vmatprep.subr.mxu0 0.0
    %1323 = vmatpush1.msra.mxu0 0.0
    %1324 = vmatprep.subr.mxu0 0.0
    %1325 = vmatpush1.msra.mxu0 0.0
    %1326 = vmatprep.subr.mxu0 0.0
    %1327 = vmatpush1.msra.mxu0 0.0
    %1328 = vmatprep.mubr.f32.mxu0 0.0
    %1329 = vmatmul.mubr.f32.gmra.mrb[0].mxu0 %v1262
    %v1330 = vpop.f32.mrb[0].mxu0
    %v1331 = vadd.f32 0.0, %v1330
    %v1332 = vpop.f32.mrb[0].mxu0
    %v1333 = vadd.f32 0.0, %v1332
    %1334 = vdwg.mxu0
    %1335 = vmatprep.subr.mxu0 %v292
    %1336 = vmatpush1.msra.mxu0 %v290
    %1337 = vmatprep.subr.mxu0 %v298
    %1338 = vmatpush1.msra.mxu0 %v296
    %1339 = vmatprep.subr.mxu0 %v393
    %1340 = vmatpush1.msra.mxu0 %v390
    %1341 = vmatprep.subr.mxu0 0.0
    %1342 = vmatpush1.msra.mxu0 0.0
    %1343 = vmatprep.subr.mxu0 0.0
    %1344 = vmatpush1.msra.mxu0 0.0
    %1345 = vmatprep.subr.mxu0 0.0
    %1346 = vmatpush1.msra.mxu0 0.0
    %1347 = vmatprep.subr.mxu0 0.0
    %1348 = vmatpush1.msra.mxu0 0.0
    %1349 = vmatprep.subr.mxu0 0.0
    %1350 = vmatpush1.msra.mxu0 0.0
    %1351 = vmatprep.subr.mxu0 0.0
    %1352 = vmatpush1.msra.mxu0 0.0
    %1353 = vmatprep.subr.mxu0 0.0
    %1354 = vmatpush1.msra.mxu0 0.0
    %1355 = vmatprep.subr.mxu0 0.0
    %1356 = vmatpush1.msra.mxu0 0.0
    %1357 = vmatprep.subr.mxu0 0.0
    %1358 = vmatpush1.msra.mxu0 0.0
    %1359 = vmatprep.subr.mxu0 0.0
    %1360 = vmatpush1.msra.mxu0 0.0
    %1361 = vmatprep.subr.mxu0 0.0
    %1362 = vmatpush1.msra.mxu0 0.0
    %1363 = vmatprep.subr.mxu0 0.0
    %1364 = vmatpush1.msra.mxu0 0.0
    %1365 = vmatprep.subr.mxu0 0.0
    %1366 = vmatpush1.msra.mxu0 0.0
    %1367 = vmatprep.subr.mxu0 0.0
    %1368 = vmatpush1.msra.mxu0 0.0
    %1369 = vmatprep.subr.mxu0 0.0
    %1370 = vmatpush1.msra.mxu0 0.0
    %1371 = vmatprep.subr.mxu0 0.0
    %1372 = vmatpush1.msra.mxu0 0.0
    %1373 = vmatprep.subr.mxu0 0.0
    %1374 = vmatpush1.msra.mxu0 0.0
    %1375 = vmatprep.subr.mxu0 0.0
    %1376 = vmatpush1.msra.mxu0 0.0
    %1377 = vmatprep.subr.mxu0 0.0
    %1378 = vmatpush1.msra.mxu0 0.0
    %1379 = vmatprep.subr.mxu0 0.0
    %1380 = vmatpush1.msra.mxu0 0.0
    %1381 = vmatprep.subr.mxu0 0.0
    %1382 = vmatpush1.msra.mxu0 0.0
    %1383 = vmatprep.subr.mxu0 0.0
    %1384 = vmatpush1.msra.mxu0 0.0
    %1385 = vmatprep.subr.mxu0 0.0
    %1386 = vmatpush1.msra.mxu0 0.0
    %1387 = vmatprep.subr.mxu0 0.0
    %1388 = vmatpush1.msra.mxu0 0.0
    %1389 = vmatprep.subr.mxu0 0.0
    %1390 = vmatpush1.msra.mxu0 0.0
    %1391 = vmatprep.subr.mxu0 0.0
    %1392 = vmatpush1.msra.mxu0 0.0
    %1393 = vmatprep.subr.mxu0 0.0
    %1394 = vmatpush1.msra.mxu0 0.0
    %1395 = vmatprep.subr.mxu0 0.0
    %1396 = vmatpush1.msra.mxu0 0.0
    %1397 = vmatprep.subr.mxu0 0.0
    %1398 = vmatpush1.msra.mxu0 0.0
    %1399 = vmatprep.mubr.f32.mxu0 0.0
    %1400 = vmatmul.mubr.f32.gmra.mrb[0].mxu0 %v1262
    %v1401 = vpop.f32.mrb[0].mxu0
    %v1402 = vadd.f32 0.0, %v1401
    %v1403 = vpop.f32.mrb[0].mxu0
    %v1404 = vadd.f32 0.0, %v1403
    %1405 = vdwg.mxu0
    %1406 = vmatprep.subr.mxu0 %v309
    %1407 = vmatpush1.msra.mxu0 %v308
    %1408 = vmatprep.subr.mxu0 %v313
    %1409 = vmatpush1.msra.mxu0 %v312
    %1410 = vmatprep.subr.mxu0 %v317
    %1411 = vmatpush1.msra.mxu0 %v316
    %1412 = vmatprep.subr.mxu0 %v321
    %1413 = vmatpush1.msra.mxu0 %v320
    %1414 = vmatprep.subr.mxu0 %v325
    %1415 = vmatpush1.msra.mxu0 %v324
    %1416 = vmatprep.subr.mxu0 %v329
    %1417 = vmatpush1.msra.mxu0 %v328
    %1418 = vmatprep.subr.mxu0 %v333
    %1419 = vmatpush1.msra.mxu0 %v332
    %1420 = vmatprep.subr.mxu0 %v337
    %1421 = vmatpush1.msra.mxu0 %v336
    %1422 = vmatprep.subr.mxu0 %v341
    %1423 = vmatpush1.msra.mxu0 %v340
    %1424 = vmatprep.subr.mxu0 %v345
    %1425 = vmatpush1.msra.mxu0 %v344
    %1426 = vmatprep.subr.mxu0 %v349
    %1427 = vmatpush1.msra.mxu0 %v348
    %1428 = vmatprep.subr.mxu0 %v353
    %1429 = vmatpush1.msra.mxu0 %v352
    %1430 = vmatprep.subr.mxu0 %v357
    %1431 = vmatpush1.msra.mxu0 %v356
    %1432 = vmatprep.subr.mxu0 %v361
    %1433 = vmatpush1.msra.mxu0 %v360
    %1434 = vmatprep.subr.mxu0 %v365
    %1435 = vmatpush1.msra.mxu0 %v364
    %1436 = vmatprep.subr.mxu0 %v369
    %1437 = vmatpush1.msra.mxu0 %v368
    %1438 = vmatprep.subr.mxu0 0.0
    %1439 = vmatpush1.msra.mxu0 0.0
    %1440 = vmatprep.subr.mxu0 0.0
    %1441 = vmatpush1.msra.mxu0 0.0
    %1442 = vmatprep.subr.mxu0 0.0
    %1443 = vmatpush1.msra.mxu0 0.0
    %1444 = vmatprep.subr.mxu0 0.0
    %1445 = vmatpush1.msra.mxu0 0.0
    %1446 = vmatprep.subr.mxu0 0.0
    %1447 = vmatpush1.msra.mxu0 0.0
    %1448 = vmatprep.subr.mxu0 0.0
    %1449 = vmatpush1.msra.mxu0 0.0
    %1450 = vmatprep.subr.mxu0 0.0
    %1451 = vmatpush1.msra.mxu0 0.0
    %1452 = vmatprep.subr.mxu0 0.0
    %1453 = vmatpush1.msra.mxu0 0.0
    %1454 = vmatprep.subr.mxu0 0.0
    %1455 = vmatpush1.msra.mxu0 0.0
    %1456 = vmatprep.subr.mxu0 0.0
    %1457 = vmatpush1.msra.mxu0 0.0
    %1458 = vmatprep.subr.mxu0 0.0
    %1459 = vmatpush1.msra.mxu0 0.0
    %1460 = vmatprep.subr.mxu0 0.0
    %1461 = vmatpush1.msra.mxu0 0.0
    %1462 = vmatprep.subr.mxu0 0.0
    %1463 = vmatpush1.msra.mxu0 0.0
    %1464 = vmatprep.subr.mxu0 0.0
    %1465 = vmatpush1.msra.mxu0 0.0
    %1466 = vmatprep.subr.mxu0 0.0
    %1467 = vmatpush1.msra.mxu0 0.0
    %1468 = vmatprep.subr.mxu0 0.0
    %1469 = vmatpush1.msra.mxu0 0.0
    %1470 = vmatprep.mubr.f32.mxu0 0.0
    %1471 = vmatmul.mubr.f32.gmra.mrb[0].mxu0 %v1255
    %v1472 = vpop.f32.mrb[0].mxu0
    %v1473 = vadd.f32 %v541, %v1472
    %v1474 = vpop.f32.mrb[0].mxu0
    %v1475 = vadd.f32 %v545, %v1474
    %1476 = vdwg.mxu0
    %1477 = vmatprep.subr.mxu0 %v311
    %1478 = vmatpush1.msra.mxu0 %v310
    %1479 = vmatprep.subr.mxu0 %v315
    %1480 = vmatpush1.msra.mxu0 %v314
    %1481 = vmatprep.subr.mxu0 %v319
    %1482 = vmatpush1.msra.mxu0 %v318
    %1483 = vmatprep.subr.mxu0 %v323
    %1484 = vmatpush1.msra.mxu0 %v322
    %1485 = vmatprep.subr.mxu0 %v327
    %1486 = vmatpush1.msra.mxu0 %v326
    %1487 = vmatprep.subr.mxu0 %v331
    %1488 = vmatpush1.msra.mxu0 %v330
    %1489 = vmatprep.subr.mxu0 %v335
    %1490 = vmatpush1.msra.mxu0 %v334
    %1491 = vmatprep.subr.mxu0 %v339
    %1492 = vmatpush1.msra.mxu0 %v338
    %1493 = vmatprep.subr.mxu0 %v343
    %1494 = vmatpush1.msra.mxu0 %v342
    %1495 = vmatprep.subr.mxu0 %v347
    %1496 = vmatpush1.msra.mxu0 %v346
    %1497 = vmatprep.subr.mxu0 %v351
    %1498 = vmatpush1.msra.mxu0 %v350
    %1499 = vmatprep.subr.mxu0 %v355
    %1500 = vmatpush1.msra.mxu0 %v354
    %1501 = vmatprep.subr.mxu0 %v359
    %1502 = vmatpush1.msra.mxu0 %v358
    %1503 = vmatprep.subr.mxu0 %v363
    %1504 = vmatpush1.msra.mxu0 %v362
    %1505 = vmatprep.subr.mxu0 %v367
    %1506 = vmatpush1.msra.mxu0 %v366
    %1507 = vmatprep.subr.mxu0 %v371
    %1508 = vmatpush1.msra.mxu0 %v370
    %1509 = vmatprep.subr.mxu0 0.0
    %1510 = vmatpush1.msra.mxu0 0.0
    %1511 = vmatprep.subr.mxu0 0.0
    %1512 = vmatpush1.msra.mxu0 0.0
    %1513 = vmatprep.subr.mxu0 0.0
    %1514 = vmatpush1.msra.mxu0 0.0
    %1515 = vmatprep.subr.mxu0 0.0
    %1516 = vmatpush1.msra.mxu0 0.0
    %1517 = vmatprep.subr.mxu0 0.0
    %1518 = vmatpush1.msra.mxu0 0.0
    %1519 = vmatprep.subr.mxu0 0.0
    %1520 = vmatpush1.msra.mxu0 0.0
    %1521 = vmatprep.subr.mxu0 0.0
    %1522 = vmatpush1.msra.mxu0 0.0
    %1523 = vmatprep.subr.mxu0 0.0
    %1524 = vmatpush1.msra.mxu0 0.0
    %1525 = vmatprep.subr.mxu0 0.0
    %1526 = vmatpush1.msra.mxu0 0.0
    %1527 = vmatprep.subr.mxu0 0.0
    %1528 = vmatpush1.msra.mxu0 0.0
    %1529 = vmatprep.subr.mxu0 0.0
    %1530 = vmatpush1.msra.mxu0 0.0
    %1531 = vmatprep.subr.mxu0 0.0
    %1532 = vmatpush1.msra.mxu0 0.0
    %1533 = vmatprep.subr.mxu0 0.0
    %1534 = vmatpush1.msra.mxu0 0.0
    %1535 = vmatprep.subr.mxu0 0.0
    %1536 = vmatpush1.msra.mxu0 0.0
    %1537 = vmatprep.subr.mxu0 0.0
    %1538 = vmatpush1.msra.mxu0 0.0
    %1539 = vmatprep.subr.mxu0 0.0
    %1540 = vmatpush1.msra.mxu0 0.0
    %1541 = vmatprep.mubr.f32.mxu0 0.0
    %1542 = vmatmul.mubr.f32.gmra.mrb[0].mxu0 %v1255
    %v1543 = vpop.f32.mrb[0].mxu0
    %v1544 = vadd.f32 %v549, %v1543
    %v1545 = vpop.f32.mrb[0].mxu0
    %v1546 = vadd.f32 %v553, %v1545
    %1547 = vdwg.mxu0
    %v1548 = vadd.f32 %v1473, %v1331
    %v1549 = vadd.f32 %v1475, %v1333
    %v1550 = vadd.f32 %v1544, %v1402
    %v1551 = vadd.f32 %v1546, %v1404
    %v1552 = vxor.u32 %v1548, 2147483648
    %v1553 = vxor.u32 %v1549, 2147483648
    %v1554 = vxor.u32 %v1550, 2147483648
    %v1555 = vxor.u32 %v1551, 2147483648
    %v1556 = vmul.f32 %v1552, 1.442695
    %v1557 = vpow.pop %v1556
    %v1558 = vmul.f32 %v1553, 1.442695
    %v1559 = vpow.pop %v1558
    %v1560 = vmul.f32 %v1554, 1.442695
    %v1561 = vpow.pop %v1560
    %v1562 = vmul.f32 %v1555, 1.442695
    %v1563 = vpow.pop %v1562
    %v1564 = vadd.f32 %v1557, 1.0
    %v1565 = vadd.f32 %v1559, 1.0
    %v1566 = vadd.f32 %v1561, 1.0
    %v1567 = vadd.f32 %v1563, 1.0
    %v1568 = vrcp.pop %v1564
    %v1569 = vmul.f32 1.0, %v1568
    %v1570 = vrcp.pop %v1565
    %v1571 = vmul.f32 1.0, %v1570
    %v1572 = vrcp.pop %v1566
    %v1573 = vmul.f32 1.0, %v1572
    %v1574 = vrcp.pop %v1567
    %v1575 = vmul.f32 1.0, %v1574
    %v1576 = vmul.f32 %v1573, 2.0
    %v1577 = vsub.f32 %v1576, 1.0
    %v1578 = vmul.f32 %v1571, %v1254
    %v1579 = vmul.f32 %v1569, %v1577
    %v1580 = vadd.f32 %v1578, %v1579
    %v1581 = vtanh.pop %v1580
    %v1582 = vmul.f32 %v1575, %v1581
    %v1583 = vadd.f32 %v1582, 0.0
    %1584 = vset.pattern.permute.xlu0 4
    %1585 = vperm.xlu0 %1584, %v84
    %v1586 = vpop.permute.xlu0 %1585
    %vm1587 = vcmp.eq.s32.totalorder %v1586, %v307
    %v1588 = vsel %vm1587, 1.0, 0.0
    %v1590 = vsel %vm378, %v1588, 0
    %1592 = vmatprep.subr.mxu0 %v209
    %1593 = vmatpush1.msra.mxu0 %v207
    %1594 = vmatprep.subr.mxu0 %v215
    %1595 = vmatpush1.msra.mxu0 %v213
    %1596 = vmatprep.subr.mxu0 %v387
    %1597 = vmatpush1.msra.mxu0 %v384
    %1598 = vmatprep.subr.mxu0 0.0
    %1599 = vmatpush1.msra.mxu0 0.0
    %1600 = vmatprep.subr.mxu0 0.0
    %1601 = vmatpush1.msra.mxu0 0.0
    %1602 = vmatprep.subr.mxu0 0.0
    %1603 = vmatpush1.msra.mxu0 0.0
    %1604 = vmatprep.subr.mxu0 0.0
    %1605 = vmatpush1.msra.mxu0 0.0
    %1606 = vmatprep.subr.mxu0 0.0
    %1607 = vmatpush1.msra.mxu0 0.0
    %1608 = vmatprep.subr.mxu0 0.0
    %1609 = vmatpush1.msra.mxu0 0.0
    %1610 = vmatprep.subr.mxu0 0.0
    %1611 = vmatpush1.msra.mxu0 0.0
    %1612 = vmatprep.subr.mxu0 0.0
    %1613 = vmatpush1.msra.mxu0 0.0
    %1614 = vmatprep.subr.mxu0 0.0
    %1615 = vmatpush1.msra.mxu0 0.0
    %1616 = vmatprep.subr.mxu0 0.0
    %1617 = vmatpush1.msra.mxu0 0.0
    %1618 = vmatprep.subr.mxu0 0.0
    %1619 = vmatpush1.msra.mxu0 0.0
    %1620 = vmatprep.subr.mxu0 0.0
    %1621 = vmatpush1.msra.mxu0 0.0
    %1622 = vmatprep.subr.mxu0 0.0
    %1623 = vmatpush1.msra.mxu0 0.0
    %1624 = vmatprep.subr.mxu0 0.0
    %1625 = vmatpush1.msra.mxu0 0.0
    %1626 = vmatprep.subr.mxu0 0.0
    %1627 = vmatpush1.msra.mxu0 0.0
    %1628 = vmatprep.subr.mxu0 0.0
    %1629 = vmatpush1.msra.mxu0 0.0
    %1630 = vmatprep.subr.mxu0 0.0
    %1631 = vmatpush1.msra.mxu0 0.0
    %1632 = vmatprep.subr.mxu0 0.0
    %1633 = vmatpush1.msra.mxu0 0.0
    %1634 = vmatprep.subr.mxu0 0.0
    %1635 = vmatpush1.msra.mxu0 0.0
    %1636 = vmatprep.subr.mxu0 0.0
    %1637 = vmatpush1.msra.mxu0 0.0
    %1638 = vmatprep.subr.mxu0 0.0
    %1639 = vmatpush1.msra.mxu0 0.0
    %1640 = vmatprep.subr.mxu0 0.0
    %1641 = vmatpush1.msra.mxu0 0.0
    %1642 = vmatprep.subr.mxu0 0.0
    %1643 = vmatpush1.msra.mxu0 0.0
    %1644 = vmatprep.subr.mxu0 0.0
    %1645 = vmatpush1.msra.mxu0 0.0
    %1646 = vmatprep.subr.mxu0 0.0
    %1647 = vmatpush1.msra.mxu0 0.0
    %1648 = vmatprep.subr.mxu0 0.0
    %1649 = vmatpush1.msra.mxu0 0.0
    %1650 = vmatprep.subr.mxu0 0.0
    %1651 = vmatpush1.msra.mxu0 0.0
    %1652 = vmatprep.subr.mxu0 0.0
    %1653 = vmatpush1.msra.mxu0 0.0
    %1654 = vmatprep.subr.mxu0 0.0
    %1655 = vmatpush1.msra.mxu0 0.0
    %1656 = vmatprep.mubr.f32.mxu0 0.0
    %1657 = vmatmul.mubr.f32.gmra.mrb[0].mxu0 %v1590
    %v1658 = vpop.f32.mrb[0].mxu0
    %v1659 = vadd.f32 0.0, %v1658
    %v1660 = vpop.f32.mrb[0].mxu0
    %v1661 = vadd.f32 0.0, %v1660
    %1662 = vdwg.mxu0
    %1663 = vmatprep.subr.mxu0 %v292
    %1664 = vmatpush1.msra.mxu0 %v290
    %1665 = vmatprep.subr.mxu0 %v298
    %1666 = vmatpush1.msra.mxu0 %v296
    %1667 = vmatprep.subr.mxu0 %v393
    %1668 = vmatpush1.msra.mxu0 %v390
    %1669 = vmatprep.subr.mxu0 0.0
    %1670 = vmatpush1.msra.mxu0 0.0
    %1671 = vmatprep.subr.mxu0 0.0
    %1672 = vmatpush1.msra.mxu0 0.0
    %1673 = vmatprep.subr.mxu0 0.0
    %1674 = vmatpush1.msra.mxu0 0.0
    %1675 = vmatprep.subr.mxu0 0.0
    %1676 = vmatpush1.msra.mxu0 0.0
    %1677 = vmatprep.subr.mxu0 0.0
    %1678 = vmatpush1.msra.mxu0 0.0
    %1679 = vmatprep.subr.mxu0 0.0
    %1680 = vmatpush1.msra.mxu0 0.0
    %1681 = vmatprep.subr.mxu0 0.0
    %1682 = vmatpush1.msra.mxu0 0.0
    %1683 = vmatprep.subr.mxu0 0.0
    %1684 = vmatpush1.msra.mxu0 0.0
    %1685 = vmatprep.subr.mxu0 0.0
    %1686 = vmatpush1.msra.mxu0 0.0
    %1687 = vmatprep.subr.mxu0 0.0
    %1688 = vmatpush1.msra.mxu0 0.0
    %1689 = vmatprep.subr.mxu0 0.0
    %1690 = vmatpush1.msra.mxu0 0.0
    %1691 = vmatprep.subr.mxu0 0.0
    %1692 = vmatpush1.msra.mxu0 0.0
    %1693 = vmatprep.subr.mxu0 0.0
    %1694 = vmatpush1.msra.mxu0 0.0
    %1695 = vmatprep.subr.mxu0 0.0
    %1696 = vmatpush1.msra.mxu0 0.0
    %1697 = vmatprep.subr.mxu0 0.0
    %1698 = vmatpush1.msra.mxu0 0.0
    %1699 = vmatprep.subr.mxu0 0.0
    %1700 = vmatpush1.msra.mxu0 0.0
    %1701 = vmatprep.subr.mxu0 0.0
    %1702 = vmatpush1.msra.mxu0 0.0
    %1703 = vmatprep.subr.mxu0 0.0
    %1704 = vmatpush1.msra.mxu0 0.0
    %1705 = vmatprep.subr.mxu0 0.0
    %1706 = vmatpush1.msra.mxu0 0.0
    %1707 = vmatprep.subr.mxu0 0.0
    %1708 = vmatpush1.msra.mxu0 0.0
    %1709 = vmatprep.subr.mxu0 0.0
    %1710 = vmatpush1.msra.mxu0 0.0
    %1711 = vmatprep.subr.mxu0 0.0
    %1712 = vmatpush1.msra.mxu0 0.0
    %1713 = vmatprep.subr.mxu0 0.0
    %1714 = vmatpush1.msra.mxu0 0.0
    %1715 = vmatprep.subr.mxu0 0.0
    %1716 = vmatpush1.msra.mxu0 0.0
    %1717 = vmatprep.subr.mxu0 0.0
    %1718 = vmatpush1.msra.mxu0 0.0
    %1719 = vmatprep.subr.mxu0 0.0
    %1720 = vmatpush1.msra.mxu0 0.0
    %1721 = vmatprep.subr.mxu0 0.0
    %1722 = vmatpush1.msra.mxu0 0.0
    %1723 = vmatprep.subr.mxu0 0.0
    %1724 = vmatpush1.msra.mxu0 0.0
    %1725 = vmatprep.subr.mxu0 0.0
    %1726 = vmatpush1.msra.mxu0 0.0
    %1727 = vmatprep.mubr.f32.mxu0 0.0
    %1728 = vmatmul.mubr.f32.gmra.mrb[0].mxu0 %v1590
    %v1729 = vpop.f32.mrb[0].mxu0
    %v1730 = vadd.f32 0.0, %v1729
    %v1731 = vpop.f32.mrb[0].mxu0
    %v1732 = vadd.f32 0.0, %v1731
    %1733 = vdwg.mxu0
    %1734 = vmatprep.subr.mxu0 %v309
    %1735 = vmatpush1.msra.mxu0 %v308
    %1736 = vmatprep.subr.mxu0 %v313
    %1737 = vmatpush1.msra.mxu0 %v312
    %1738 = vmatprep.subr.mxu0 %v317
    %1739 = vmatpush1.msra.mxu0 %v316
    %1740 = vmatprep.subr.mxu0 %v321
    %1741 = vmatpush1.msra.mxu0 %v320
    %1742 = vmatprep.subr.mxu0 %v325
    %1743 = vmatpush1.msra.mxu0 %v324
    %1744 = vmatprep.subr.mxu0 %v329
    %1745 = vmatpush1.msra.mxu0 %v328
    %1746 = vmatprep.subr.mxu0 %v333
    %1747 = vmatpush1.msra.mxu0 %v332
    %1748 = vmatprep.subr.mxu0 %v337
    %1749 = vmatpush1.msra.mxu0 %v336
    %1750 = vmatprep.subr.mxu0 %v341
    %1751 = vmatpush1.msra.mxu0 %v340
    %1752 = vmatprep.subr.mxu0 %v345
    %1753 = vmatpush1.msra.mxu0 %v344
    %1754 = vmatprep.subr.mxu0 %v349
    %1755 = vmatpush1.msra.mxu0 %v348
    %1756 = vmatprep.subr.mxu0 %v353
    %1757 = vmatpush1.msra.mxu0 %v352
    %1758 = vmatprep.subr.mxu0 %v357
    %1759 = vmatpush1.msra.mxu0 %v356
    %1760 = vmatprep.subr.mxu0 %v361
    %1761 = vmatpush1.msra.mxu0 %v360
    %1762 = vmatprep.subr.mxu0 %v365
    %1763 = vmatpush1.msra.mxu0 %v364
    %1764 = vmatprep.subr.mxu0 %v369
    %1765 = vmatpush1.msra.mxu0 %v368
    %1766 = vmatprep.subr.mxu0 0.0
    %1767 = vmatpush1.msra.mxu0 0.0
    %1768 = vmatprep.subr.mxu0 0.0
    %1769 = vmatpush1.msra.mxu0 0.0
    %1770 = vmatprep.subr.mxu0 0.0
    %1771 = vmatpush1.msra.mxu0 0.0
    %1772 = vmatprep.subr.mxu0 0.0
    %1773 = vmatpush1.msra.mxu0 0.0
    %1774 = vmatprep.subr.mxu0 0.0
    %1775 = vmatpush1.msra.mxu0 0.0
    %1776 = vmatprep.subr.mxu0 0.0
    %1777 = vmatpush1.msra.mxu0 0.0
    %1778 = vmatprep.subr.mxu0 0.0
    %1779 = vmatpush1.msra.mxu0 0.0
    %1780 = vmatprep.subr.mxu0 0.0
    %1781 = vmatpush1.msra.mxu0 0.0
    %1782 = vmatprep.subr.mxu0 0.0
    %1783 = vmatpush1.msra.mxu0 0.0
    %1784 = vmatprep.subr.mxu0 0.0
    %1785 = vmatpush1.msra.mxu0 0.0
    %1786 = vmatprep.subr.mxu0 0.0
    %1787 = vmatpush1.msra.mxu0 0.0
    %1788 = vmatprep.subr.mxu0 0.0
    %1789 = vmatpush1.msra.mxu0 0.0
    %1790 = vmatprep.subr.mxu0 0.0
    %1791 = vmatpush1.msra.mxu0 0.0
    %1792 = vmatprep.subr.mxu0 0.0
    %1793 = vmatpush1.msra.mxu0 0.0
    %1794 = vmatprep.subr.mxu0 0.0
    %1795 = vmatpush1.msra.mxu0 0.0
    %1796 = vmatprep.subr.mxu0 0.0
    %1797 = vmatpush1.msra.mxu0 0.0
    %1798 = vmatprep.mubr.f32.mxu0 0.0
    %1799 = vmatmul.mubr.f32.gmra.mrb[0].mxu0 %v1582
    %v1800 = vpop.f32.mrb[0].mxu0
    %v1801 = vadd.f32 %v541, %v1800
    %v1802 = vpop.f32.mrb[0].mxu0
    %v1803 = vadd.f32 %v545, %v1802
    %1804 = vdwg.mxu0
    %1805 = vmatprep.subr.mxu0 %v311
    %1806 = vmatpush1.msra.mxu0 %v310
    %1807 = vmatprep.subr.mxu0 %v315
    %1808 = vmatpush1.msra.mxu0 %v314
    %1809 = vmatprep.subr.mxu0 %v319
    %1810 = vmatpush1.msra.mxu0 %v318
    %1811 = vmatprep.subr.mxu0 %v323
    %1812 = vmatpush1.msra.mxu0 %v322
    %1813 = vmatprep.subr.mxu0 %v327
    %1814 = vmatpush1.msra.mxu0 %v326
    %1815 = vmatprep.subr.mxu0 %v331
    %1816 = vmatpush1.msra.mxu0 %v330
    %1817 = vmatprep.subr.mxu0 %v335
    %1818 = vmatpush1.msra.mxu0 %v334
    %1819 = vmatprep.subr.mxu0 %v339
    %1820 = vmatpush1.msra.mxu0 %v338
    %1821 = vmatprep.subr.mxu0 %v343
    %1822 = vmatpush1.msra.mxu0 %v342
    %1823 = vmatprep.subr.mxu0 %v347
    %1824 = vmatpush1.msra.mxu0 %v346
    %1825 = vmatprep.subr.mxu0 %v351
    %1826 = vmatpush1.msra.mxu0 %v350
    %1827 = vmatprep.subr.mxu0 %v355
    %1828 = vmatpush1.msra.mxu0 %v354
    %1829 = vmatprep.subr.mxu0 %v359
    %1830 = vmatpush1.msra.mxu0 %v358
    %1831 = vmatprep.subr.mxu0 %v363
    %1832 = vmatpush1.msra.mxu0 %v362
    %1833 = vmatprep.subr.mxu0 %v367
    %1834 = vmatpush1.msra.mxu0 %v366
    %1835 = vmatprep.subr.mxu0 %v371
    %1836 = vmatpush1.msra.mxu0 %v370
    %1837 = vmatprep.subr.mxu0 0.0
    %1838 = vmatpush1.msra.mxu0 0.0
    %1839 = vmatprep.subr.mxu0 0.0
    %1840 = vmatpush1.msra.mxu0 0.0
    %1841 = vmatprep.subr.mxu0 0.0
    %1842 = vmatpush1.msra.mxu0 0.0
    %1843 = vmatprep.subr.mxu0 0.0
    %1844 = vmatpush1.msra.mxu0 0.0
    %1845 = vmatprep.subr.mxu0 0.0
    %1846 = vmatpush1.msra.mxu0 0.0
    %1847 = vmatprep.subr.mxu0 0.0
    %1848 = vmatpush1.msra.mxu0 0.0
    %1849 = vmatprep.subr.mxu0 0.0
    %1850 = vmatpush1.msra.mxu0 0.0
    %1851 = vmatprep.subr.mxu0 0.0
    %1852 = vmatpush1.msra.mxu0 0.0
    %1853 = vmatprep.subr.mxu0 0.0
    %1854 = vmatpush1.msra.mxu0 0.0
    %1855 = vmatprep.subr.mxu0 0.0
    %1856 = vmatpush1.msra.mxu0 0.0
    %1857 = vmatprep.subr.mxu0 0.0
    %1858 = vmatpush1.msra.mxu0 0.0
    %1859 = vmatprep.subr.mxu0 0.0
    %1860 = vmatpush1.msra.mxu0 0.0
    %1861 = vmatprep.subr.mxu0 0.0
    %1862 = vmatpush1.msra.mxu0 0.0
    %1863 = vmatprep.subr.mxu0 0.0
    %1864 = vmatpush1.msra.mxu0 0.0
    %1865 = vmatprep.subr.mxu0 0.0
    %1866 = vmatpush1.msra.mxu0 0.0
    %1867 = vmatprep.subr.mxu0 0.0
    %1868 = vmatpush1.msra.mxu0 0.0
    %1869 = vmatprep.mubr.f32.mxu0 0.0
    %1870 = vmatmul.mubr.f32.gmra.mrb[0].mxu0 %v1582
    %v1871 = vpop.f32.mrb[0].mxu0
    %v1872 = vadd.f32 %v549, %v1871
    %v1873 = vpop.f32.mrb[0].mxu0
    %v1874 = vadd.f32 %v553, %v1873
    %1875 = vdwg.mxu0
    %v1876 = vadd.f32 %v1801, %v1659
    %v1877 = vadd.f32 %v1803, %v1661
    %v1878 = vadd.f32 %v1872, %v1730
    %v1879 = vadd.f32 %v1874, %v1732
    %v1880 = vxor.u32 %v1876, 2147483648
    %v1881 = vxor.u32 %v1877, 2147483648
    %v1882 = vxor.u32 %v1878, 2147483648
    %v1883 = vxor.u32 %v1879, 2147483648
    %v1884 = vmul.f32 %v1880, 1.442695
    %v1885 = vpow.pop %v1884
    %v1886 = vmul.f32 %v1881, 1.442695
    %v1887 = vpow.pop %v1886
    %v1888 = vmul.f32 %v1882, 1.442695
    %v1889 = vpow.pop %v1888
    %v1890 = vmul.f32 %v1883, 1.442695
    %v1891 = vpow.pop %v1890
    %v1892 = vadd.f32 %v1885, 1.0
    %v1893 = vadd.f32 %v1887, 1.0
    %v1894 = vadd.f32 %v1889, 1.0
    %v1895 = vadd.f32 %v1891, 1.0
    %v1896 = vrcp.pop %v1892
    %v1897 = vmul.f32 1.0, %v1896
    %v1898 = vrcp.pop %v1893
    %v1899 = vmul.f32 1.0, %v1898
    %v1900 = vrcp.pop %v1894
    %v1901 = vmul.f32 1.0, %v1900
    %v1902 = vrcp.pop %v1895
    %v1903 = vmul.f32 1.0, %v1902
    %v1904 = vmul.f32 %v1901, 2.0
    %v1905 = vsub.f32 %v1904, 1.0
    %v1906 = vmul.f32 %v1899, %v1580
    %v1907 = vmul.f32 %v1897, %v1905
    %v1908 = vadd.f32 %v1906, %v1907
    %v1909 = vtanh.pop %v1908
    %v1910 = vmul.f32 %v1903, %v1909
    %v1911 = vadd.f32 %v1583, %v1910
    %1912 = vset.pattern.permute.xlu0 5
    %1913 = vperm.xlu0 %1912, %v84
    %v1914 = vpop.permute.xlu0 %1913
    %vm1915 = vcmp.eq.s32.totalorder %v1914, %v307
    %v1916 = vsel %vm1915, 1.0, 0.0
    %v1918 = vsel %vm378, %v1916, 0
    %1920 = vmatprep.subr.mxu0 %v209
    %1921 = vmatpush1.msra.mxu0 %v207
    %1922 = vmatprep.subr.mxu0 %v215
    %1923 = vmatpush1.msra.mxu0 %v213
    %1924 = vmatprep.subr.mxu0 %v387
    %1925 = vmatpush1.msra.mxu0 %v384
    %1926 = vmatprep.subr.mxu0 0.0
    %1927 = vmatpush1.msra.mxu0 0.0
    %1928 = vmatprep.subr.mxu0 0.0
    %1929 = vmatpush1.msra.mxu0 0.0
    %1930 = vmatprep.subr.mxu0 0.0
    %1931 = vmatpush1.msra.mxu0 0.0
    %1932 = vmatprep.subr.mxu0 0.0
    %1933 = vmatpush1.msra.mxu0 0.0
    %1934 = vmatprep.subr.mxu0 0.0
    %1935 = vmatpush1.msra.mxu0 0.0
    %1936 = vmatprep.subr.mxu0 0.0
    %1937 = vmatpush1.msra.mxu0 0.0
    %1938 = vmatprep.subr.mxu0 0.0
    %1939 = vmatpush1.msra.mxu0 0.0
    %1940 = vmatprep.subr.mxu0 0.0
    %1941 = vmatpush1.msra.mxu0 0.0
    %1942 = vmatprep.subr.mxu0 0.0
    %1943 = vmatpush1.msra.mxu0 0.0
    %1944 = vmatprep.subr.mxu0 0.0
    %1945 = vmatpush1.msra.mxu0 0.0
    %1946 = vmatprep.subr.mxu0 0.0
    %1947 = vmatpush1.msra.mxu0 0.0
    %1948 = vmatprep.subr.mxu0 0.0
    %1949 = vmatpush1.msra.mxu0 0.0
    %1950 = vmatprep.subr.mxu0 0.0
    %1951 = vmatpush1.msra.mxu0 0.0
    %1952 = vmatprep.subr.mxu0 0.0
    %1953 = vmatpush1.msra.mxu0 0.0
    %1954 = vmatprep.subr.mxu0 0.0
    %1955 = vmatpush1.msra.mxu0 0.0
    %1956 = vmatprep.subr.mxu0 0.0
    %1957 = vmatpush1.msra.mxu0 0.0
    %1958 = vmatprep.subr.mxu0 0.0
    %1959 = vmatpush1.msra.mxu0 0.0
    %1960 = vmatprep.subr.mxu0 0.0
    %1961 = vmatpush1.msra.mxu0 0.0
    %1962 = vmatprep.subr.mxu0 0.0
    %1963 = vmatpush1.msra.mxu0 0.0
    %1964 = vmatprep.subr.mxu0 0.0
    %1965 = vmatpush1.msra.mxu0 0.0
    %1966 = vmatprep.subr.mxu0 0.0
    %1967 = vmatpush1.msra.mxu0 0.0
    %1968 = vmatprep.subr.mxu0 0.0
    %1969 = vmatpush1.msra.mxu0 0.0
    %1970 = vmatprep.subr.mxu0 0.0
    %1971 = vmatpush1.msra.mxu0 0.0
    %1972 = vmatprep.subr.mxu0 0.0
    %1973 = vmatpush1.msra.mxu0 0.0
    %1974 = vmatprep.subr.mxu0 0.0
    %1975 = vmatpush1.msra.mxu0 0.0
    %1976 = vmatprep.subr.mxu0 0.0
    %1977 = vmatpush1.msra.mxu0 0.0
    %1978 = vmatprep.subr.mxu0 0.0
    %1979 = vmatpush1.msra.mxu0 0.0
    %1980 = vmatprep.subr.mxu0 0.0
    %1981 = vmatpush1.msra.mxu0 0.0
    %1982 = vmatprep.subr.mxu0 0.0
    %1983 = vmatpush1.msra.mxu0 0.0
    %1984 = vmatprep.mubr.f32.mxu0 0.0
    %1985 = vmatmul.mubr.f32.gmra.mrb[0].mxu0 %v1918
    %v1986 = vpop.f32.mrb[0].mxu0
    %v1987 = vadd.f32 0.0, %v1986
    %v1988 = vpop.f32.mrb[0].mxu0
    %v1989 = vadd.f32 0.0, %v1988
    %1990 = vdwg.mxu0
    %1991 = vmatprep.subr.mxu0 %v292
    %1992 = vmatpush1.msra.mxu0 %v290
    %1993 = vmatprep.subr.mxu0 %v298
    %1994 = vmatpush1.msra.mxu0 %v296
    %1995 = vmatprep.subr.mxu0 %v393
    %1996 = vmatpush1.msra.mxu0 %v390
    %1997 = vmatprep.subr.mxu0 0.0
    %1998 = vmatpush1.msra.mxu0 0.0
    %1999 = vmatprep.subr.mxu0 0.0
    %2000 = vmatpush1.msra.mxu0 0.0
    %2001 = vmatprep.subr.mxu0 0.0
    %2002 = vmatpush1.msra.mxu0 0.0
    %2003 = vmatprep.subr.mxu0 0.0
    %2004 = vmatpush1.msra.mxu0 0.0
    %2005 = vmatprep.subr.mxu0 0.0
    %2006 = vmatpush1.msra.mxu0 0.0
    %2007 = vmatprep.subr.mxu0 0.0
    %2008 = vmatpush1.msra.mxu0 0.0
    %2009 = vmatprep.subr.mxu0 0.0
    %2010 = vmatpush1.msra.mxu0 0.0
    %2011 = vmatprep.subr.mxu0 0.0
    %2012 = vmatpush1.msra.mxu0 0.0
    %2013 = vmatprep.subr.mxu0 0.0
    %2014 = vmatpush1.msra.mxu0 0.0
    %2015 = vmatprep.subr.mxu0 0.0
    %2016 = vmatpush1.msra.mxu0 0.0
    %2017 = vmatprep.subr.mxu0 0.0
    %2018 = vmatpush1.msra.mxu0 0.0
    %2019 = vmatprep.subr.mxu0 0.0
    %2020 = vmatpush1.msra.mxu0 0.0
    %2021 = vmatprep.subr.mxu0 0.0
    %2022 = vmatpush1.msra.mxu0 0.0
    %2023 = vmatprep.subr.mxu0 0.0
    %2024 = vmatpush1.msra.mxu0 0.0
    %2025 = vmatprep.subr.mxu0 0.0
    %2026 = vmatpush1.msra.mxu0 0.0
    %2027 = vmatprep.subr.mxu0 0.0
    %2028 = vmatpush1.msra.mxu0 0.0
    %2029 = vmatprep.subr.mxu0 0.0
    %2030 = vmatpush1.msra.mxu0 0.0
    %2031 = vmatprep.subr.mxu0 0.0
    %2032 = vmatpush1.msra.mxu0 0.0
    %2033 = vmatprep.subr.mxu0 0.0
    %2034 = vmatpush1.msra.mxu0 0.0
    %2035 = vmatprep.subr.mxu0 0.0
    %2036 = vmatpush1.msra.mxu0 0.0
    %2037 = vmatprep.subr.mxu0 0.0
    %2038 = vmatpush1.msra.mxu0 0.0
    %2039 = vmatprep.subr.mxu0 0.0
    %2040 = vmatpush1.msra.mxu0 0.0
    %2041 = vmatprep.subr.mxu0 0.0
    %2042 = vmatpush1.msra.mxu0 0.0
    %2043 = vmatprep.subr.mxu0 0.0
    %2044 = vmatpush1.msra.mxu0 0.0
    %2045 = vmatprep.subr.mxu0 0.0
    %2046 = vmatpush1.msra.mxu0 0.0
    %2047 = vmatprep.subr.mxu0 0.0
    %2048 = vmatpush1.msra.mxu0 0.0
    %2049 = vmatprep.subr.mxu0 0.0
    %2050 = vmatpush1.msra.mxu0 0.0
    %2051 = vmatprep.subr.mxu0 0.0
    %2052 = vmatpush1.msra.mxu0 0.0
    %2053 = vmatprep.subr.mxu0 0.0
    %2054 = vmatpush1.msra.mxu0 0.0
    %2055 = vmatprep.mubr.f32.mxu0 0.0
    %2056 = vmatmul.mubr.f32.gmra.mrb[0].mxu0 %v1918
    %v2057 = vpop.f32.mrb[0].mxu0
    %v2058 = vadd.f32 0.0, %v2057
    %v2059 = vpop.f32.mrb[0].mxu0
    %v2060 = vadd.f32 0.0, %v2059
    %2061 = vdwg.mxu0
    %2062 = vmatprep.subr.mxu0 %v309
    %2063 = vmatpush1.msra.mxu0 %v308
    %2064 = vmatprep.subr.mxu0 %v313
    %2065 = vmatpush1.msra.mxu0 %v312
    %2066 = vmatprep.subr.mxu0 %v317
    %2067 = vmatpush1.msra.mxu0 %v316
    %2068 = vmatprep.subr.mxu0 %v321
    %2069 = vmatpush1.msra.mxu0 %v320
    %2070 = vmatprep.subr.mxu0 %v325
    %2071 = vmatpush1.msra.mxu0 %v324
    %2072 = vmatprep.subr.mxu0 %v329
    %2073 = vmatpush1.msra.mxu0 %v328
    %2074 = vmatprep.subr.mxu0 %v333
    %2075 = vmatpush1.msra.mxu0 %v332
    %2076 = vmatprep.subr.mxu0 %v337
    %2077 = vmatpush1.msra.mxu0 %v336
    %2078 = vmatprep.subr.mxu0 %v341
    %2079 = vmatpush1.msra.mxu0 %v340
    %2080 = vmatprep.subr.mxu0 %v345
    %2081 = vmatpush1.msra.mxu0 %v344
    %2082 = vmatprep.subr.mxu0 %v349
    %2083 = vmatpush1.msra.mxu0 %v348
    %2084 = vmatprep.subr.mxu0 %v353
    %2085 = vmatpush1.msra.mxu0 %v352
    %2086 = vmatprep.subr.mxu0 %v357
    %2087 = vmatpush1.msra.mxu0 %v356
    %2088 = vmatprep.subr.mxu0 %v361
    %2089 = vmatpush1.msra.mxu0 %v360
    %2090 = vmatprep.subr.mxu0 %v365
    %2091 = vmatpush1.msra.mxu0 %v364
    %2092 = vmatprep.subr.mxu0 %v369
    %2093 = vmatpush1.msra.mxu0 %v368
    %2094 = vmatprep.subr.mxu0 0.0
    %2095 = vmatpush1.msra.mxu0 0.0
    %2096 = vmatprep.subr.mxu0 0.0
    %2097 = vmatpush1.msra.mxu0 0.0
    %2098 = vmatprep.subr.mxu0 0.0
    %2099 = vmatpush1.msra.mxu0 0.0
    %2100 = vmatprep.subr.mxu0 0.0
    %2101 = vmatpush1.msra.mxu0 0.0
    %2102 = vmatprep.subr.mxu0 0.0
    %2103 = vmatpush1.msra.mxu0 0.0
    %2104 = vmatprep.subr.mxu0 0.0
    %2105 = vmatpush1.msra.mxu0 0.0
    %2106 = vmatprep.subr.mxu0 0.0
    %2107 = vmatpush1.msra.mxu0 0.0
    %2108 = vmatprep.subr.mxu0 0.0
    %2109 = vmatpush1.msra.mxu0 0.0
    %2110 = vmatprep.subr.mxu0 0.0
    %2111 = vmatpush1.msra.mxu0 0.0
    %2112 = vmatprep.subr.mxu0 0.0
    %2113 = vmatpush1.msra.mxu0 0.0
    %2114 = vmatprep.subr.mxu0 0.0
    %2115 = vmatpush1.msra.mxu0 0.0
    %2116 = vmatprep.subr.mxu0 0.0
    %2117 = vmatpush1.msra.mxu0 0.0
    %2118 = vmatprep.subr.mxu0 0.0
    %2119 = vmatpush1.msra.mxu0 0.0
    %2120 = vmatprep.subr.mxu0 0.0
    %2121 = vmatpush1.msra.mxu0 0.0
    %2122 = vmatprep.subr.mxu0 0.0
    %2123 = vmatpush1.msra.mxu0 0.0
    %2124 = vmatprep.subr.mxu0 0.0
    %2125 = vmatpush1.msra.mxu0 0.0
    %2126 = vmatprep.mubr.f32.mxu0 0.0
    %2127 = vmatmul.mubr.f32.gmra.mrb[0].mxu0 %v1910
    %v2128 = vpop.f32.mrb[0].mxu0
    %v2129 = vadd.f32 %v541, %v2128
    %v2130 = vpop.f32.mrb[0].mxu0
    %v2131 = vadd.f32 %v545, %v2130
    %2132 = vdwg.mxu0
    %2133 = vmatprep.subr.mxu0 %v311
    %2134 = vmatpush1.msra.mxu0 %v310
    %2135 = vmatprep.subr.mxu0 %v315
    %2136 = vmatpush1.msra.mxu0 %v314
    %2137 = vmatprep.subr.mxu0 %v319
    %2138 = vmatpush1.msra.mxu0 %v318
    %2139 = vmatprep.subr.mxu0 %v323
    %2140 = vmatpush1.msra.mxu0 %v322
    %2141 = vmatprep.subr.mxu0 %v327
    %2142 = vmatpush1.msra.mxu0 %v326
    %2143 = vmatprep.subr.mxu0 %v331
    %2144 = vmatpush1.msra.mxu0 %v330
    %2145 = vmatprep.subr.mxu0 %v335
    %2146 = vmatpush1.msra.mxu0 %v334
    %2147 = vmatprep.subr.mxu0 %v339
    %2148 = vmatpush1.msra.mxu0 %v338
    %2149 = vmatprep.subr.mxu0 %v343
    %2150 = vmatpush1.msra.mxu0 %v342
    %2151 = vmatprep.subr.mxu0 %v347
    %2152 = vmatpush1.msra.mxu0 %v346
    %2153 = vmatprep.subr.mxu0 %v351
    %2154 = vmatpush1.msra.mxu0 %v350
    %2155 = vmatprep.subr.mxu0 %v355
    %2156 = vmatpush1.msra.mxu0 %v354
    %2157 = vmatprep.subr.mxu0 %v359
    %2158 = vmatpush1.msra.mxu0 %v358
    %2159 = vmatprep.subr.mxu0 %v363
    %2160 = vmatpush1.msra.mxu0 %v362
    %2161 = vmatprep.subr.mxu0 %v367
    %2162 = vmatpush1.msra.mxu0 %v366
    %2163 = vmatprep.subr.mxu0 %v371
    %2164 = vmatpush1.msra.mxu0 %v370
    %2165 = vmatprep.subr.mxu0 0.0
    %2166 = vmatpush1.msra.mxu0 0.0
    %2167 = vmatprep.subr.mxu0 0.0
    %2168 = vmatpush1.msra.mxu0 0.0
    %2169 = vmatprep.subr.mxu0 0.0
    %2170 = vmatpush1.msra.mxu0 0.0
    %2171 = vmatprep.subr.mxu0 0.0
    %2172 = vmatpush1.msra.mxu0 0.0
    %2173 = vmatprep.subr.mxu0 0.0
    %2174 = vmatpush1.msra.mxu0 0.0
    %2175 = vmatprep.subr.mxu0 0.0
    %2176 = vmatpush1.msra.mxu0 0.0
    %2177 = vmatprep.subr.mxu0 0.0
    %2178 = vmatpush1.msra.mxu0 0.0
    %2179 = vmatprep.subr.mxu0 0.0
    %2180 = vmatpush1.msra.mxu0 0.0
    %2181 = vmatprep.subr.mxu0 0.0
    %2182 = vmatpush1.msra.mxu0 0.0
    %2183 = vmatprep.subr.mxu0 0.0
    %2184 = vmatpush1.msra.mxu0 0.0
    %2185 = vmatprep.subr.mxu0 0.0
    %2186 = vmatpush1.msra.mxu0 0.0
    %2187 = vmatprep.subr.mxu0 0.0
    %2188 = vmatpush1.msra.mxu0 0.0
    %2189 = vmatprep.subr.mxu0 0.0
    %2190 = vmatpush1.msra.mxu0 0.0
    %2191 = vmatprep.subr.mxu0 0.0
    %2192 = vmatpush1.msra.mxu0 0.0
    %2193 = vmatprep.subr.mxu0 0.0
    %2194 = vmatpush1.msra.mxu0 0.0
    %2195 = vmatprep.subr.mxu0 0.0
    %2196 = vmatpush1.msra.mxu0 0.0
    %2197 = vmatprep.mubr.f32.mxu0 0.0
    %2198 = vmatmul.mubr.f32.gmra.mrb[0].mxu0 %v1910
    %v2199 = vpop.f32.mrb[0].mxu0
    %v2200 = vadd.f32 %v549, %v2199
    %v2201 = vpop.f32.mrb[0].mxu0
    %v2202 = vadd.f32 %v553, %v2201
    %2203 = vdwg.mxu0
    %v2204 = vadd.f32 %v2129, %v1987
    %v2205 = vadd.f32 %v2131, %v1989
    %v2206 = vadd.f32 %v2200, %v2058
    %v2207 = vadd.f32 %v2202, %v2060
    %v2208 = vxor.u32 %v2204, 2147483648
    %v2209 = vxor.u32 %v2205, 2147483648
    %v2210 = vxor.u32 %v2206, 2147483648
    %v2211 = vxor.u32 %v2207, 2147483648
    %v2212 = vmul.f32 %v2208, 1.442695
    %v2213 = vpow.pop %v2212
    %v2214 = vmul.f32 %v2209, 1.442695
    %v2215 = vpow.pop %v2214
    %v2216 = vmul.f32 %v2210, 1.442695
    %v2217 = vpow.pop %v2216
    %v2218 = vmul.f32 %v2211, 1.442695
    %v2219 = vpow.pop %v2218
    %v2220 = vadd.f32 %v2213, 1.0
    %v2221 = vadd.f32 %v2215, 1.0
    %v2222 = vadd.f32 %v2217, 1.0
    %v2223 = vadd.f32 %v2219, 1.0
    %v2224 = vrcp.pop %v2220
    %v2225 = vmul.f32 1.0, %v2224
    %v2226 = vrcp.pop %v2221
    %v2227 = vmul.f32 1.0, %v2226
    %v2228 = vrcp.pop %v2222
    %v2229 = vmul.f32 1.0, %v2228
    %v2230 = vrcp.pop %v2223
    %v2231 = vmul.f32 1.0, %v2230
    %v2232 = vmul.f32 %v2229, 2.0
    %v2233 = vsub.f32 %v2232, 1.0
    %v2234 = vmul.f32 %v2227, %v1908
    %v2235 = vmul.f32 %v2225, %v2233
    %v2236 = vadd.f32 %v2234, %v2235
    %v2237 = vtanh.pop %v2236
    %v2238 = vmul.f32 %v2231, %v2237
    %v2239 = vadd.f32 %v1911, %v2238
    %2240 = vset.pattern.permute.xlu0 6
    %2241 = vperm.xlu0 %2240, %v84
    %v2242 = vpop.permute.xlu0 %2241
    %vm2243 = vcmp.eq.s32.totalorder %v2242, %v307
    %v2244 = vsel %vm2243, 1.0, 0.0
    %v2246 = vsel %vm378, %v2244, 0
    %2248 = vmatprep.subr.mxu0 %v209
    %2249 = vmatpush1.msra.mxu0 %v207
    %2250 = vmatprep.subr.mxu0 %v215
    %2251 = vmatpush1.msra.mxu0 %v213
    %2252 = vmatprep.subr.mxu0 %v387
    %2253 = vmatpush1.msra.mxu0 %v384
    %2254 = vmatprep.subr.mxu0 0.0
    %2255 = vmatpush1.msra.mxu0 0.0
    %2256 = vmatprep.subr.mxu0 0.0
    %2257 = vmatpush1.msra.mxu0 0.0
    %2258 = vmatprep.subr.mxu0 0.0
    %2259 = vmatpush1.msra.mxu0 0.0
    %2260 = vmatprep.subr.mxu0 0.0
    %2261 = vmatpush1.msra.mxu0 0.0
    %2262 = vmatprep.subr.mxu0 0.0
    %2263 = vmatpush1.msra.mxu0 0.0
    %2264 = vmatprep.subr.mxu0 0.0
    %2265 = vmatpush1.msra.mxu0 0.0
    %2266 = vmatprep.subr.mxu0 0.0
    %2267 = vmatpush1.msra.mxu0 0.0
    %2268 = vmatprep.subr.mxu0 0.0
    %2269 = vmatpush1.msra.mxu0 0.0
    %2270 = vmatprep.subr.mxu0 0.0
    %2271 = vmatpush1.msra.mxu0 0.0
    %2272 = vmatprep.subr.mxu0 0.0
    %2273 = vmatpush1.msra.mxu0 0.0
    %2274 = vmatprep.subr.mxu0 0.0
    %2275 = vmatpush1.msra.mxu0 0.0
    %2276 = vmatprep.subr.mxu0 0.0
    %2277 = vmatpush1.msra.mxu0 0.0
    %2278 = vmatprep.subr.mxu0 0.0
    %2279 = vmatpush1.msra.mxu0 0.0
    %2280 = vmatprep.subr.mxu0 0.0
    %2281 = vmatpush1.msra.mxu0 0.0
    %2282 = vmatprep.subr.mxu0 0.0
    %2283 = vmatpush1.msra.mxu0 0.0
    %2284 = vmatprep.subr.mxu0 0.0
    %2285 = vmatpush1.msra.mxu0 0.0
    %2286 = vmatprep.subr.mxu0 0.0
    %2287 = vmatpush1.msra.mxu0 0.0
    %2288 = vmatprep.subr.mxu0 0.0
    %2289 = vmatpush1.msra.mxu0 0.0
    %2290 = vmatprep.subr.mxu0 0.0
    %2291 = vmatpush1.msra.mxu0 0.0
    %2292 = vmatprep.subr.mxu0 0.0
    %2293 = vmatpush1.msra.mxu0 0.0
    %2294 = vmatprep.subr.mxu0 0.0
    %2295 = vmatpush1.msra.mxu0 0.0
    %2296 = vmatprep.subr.mxu0 0.0
    %2297 = vmatpush1.msra.mxu0 0.0
    %2298 = vmatprep.subr.mxu0 0.0
    %2299 = vmatpush1.msra.mxu0 0.0
    %2300 = vmatprep.subr.mxu0 0.0
    %2301 = vmatpush1.msra.mxu0 0.0
    %2302 = vmatprep.subr.mxu0 0.0
    %2303 = vmatpush1.msra.mxu0 0.0
    %2304 = vmatprep.subr.mxu0 0.0
    %2305 = vmatpush1.msra.mxu0 0.0
    %2306 = vmatprep.subr.mxu0 0.0
    %2307 = vmatpush1.msra.mxu0 0.0
    %2308 = vmatprep.subr.mxu0 0.0
    %2309 = vmatpush1.msra.mxu0 0.0
    %2310 = vmatprep.subr.mxu0 0.0
    %2311 = vmatpush1.msra.mxu0 0.0
    %2312 = vmatprep.mubr.f32.mxu0 0.0
    %2313 = vmatmul.mubr.f32.gmra.mrb[0].mxu0 %v2246
    %v2314 = vpop.f32.mrb[0].mxu0
    %v2315 = vadd.f32 0.0, %v2314
    %v2316 = vpop.f32.mrb[0].mxu0
    %v2317 = vadd.f32 0.0, %v2316
    %2318 = vdwg.mxu0
    %2319 = vmatprep.subr.mxu0 %v292
    %2320 = vmatpush1.msra.mxu0 %v290
    %2321 = vmatprep.subr.mxu0 %v298
    %2322 = vmatpush1.msra.mxu0 %v296
    %2323 = vmatprep.subr.mxu0 %v393
    %2324 = vmatpush1.msra.mxu0 %v390
    %2325 = vmatprep.subr.mxu0 0.0
    %2326 = vmatpush1.msra.mxu0 0.0
    %2327 = vmatprep.subr.mxu0 0.0
    %2328 = vmatpush1.msra.mxu0 0.0
    %2329 = vmatprep.subr.mxu0 0.0
    %2330 = vmatpush1.msra.mxu0 0.0
    %2331 = vmatprep.subr.mxu0 0.0
    %2332 = vmatpush1.msra.mxu0 0.0
    %2333 = vmatprep.subr.mxu0 0.0
    %2334 = vmatpush1.msra.mxu0 0.0
    %2335 = vmatprep.subr.mxu0 0.0
    %2336 = vmatpush1.msra.mxu0 0.0
    %2337 = vmatprep.subr.mxu0 0.0
    %2338 = vmatpush1.msra.mxu0 0.0
    %2339 = vmatprep.subr.mxu0 0.0
    %2340 = vmatpush1.msra.mxu0 0.0
    %2341 = vmatprep.subr.mxu0 0.0
    %2342 = vmatpush1.msra.mxu0 0.0
    %2343 = vmatprep.subr.mxu0 0.0
    %2344 = vmatpush1.msra.mxu0 0.0
    %2345 = vmatprep.subr.mxu0 0.0
    %2346 = vmatpush1.msra.mxu0 0.0
    %2347 = vmatprep.subr.mxu0 0.0
    %2348 = vmatpush1.msra.mxu0 0.0
    %2349 = vmatprep.subr.mxu0 0.0
    %2350 = vmatpush1.msra.mxu0 0.0
    %2351 = vmatprep.subr.mxu0 0.0
    %2352 = vmatpush1.msra.mxu0 0.0
    %2353 = vmatprep.subr.mxu0 0.0
    %2354 = vmatpush1.msra.mxu0 0.0
    %2355 = vmatprep.subr.mxu0 0.0
    %2356 = vmatpush1.msra.mxu0 0.0
    %2357 = vmatprep.subr.mxu0 0.0
    %2358 = vmatpush1.msra.mxu0 0.0
    %2359 = vmatprep.subr.mxu0 0.0
    %2360 = vmatpush1.msra.mxu0 0.0
    %2361 = vmatprep.subr.mxu0 0.0
    %2362 = vmatpush1.msra.mxu0 0.0
    %2363 = vmatprep.subr.mxu0 0.0
    %2364 = vmatpush1.msra.mxu0 0.0
    %2365 = vmatprep.subr.mxu0 0.0
    %2366 = vmatpush1.msra.mxu0 0.0
    %2367 = vmatprep.subr.mxu0 0.0
    %2368 = vmatpush1.msra.mxu0 0.0
    %2369 = vmatprep.subr.mxu0 0.0
    %2370 = vmatpush1.msra.mxu0 0.0
    %2371 = vmatprep.subr.mxu0 0.0
    %2372 = vmatpush1.msra.mxu0 0.0
    %2373 = vmatprep.subr.mxu0 0.0
    %2374 = vmatpush1.msra.mxu0 0.0
    %2375 = vmatprep.subr.mxu0 0.0
    %2376 = vmatpush1.msra.mxu0 0.0
    %2377 = vmatprep.subr.mxu0 0.0
    %2378 = vmatpush1.msra.mxu0 0.0
    %2379 = vmatprep.subr.mxu0 0.0
    %2380 = vmatpush1.msra.mxu0 0.0
    %2381 = vmatprep.subr.mxu0 0.0
    %2382 = vmatpush1.msra.mxu0 0.0
    %2383 = vmatprep.mubr.f32.mxu0 0.0
    %2384 = vmatmul.mubr.f32.gmra.mrb[0].mxu0 %v2246
    %v2385 = vpop.f32.mrb[0].mxu0
    %v2386 = vadd.f32 0.0, %v2385
    %v2387 = vpop.f32.mrb[0].mxu0
    %v2388 = vadd.f32 0.0, %v2387
    %2389 = vdwg.mxu0
    %2390 = vmatprep.subr.mxu0 %v309
    %2391 = vmatpush1.msra.mxu0 %v308
    %2392 = vmatprep.subr.mxu0 %v313
    %2393 = vmatpush1.msra.mxu0 %v312
    %2394 = vmatprep.subr.mxu0 %v317
    %2395 = vmatpush1.msra.mxu0 %v316
    %2396 = vmatprep.subr.mxu0 %v321
    %2397 = vmatpush1.msra.mxu0 %v320
    %2398 = vmatprep.subr.mxu0 %v325
    %2399 = vmatpush1.msra.mxu0 %v324
    %2400 = vmatprep.subr.mxu0 %v329
    %2401 = vmatpush1.msra.mxu0 %v328
    %2402 = vmatprep.subr.mxu0 %v333
    %2403 = vmatpush1.msra.mxu0 %v332
    %2404 = vmatprep.subr.mxu0 %v337
    %2405 = vmatpush1.msra.mxu0 %v336
    %2406 = vmatprep.subr.mxu0 %v341
    %2407 = vmatpush1.msra.mxu0 %v340
    %2408 = vmatprep.subr.mxu0 %v345
    %2409 = vmatpush1.msra.mxu0 %v344
    %2410 = vmatprep.subr.mxu0 %v349
    %2411 = vmatpush1.msra.mxu0 %v348
    %2412 = vmatprep.subr.mxu0 %v353
    %2413 = vmatpush1.msra.mxu0 %v352
    %2414 = vmatprep.subr.mxu0 %v357
    %2415 = vmatpush1.msra.mxu0 %v356
    %2416 = vmatprep.subr.mxu0 %v361
    %2417 = vmatpush1.msra.mxu0 %v360
    %2418 = vmatprep.subr.mxu0 %v365
    %2419 = vmatpush1.msra.mxu0 %v364
    %2420 = vmatprep.subr.mxu0 %v369
    %2421 = vmatpush1.msra.mxu0 %v368
    %2422 = vmatprep.subr.mxu0 0.0
    %2423 = vmatpush1.msra.mxu0 0.0
    %2424 = vmatprep.subr.mxu0 0.0
    %2425 = vmatpush1.msra.mxu0 0.0
    %2426 = vmatprep.subr.mxu0 0.0
    %2427 = vmatpush1.msra.mxu0 0.0
    %2428 = vmatprep.subr.mxu0 0.0
    %2429 = vmatpush1.msra.mxu0 0.0
    %2430 = vmatprep.subr.mxu0 0.0
    %2431 = vmatpush1.msra.mxu0 0.0
    %2432 = vmatprep.subr.mxu0 0.0
    %2433 = vmatpush1.msra.mxu0 0.0
    %2434 = vmatprep.subr.mxu0 0.0
    %2435 = vmatpush1.msra.mxu0 0.0
    %2436 = vmatprep.subr.mxu0 0.0
    %2437 = vmatpush1.msra.mxu0 0.0
    %2438 = vmatprep.subr.mxu0 0.0
    %2439 = vmatpush1.msra.mxu0 0.0
    %2440 = vmatprep.subr.mxu0 0.0
    %2441 = vmatpush1.msra.mxu0 0.0
    %2442 = vmatprep.subr.mxu0 0.0
    %2443 = vmatpush1.msra.mxu0 0.0
    %2444 = vmatprep.subr.mxu0 0.0
    %2445 = vmatpush1.msra.mxu0 0.0
    %2446 = vmatprep.subr.mxu0 0.0
    %2447 = vmatpush1.msra.mxu0 0.0
    %2448 = vmatprep.subr.mxu0 0.0
    %2449 = vmatpush1.msra.mxu0 0.0
    %2450 = vmatprep.subr.mxu0 0.0
    %2451 = vmatpush1.msra.mxu0 0.0
    %2452 = vmatprep.subr.mxu0 0.0
    %2453 = vmatpush1.msra.mxu0 0.0
    %2454 = vmatprep.mubr.f32.mxu0 0.0
    %2455 = vmatmul.mubr.f32.gmra.mrb[0].mxu0 %v2238
    %v2456 = vpop.f32.mrb[0].mxu0
    %v2457 = vadd.f32 %v541, %v2456
    %v2458 = vpop.f32.mrb[0].mxu0
    %v2459 = vadd.f32 %v545, %v2458
    %2460 = vdwg.mxu0
    %2461 = vmatprep.subr.mxu0 %v311
    %2462 = vmatpush1.msra.mxu0 %v310
    %2463 = vmatprep.subr.mxu0 %v315
    %2464 = vmatpush1.msra.mxu0 %v314
    %2465 = vmatprep.subr.mxu0 %v319
    %2466 = vmatpush1.msra.mxu0 %v318
    %2467 = vmatprep.subr.mxu0 %v323
    %2468 = vmatpush1.msra.mxu0 %v322
    %2469 = vmatprep.subr.mxu0 %v327
    %2470 = vmatpush1.msra.mxu0 %v326
    %2471 = vmatprep.subr.mxu0 %v331
    %2472 = vmatpush1.msra.mxu0 %v330
    %2473 = vmatprep.subr.mxu0 %v335
    %2474 = vmatpush1.msra.mxu0 %v334
    %2475 = vmatprep.subr.mxu0 %v339
    %2476 = vmatpush1.msra.mxu0 %v338
    %2477 = vmatprep.subr.mxu0 %v343
    %2478 = vmatpush1.msra.mxu0 %v342
    %2479 = vmatprep.subr.mxu0 %v347
    %2480 = vmatpush1.msra.mxu0 %v346
    %2481 = vmatprep.subr.mxu0 %v351
    %2482 = vmatpush1.msra.mxu0 %v350
    %2483 = vmatprep.subr.mxu0 %v355
    %2484 = vmatpush1.msra.mxu0 %v354
    %2485 = vmatprep.subr.mxu0 %v359
    %2486 = vmatpush1.msra.mxu0 %v358
    %2487 = vmatprep.subr.mxu0 %v363
    %2488 = vmatpush1.msra.mxu0 %v362
    %2489 = vmatprep.subr.mxu0 %v367
    %2490 = vmatpush1.msra.mxu0 %v366
    %2491 = vmatprep.subr.mxu0 %v371
    %2492 = vmatpush1.msra.mxu0 %v370
    %2493 = vmatprep.subr.mxu0 0.0
    %2494 = vmatpush1.msra.mxu0 0.0
    %2495 = vmatprep.subr.mxu0 0.0
    %2496 = vmatpush1.msra.mxu0 0.0
    %2497 = vmatprep.subr.mxu0 0.0
    %2498 = vmatpush1.msra.mxu0 0.0
    %2499 = vmatprep.subr.mxu0 0.0
    %2500 = vmatpush1.msra.mxu0 0.0
    %2501 = vmatprep.subr.mxu0 0.0
    %2502 = vmatpush1.msra.mxu0 0.0
    %2503 = vmatprep.subr.mxu0 0.0
    %2504 = vmatpush1.msra.mxu0 0.0
    %2505 = vmatprep.subr.mxu0 0.0
    %2506 = vmatpush1.msra.mxu0 0.0
    %2507 = vmatprep.subr.mxu0 0.0
    %2508 = vmatpush1.msra.mxu0 0.0
    %2509 = vmatprep.subr.mxu0 0.0
    %2510 = vmatpush1.msra.mxu0 0.0
    %2511 = vmatprep.subr.mxu0 0.0
    %2512 = vmatpush1.msra.mxu0 0.0
    %2513 = vmatprep.subr.mxu0 0.0
    %2514 = vmatpush1.msra.mxu0 0.0
    %2515 = vmatprep.subr.mxu0 0.0
    %2516 = vmatpush1.msra.mxu0 0.0
    %2517 = vmatprep.subr.mxu0 0.0
    %2518 = vmatpush1.msra.mxu0 0.0
    %2519 = vmatprep.subr.mxu0 0.0
    %2520 = vmatpush1.msra.mxu0 0.0
    %2521 = vmatprep.subr.mxu0 0.0
    %2522 = vmatpush1.msra.mxu0 0.0
    %2523 = vmatprep.subr.mxu0 0.0
    %2524 = vmatpush1.msra.mxu0 0.0
    %2525 = vmatprep.mubr.f32.mxu0 0.0
    %2526 = vmatmul.mubr.f32.gmra.mrb[0].mxu0 %v2238
    %v2527 = vpop.f32.mrb[0].mxu0
    %v2528 = vadd.f32 %v549, %v2527
    %v2529 = vpop.f32.mrb[0].mxu0
    %v2530 = vadd.f32 %v553, %v2529
    %2531 = vdwg.mxu0
    %v2532 = vadd.f32 %v2457, %v2315
    %v2533 = vadd.f32 %v2459, %v2317
    %v2534 = vadd.f32 %v2528, %v2386
    %v2535 = vadd.f32 %v2530, %v2388
    %v2536 = vxor.u32 %v2532, 2147483648
    %v2537 = vxor.u32 %v2533, 2147483648
    %v2538 = vxor.u32 %v2534, 2147483648
    %v2539 = vxor.u32 %v2535, 2147483648
    %v2540 = vmul.f32 %v2536, 1.442695
    %v2541 = vpow.pop %v2540
    %v2542 = vmul.f32 %v2537, 1.442695
    %v2543 = vpow.pop %v2542
    %v2544 = vmul.f32 %v2538, 1.442695
    %v2545 = vpow.pop %v2544
    %v2546 = vmul.f32 %v2539, 1.442695
    %v2547 = vpow.pop %v2546
    %v2548 = vadd.f32 %v2541, 1.0
    %v2549 = vadd.f32 %v2543, 1.0
    %v2550 = vadd.f32 %v2545, 1.0
    %v2551 = vadd.f32 %v2547, 1.0
    %v2552 = vrcp.pop %v2548
    %v2553 = vmul.f32 1.0, %v2552
    %v2554 = vrcp.pop %v2549
    %v2555 = vmul.f32 1.0, %v2554
    %v2556 = vrcp.pop %v2550
    %v2557 = vmul.f32 1.0, %v2556
    %v2558 = vrcp.pop %v2551
    %v2559 = vmul.f32 1.0, %v2558
    %v2560 = vmul.f32 %v2557, 2.0
    %v2561 = vsub.f32 %v2560, 1.0
    %v2562 = vmul.f32 %v2555, %v2236
    %v2563 = vmul.f32 %v2553, %v2561
    %v2564 = vadd.f32 %v2562, %v2563
    %v2565 = vtanh.pop %v2564
    %v2566 = vmul.f32 %v2559, %v2565
    %v2567 = vadd.f32 %v2239, %v2566
    %2568 = vset.pattern.permute.xlu0 7
    %2569 = vperm.xlu0 %2568, %v84
    %v2570 = vpop.permute.xlu0 %2569
    %vm2571 = vcmp.eq.s32.totalorder %v2570, %v307
    %v2572 = vsel %vm2571, 1.0, 0.0
    %v2574 = vsel %vm378, %v2572, 0
    %2576 = vmatprep.subr.mxu0 %v209
    %2577 = vmatpush1.msra.mxu0 %v207
    %2578 = vmatprep.subr.mxu0 %v215
    %2579 = vmatpush1.msra.mxu0 %v213
    %2580 = vmatprep.subr.mxu0 %v387
    %2581 = vmatpush1.msra.mxu0 %v384
    %2582 = vmatprep.subr.mxu0 0.0
    %2583 = vmatpush1.msra.mxu0 0.0
    %2584 = vmatprep.subr.mxu0 0.0
    %2585 = vmatpush1.msra.mxu0 0.0
    %2586 = vmatprep.subr.mxu0 0.0
    %2587 = vmatpush1.msra.mxu0 0.0
    %2588 = vmatprep.subr.mxu0 0.0
    %2589 = vmatpush1.msra.mxu0 0.0
    %2590 = vmatprep.subr.mxu0 0.0
    %2591 = vmatpush1.msra.mxu0 0.0
    %2592 = vmatprep.subr.mxu0 0.0
    %2593 = vmatpush1.msra.mxu0 0.0
    %2594 = vmatprep.subr.mxu0 0.0
    %2595 = vmatpush1.msra.mxu0 0.0
    %2596 = vmatprep.subr.mxu0 0.0
    %2597 = vmatpush1.msra.mxu0 0.0
    %2598 = vmatprep.subr.mxu0 0.0
    %2599 = vmatpush1.msra.mxu0 0.0
    %2600 = vmatprep.subr.mxu0 0.0
    %2601 = vmatpush1.msra.mxu0 0.0
    %2602 = vmatprep.subr.mxu0 0.0
    %2603 = vmatpush1.msra.mxu0 0.0
    %2604 = vmatprep.subr.mxu0 0.0
    %2605 = vmatpush1.msra.mxu0 0.0
    %2606 = vmatprep.subr.mxu0 0.0
    %2607 = vmatpush1.msra.mxu0 0.0
    %2608 = vmatprep.subr.mxu0 0.0
    %2609 = vmatpush1.msra.mxu0 0.0
    %2610 = vmatprep.subr.mxu0 0.0
    %2611 = vmatpush1.msra.mxu0 0.0
    %2612 = vmatprep.subr.mxu0 0.0
    %2613 = vmatpush1.msra.mxu0 0.0
    %2614 = vmatprep.subr.mxu0 0.0
    %2615 = vmatpush1.msra.mxu0 0.0
    %2616 = vmatprep.subr.mxu0 0.0
    %2617 = vmatpush1.msra.mxu0 0.0
    %2618 = vmatprep.subr.mxu0 0.0
    %2619 = vmatpush1.msra.mxu0 0.0
    %2620 = vmatprep.subr.mxu0 0.0
    %2621 = vmatpush1.msra.mxu0 0.0
    %2622 = vmatprep.subr.mxu0 0.0
    %2623 = vmatpush1.msra.mxu0 0.0
    %2624 = vmatprep.subr.mxu0 0.0
    %2625 = vmatpush1.msra.mxu0 0.0
    %2626 = vmatprep.subr.mxu0 0.0
    %2627 = vmatpush1.msra.mxu0 0.0
    %2628 = vmatprep.subr.mxu0 0.0
    %2629 = vmatpush1.msra.mxu0 0.0
    %2630 = vmatprep.subr.mxu0 0.0
    %2631 = vmatpush1.msra.mxu0 0.0
    %2632 = vmatprep.subr.mxu0 0.0
    %2633 = vmatpush1.msra.mxu0 0.0
    %2634 = vmatprep.subr.mxu0 0.0
    %2635 = vmatpush1.msra.mxu0 0.0
    %2636 = vmatprep.subr.mxu0 0.0
    %2637 = vmatpush1.msra.mxu0 0.0
    %2638 = vmatprep.subr.mxu0 0.0
    %2639 = vmatpush1.msra.mxu0 0.0
    %2640 = vmatprep.mubr.f32.mxu0 0.0
    %2641 = vmatmul.mubr.f32.gmra.mrb[0].mxu0 %v2574
    %v2642 = vpop.f32.mrb[0].mxu0
    %v2643 = vadd.f32 0.0, %v2642
    %v2644 = vpop.f32.mrb[0].mxu0
    %v2645 = vadd.f32 0.0, %v2644
    %2646 = vdwg.mxu0
    %2647 = vmatprep.subr.mxu0 %v292
    %2648 = vmatpush1.msra.mxu0 %v290
    %2649 = vmatprep.subr.mxu0 %v298
    %2650 = vmatpush1.msra.mxu0 %v296
    %2651 = vmatprep.subr.mxu0 %v393
    %2652 = vmatpush1.msra.mxu0 %v390
    %2653 = vmatprep.subr.mxu0 0.0
    %2654 = vmatpush1.msra.mxu0 0.0
    %2655 = vmatprep.subr.mxu0 0.0
    %2656 = vmatpush1.msra.mxu0 0.0
    %2657 = vmatprep.subr.mxu0 0.0
    %2658 = vmatpush1.msra.mxu0 0.0
    %2659 = vmatprep.subr.mxu0 0.0
    %2660 = vmatpush1.msra.mxu0 0.0
    %2661 = vmatprep.subr.mxu0 0.0
    %2662 = vmatpush1.msra.mxu0 0.0
    %2663 = vmatprep.subr.mxu0 0.0
    %2664 = vmatpush1.msra.mxu0 0.0
    %2665 = vmatprep.subr.mxu0 0.0
    %2666 = vmatpush1.msra.mxu0 0.0
    %2667 = vmatprep.subr.mxu0 0.0
    %2668 = vmatpush1.msra.mxu0 0.0
    %2669 = vmatprep.subr.mxu0 0.0
    %2670 = vmatpush1.msra.mxu0 0.0
    %2671 = vmatprep.subr.mxu0 0.0
    %2672 = vmatpush1.msra.mxu0 0.0
    %2673 = vmatprep.subr.mxu0 0.0
    %2674 = vmatpush1.msra.mxu0 0.0
    %2675 = vmatprep.subr.mxu0 0.0
    %2676 = vmatpush1.msra.mxu0 0.0
    %2677 = vmatprep.subr.mxu0 0.0
    %2678 = vmatpush1.msra.mxu0 0.0
    %2679 = vmatprep.subr.mxu0 0.0
    %2680 = vmatpush1.msra.mxu0 0.0
    %2681 = vmatprep.subr.mxu0 0.0
    %2682 = vmatpush1.msra.mxu0 0.0
    %2683 = vmatprep.subr.mxu0 0.0
    %2684 = vmatpush1.msra.mxu0 0.0
    %2685 = vmatprep.subr.mxu0 0.0
    %2686 = vmatpush1.msra.mxu0 0.0
    %2687 = vmatprep.subr.mxu0 0.0
    %2688 = vmatpush1.msra.mxu0 0.0
    %2689 = vmatprep.subr.mxu0 0.0
    %2690 = vmatpush1.msra.mxu0 0.0
    %2691 = vmatprep.subr.mxu0 0.0
    %2692 = vmatpush1.msra.mxu0 0.0
    %2693 = vmatprep.subr.mxu0 0.0
    %2694 = vmatpush1.msra.mxu0 0.0
    %2695 = vmatprep.subr.mxu0 0.0
    %2696 = vmatpush1.msra.mxu0 0.0
    %2697 = vmatprep.subr.mxu0 0.0
    %2698 = vmatpush1.msra.mxu0 0.0
    %2699 = vmatprep.subr.mxu0 0.0
    %2700 = vmatpush1.msra.mxu0 0.0
    %2701 = vmatprep.subr.mxu0 0.0
    %2702 = vmatpush1.msra.mxu0 0.0
    %2703 = vmatprep.subr.mxu0 0.0
    %2704 = vmatpush1.msra.mxu0 0.0
    %2705 = vmatprep.subr.mxu0 0.0
    %2706 = vmatpush1.msra.mxu0 0.0
    %2707 = vmatprep.subr.mxu0 0.0
    %2708 = vmatpush1.msra.mxu0 0.0
    %2709 = vmatprep.subr.mxu0 0.0
    %2710 = vmatpush1.msra.mxu0 0.0
    %2711 = vmatprep.mubr.f32.mxu0 0.0
    %2712 = vmatmul.mubr.f32.gmra.mrb[0].mxu0 %v2574
    %v2713 = vpop.f32.mrb[0].mxu0
    %v2714 = vadd.f32 0.0, %v2713
    %v2715 = vpop.f32.mrb[0].mxu0
    %v2716 = vadd.f32 0.0, %v2715
    %2717 = vdwg.mxu0
    %2718 = vmatprep.subr.mxu0 %v309
    %2719 = vmatpush1.msra.mxu0 %v308
    %2720 = vmatprep.subr.mxu0 %v313
    %2721 = vmatpush1.msra.mxu0 %v312
    %2722 = vmatprep.subr.mxu0 %v317
    %2723 = vmatpush1.msra.mxu0 %v316
    %2724 = vmatprep.subr.mxu0 %v321
    %2725 = vmatpush1.msra.mxu0 %v320
    %2726 = vmatprep.subr.mxu0 %v325
    %2727 = vmatpush1.msra.mxu0 %v324
    %2728 = vmatprep.subr.mxu0 %v329
    %2729 = vmatpush1.msra.mxu0 %v328
    %2730 = vmatprep.subr.mxu0 %v333
    %2731 = vmatpush1.msra.mxu0 %v332
    %2732 = vmatprep.subr.mxu0 %v337
    %2733 = vmatpush1.msra.mxu0 %v336
    %2734 = vmatprep.subr.mxu0 %v341
    %2735 = vmatpush1.msra.mxu0 %v340
    %2736 = vmatprep.subr.mxu0 %v345
    %2737 = vmatpush1.msra.mxu0 %v344
    %2738 = vmatprep.subr.mxu0 %v349
    %2739 = vmatpush1.msra.mxu0 %v348
    %2740 = vmatprep.subr.mxu0 %v353
    %2741 = vmatpush1.msra.mxu0 %v352
    %2742 = vmatprep.subr.mxu0 %v357
    %2743 = vmatpush1.msra.mxu0 %v356
    %2744 = vmatprep.subr.mxu0 %v361
    %2745 = vmatpush1.msra.mxu0 %v360
    %2746 = vmatprep.subr.mxu0 %v365
    %2747 = vmatpush1.msra.mxu0 %v364
    %2748 = vmatprep.subr.mxu0 %v369
    %2749 = vmatpush1.msra.mxu0 %v368
    %2750 = vmatprep.subr.mxu0 0.0
    %2751 = vmatpush1.msra.mxu0 0.0
    %2752 = vmatprep.subr.mxu0 0.0
    %2753 = vmatpush1.msra.mxu0 0.0
    %2754 = vmatprep.subr.mxu0 0.0
    %2755 = vmatpush1.msra.mxu0 0.0
    %2756 = vmatprep.subr.mxu0 0.0
    %2757 = vmatpush1.msra.mxu0 0.0
    %2758 = vmatprep.subr.mxu0 0.0
    %2759 = vmatpush1.msra.mxu0 0.0
    %2760 = vmatprep.subr.mxu0 0.0
    %2761 = vmatpush1.msra.mxu0 0.0
    %2762 = vmatprep.subr.mxu0 0.0
    %2763 = vmatpush1.msra.mxu0 0.0
    %2764 = vmatprep.subr.mxu0 0.0
    %2765 = vmatpush1.msra.mxu0 0.0
    %2766 = vmatprep.subr.mxu0 0.0
    %2767 = vmatpush1.msra.mxu0 0.0
    %2768 = vmatprep.subr.mxu0 0.0
    %2769 = vmatpush1.msra.mxu0 0.0
    %2770 = vmatprep.subr.mxu0 0.0
    %2771 = vmatpush1.msra.mxu0 0.0
    %2772 = vmatprep.subr.mxu0 0.0
    %2773 = vmatpush1.msra.mxu0 0.0
    %2774 = vmatprep.subr.mxu0 0.0
    %2775 = vmatpush1.msra.mxu0 0.0
    %2776 = vmatprep.subr.mxu0 0.0
    %2777 = vmatpush1.msra.mxu0 0.0
    %2778 = vmatprep.subr.mxu0 0.0
    %2779 = vmatpush1.msra.mxu0 0.0
    %2780 = vmatprep.subr.mxu0 0.0
    %2781 = vmatpush1.msra.mxu0 0.0
    %2782 = vmatprep.mubr.f32.mxu0 0.0
    %2783 = vmatmul.mubr.f32.gmra.mrb[0].mxu0 %v2566
    %v2784 = vpop.f32.mrb[0].mxu0
    %v2785 = vadd.f32 %v541, %v2784
    %v2786 = vpop.f32.mrb[0].mxu0
    %v2787 = vadd.f32 %v545, %v2786
    %2788 = vdwg.mxu0
    %2789 = vmatprep.subr.mxu0 %v311
    %2790 = vmatpush1.msra.mxu0 %v310
    %2791 = vmatprep.subr.mxu0 %v315
    %2792 = vmatpush1.msra.mxu0 %v314
    %2793 = vmatprep.subr.mxu0 %v319
    %2794 = vmatpush1.msra.mxu0 %v318
    %2795 = vmatprep.subr.mxu0 %v323
    %2796 = vmatpush1.msra.mxu0 %v322
    %2797 = vmatprep.subr.mxu0 %v327
    %2798 = vmatpush1.msra.mxu0 %v326
    %2799 = vmatprep.subr.mxu0 %v331
    %2800 = vmatpush1.msra.mxu0 %v330
    %2801 = vmatprep.subr.mxu0 %v335
    %2802 = vmatpush1.msra.mxu0 %v334
    %2803 = vmatprep.subr.mxu0 %v339
    %2804 = vmatpush1.msra.mxu0 %v338
    %2805 = vmatprep.subr.mxu0 %v343
    %2806 = vmatpush1.msra.mxu0 %v342
    %2807 = vmatprep.subr.mxu0 %v347
    %2808 = vmatpush1.msra.mxu0 %v346
    %2809 = vmatprep.subr.mxu0 %v351
    %2810 = vmatpush1.msra.mxu0 %v350
    %2811 = vmatprep.subr.mxu0 %v355
    %2812 = vmatpush1.msra.mxu0 %v354
    %2813 = vmatprep.subr.mxu0 %v359
    %2814 = vmatpush1.msra.mxu0 %v358
    %2815 = vmatprep.subr.mxu0 %v363
    %2816 = vmatpush1.msra.mxu0 %v362
    %2817 = vmatprep.subr.mxu0 %v367
    %2818 = vmatpush1.msra.mxu0 %v366
    %2819 = vmatprep.subr.mxu0 %v371
    %2820 = vmatpush1.msra.mxu0 %v370
    %2821 = vmatprep.subr.mxu0 0.0
    %2822 = vmatpush1.msra.mxu0 0.0
    %2823 = vmatprep.subr.mxu0 0.0
    %2824 = vmatpush1.msra.mxu0 0.0
    %2825 = vmatprep.subr.mxu0 0.0
    %2826 = vmatpush1.msra.mxu0 0.0
    %2827 = vmatprep.subr.mxu0 0.0
    %2828 = vmatpush1.msra.mxu0 0.0
    %2829 = vmatprep.subr.mxu0 0.0
    %2830 = vmatpush1.msra.mxu0 0.0
    %2831 = vmatprep.subr.mxu0 0.0
    %2832 = vmatpush1.msra.mxu0 0.0
    %2833 = vmatprep.subr.mxu0 0.0
    %2834 = vmatpush1.msra.mxu0 0.0
    %2835 = vmatprep.subr.mxu0 0.0
    %2836 = vmatpush1.msra.mxu0 0.0
    %2837 = vmatprep.subr.mxu0 0.0
    %2838 = vmatpush1.msra.mxu0 0.0
    %2839 = vmatprep.subr.mxu0 0.0
    %2840 = vmatpush1.msra.mxu0 0.0
    %2841 = vmatprep.subr.mxu0 0.0
    %2842 = vmatpush1.msra.mxu0 0.0
    %2843 = vmatprep.subr.mxu0 0.0
    %2844 = vmatpush1.msra.mxu0 0.0
    %2845 = vmatprep.subr.mxu0 0.0
    %2846 = vmatpush1.msra.mxu0 0.0
    %2847 = vmatprep.subr.mxu0 0.0
    %2848 = vmatpush1.msra.mxu0 0.0
    %2849 = vmatprep.subr.mxu0 0.0
    %2850 = vmatpush1.msra.mxu0 0.0
    %2851 = vmatprep.subr.mxu0 0.0
    %2852 = vmatpush1.msra.mxu0 0.0
    %2853 = vmatprep.mubr.f32.mxu0 0.0
    %2854 = vmatmul.mubr.f32.gmra.mrb[0].mxu0 %v2566
    %v2855 = vpop.f32.mrb[0].mxu0
    %v2856 = vadd.f32 %v549, %v2855
    %v2857 = vpop.f32.mrb[0].mxu0
    %v2858 = vadd.f32 %v553, %v2857
    %2859 = vdwg.mxu0
    %v2860 = vadd.f32 %v2785, %v2643
    %v2861 = vadd.f32 %v2787, %v2645
    %v2862 = vadd.f32 %v2856, %v2714
    %v2863 = vadd.f32 %v2858, %v2716
    %v2864 = vxor.u32 %v2860, 2147483648
    %v2865 = vxor.u32 %v2861, 2147483648
    %v2866 = vxor.u32 %v2862, 2147483648
    %v2867 = vxor.u32 %v2863, 2147483648
    %v2868 = vmul.f32 %v2864, 1.442695
    %v2869 = vpow.pop %v2868
    %v2870 = vmul.f32 %v2865, 1.442695
    %v2871 = vpow.pop %v2870
    %v2872 = vmul.f32 %v2866, 1.442695
    %v2873 = vpow.pop %v2872
    %v2874 = vmul.f32 %v2867, 1.442695
    %v2875 = vpow.pop %v2874
    %v2876 = vadd.f32 %v2869, 1.0
    %v2877 = vadd.f32 %v2871, 1.0
    %v2878 = vadd.f32 %v2873, 1.0
    %v2879 = vadd.f32 %v2875, 1.0
    %v2880 = vrcp.pop %v2876
    %v2881 = vmul.f32 1.0, %v2880
    %v2882 = vrcp.pop %v2877
    %v2883 = vmul.f32 1.0, %v2882
    %v2884 = vrcp.pop %v2878
    %v2885 = vmul.f32 1.0, %v2884
    %v2886 = vrcp.pop %v2879
    %v2887 = vmul.f32 1.0, %v2886
    %v2888 = vmul.f32 %v2885, 2.0
    %v2889 = vsub.f32 %v2888, 1.0
    %v2890 = vmul.f32 %v2883, %v2564
    %v2891 = vmul.f32 %v2881, %v2889
    %v2892 = vadd.f32 %v2890, %v2891
    %v2893 = vtanh.pop %v2892
    %v2894 = vmul.f32 %v2887, %v2893
    %v2895 = vadd.f32 %v2567, %v2894
    %2896 = vmatprep.subr.mxu0 %v309
    %2897 = vmatpush1.msra.mxu0 %v308
    %2898 = vmatprep.subr.mxu0 %v313
    %2899 = vmatpush1.msra.mxu0 %v312
    %2900 = vmatprep.subr.mxu0 %v317
    %2901 = vmatpush1.msra.mxu0 %v316
    %2902 = vmatprep.subr.mxu0 %v321
    %2903 = vmatpush1.msra.mxu0 %v320
    %2904 = vmatprep.subr.mxu0 %v325
    %2905 = vmatpush1.msra.mxu0 %v324
    %2906 = vmatprep.subr.mxu0 %v329
    %2907 = vmatpush1.msra.mxu0 %v328
    %2908 = vmatprep.subr.mxu0 %v333
    %2909 = vmatpush1.msra.mxu0 %v332
    %2910 = vmatprep.subr.mxu0 %v337
    %2911 = vmatpush1.msra.mxu0 %v336
    %2912 = vmatprep.subr.mxu0 %v341
    %2913 = vmatpush1.msra.mxu0 %v340
    %2914 = vmatprep.subr.mxu0 %v345
    %2915 = vmatpush1.msra.mxu0 %v344
    %2916 = vmatprep.subr.mxu0 %v349
    %2917 = vmatpush1.msra.mxu0 %v348
    %2918 = vmatprep.subr.mxu0 %v353
    %2919 = vmatpush1.msra.mxu0 %v352
    %2920 = vmatprep.subr.mxu0 %v357
    %2921 = vmatpush1.msra.mxu0 %v356
    %2922 = vmatprep.subr.mxu0 %v361
    %2923 = vmatpush1.msra.mxu0 %v360
    %2924 = vmatprep.subr.mxu0 %v365
    %2925 = vmatpush1.msra.mxu0 %v364
    %2926 = vmatprep.subr.mxu0 %v369
    %2927 = vmatpush1.msra.mxu0 %v368
    %2928 = vmatprep.subr.mxu0 0.0
    %2929 = vmatpush1.msra.mxu0 0.0
    %2930 = vmatprep.subr.mxu0 0.0
    %2931 = vmatpush1.msra.mxu0 0.0
    %2932 = vmatprep.subr.mxu0 0.0
    %2933 = vmatpush1.msra.mxu0 0.0
    %2934 = vmatprep.subr.mxu0 0.0
    %2935 = vmatpush1.msra.mxu0 0.0
    %2936 = vmatprep.subr.mxu0 0.0
    %2937 = vmatpush1.msra.mxu0 0.0
    %2938 = vmatprep.subr.mxu0 0.0
    %2939 = vmatpush1.msra.mxu0 0.0
    %2940 = vmatprep.subr.mxu0 0.0
    %2941 = vmatpush1.msra.mxu0 0.0
    %2942 = vmatprep.subr.mxu0 0.0
    %2943 = vmatpush1.msra.mxu0 0.0
    %2944 = vmatprep.subr.mxu0 0.0
    %2945 = vmatpush1.msra.mxu0 0.0
    %2946 = vmatprep.subr.mxu0 0.0
    %2947 = vmatpush1.msra.mxu0 0.0
    %2948 = vmatprep.subr.mxu0 0.0
    %2949 = vmatpush1.msra.mxu0 0.0
    %2950 = vmatprep.subr.mxu0 0.0
    %2951 = vmatpush1.msra.mxu0 0.0
    %2952 = vmatprep.subr.mxu0 0.0
    %2953 = vmatpush1.msra.mxu0 0.0
    %2954 = vmatprep.subr.mxu0 0.0
    %2955 = vmatpush1.msra.mxu0 0.0
    %2956 = vmatprep.subr.mxu0 0.0
    %2957 = vmatpush1.msra.mxu0 0.0
    %2958 = vmatprep.subr.mxu0 0.0
    %2959 = vmatpush1.msra.mxu0 0.0
    %2960 = vmatprep.mubr.f32.mxu0 0.0
    %2961 = vmatmul.mubr.f32.gmra.mrb[0].mxu0 %v2894
    %v2962 = vpop.f32.mrb[0].mxu0
    %v2963 = vadd.f32 %v541, %v2962
    %v2964 = vpop.f32.mrb[0].mxu0
    %v2965 = vadd.f32 %v545, %v2964
    %2966 = vdwg.mxu0
    %2967 = vmatprep.subr.mxu0 %v311
    %2968 = vmatpush1.msra.mxu0 %v310
    %2969 = vmatprep.subr.mxu0 %v315
    %2970 = vmatpush1.msra.mxu0 %v314
    %2971 = vmatprep.subr.mxu0 %v319
    %2972 = vmatpush1.msra.mxu0 %v318
    %2973 = vmatprep.subr.mxu0 %v323
    %2974 = vmatpush1.msra.mxu0 %v322
    %2975 = vmatprep.subr.mxu0 %v327
    %2976 = vmatpush1.msra.mxu0 %v326
    %2977 = vmatprep.subr.mxu0 %v331
    %2978 = vmatpush1.msra.mxu0 %v330
    %2979 = vmatprep.subr.mxu0 %v335
    %2980 = vmatpush1.msra.mxu0 %v334
    %2981 = vmatprep.subr.mxu0 %v339
    %2982 = vmatpush1.msra.mxu0 %v338
    %2983 = vmatprep.subr.mxu0 %v343
    %2984 = vmatpush1.msra.mxu0 %v342
    %2985 = vmatprep.subr.mxu0 %v347
    %2986 = vmatpush1.msra.mxu0 %v346
    %2987 = vmatprep.subr.mxu0 %v351
    %2988 = vmatpush1.msra.mxu0 %v350
    %2989 = vmatprep.subr.mxu0 %v355
    %2990 = vmatpush1.msra.mxu0 %v354
    %2991 = vmatprep.subr.mxu0 %v359
    %2992 = vmatpush1.msra.mxu0 %v358
    %2993 = vmatprep.subr.mxu0 %v363
    %2994 = vmatpush1.msra.mxu0 %v362
    %2995 = vmatprep.subr.mxu0 %v367
    %2996 = vmatpush1.msra.mxu0 %v366
    %2997 = vmatprep.subr.mxu0 %v371
    %2998 = vmatpush1.msra.mxu0 %v370
    %2999 = vmatprep.subr.mxu0 0.0
    %3000 = vmatpush1.msra.mxu0 0.0
    %3001 = vmatprep.subr.mxu0 0.0
    %3002 = vmatpush1.msra.mxu0 0.0
    %3003 = vmatprep.subr.mxu0 0.0
    %3004 = vmatpush1.msra.mxu0 0.0
    %3005 = vmatprep.subr.mxu0 0.0
    %3006 = vmatpush1.msra.mxu0 0.0
    %3007 = vmatprep.subr.mxu0 0.0
    %3008 = vmatpush1.msra.mxu0 0.0
    %3009 = vmatprep.subr.mxu0 0.0
    %3010 = vmatpush1.msra.mxu0 0.0
    %3011 = vmatprep.subr.mxu0 0.0
    %3012 = vmatpush1.msra.mxu0 0.0
    %3013 = vmatprep.subr.mxu0 0.0
    %3014 = vmatpush1.msra.mxu0 0.0
    %3015 = vmatprep.subr.mxu0 0.0
    %3016 = vmatpush1.msra.mxu0 0.0
    %3017 = vmatprep.subr.mxu0 0.0
    %3018 = vmatpush1.msra.mxu0 0.0
    %3019 = vmatprep.subr.mxu0 0.0
    %3020 = vmatpush1.msra.mxu0 0.0
    %3021 = vmatprep.subr.mxu0 0.0
    %3022 = vmatpush1.msra.mxu0 0.0
    %3023 = vmatprep.subr.mxu0 0.0
    %3024 = vmatpush1.msra.mxu0 0.0
    %3025 = vmatprep.subr.mxu0 0.0
    %3026 = vmatpush1.msra.mxu0 0.0
    %3027 = vmatprep.subr.mxu0 0.0
    %3028 = vmatpush1.msra.mxu0 0.0
    %3029 = vmatprep.subr.mxu0 0.0
    %3030 = vmatpush1.msra.mxu0 0.0
    %3031 = vmatprep.mubr.f32.mxu0 0.0
    %3032 = vmatmul.mubr.f32.gmra.mrb[0].mxu0 %v2894
    %v3033 = vpop.f32.mrb[0].mxu0
    %v3034 = vadd.f32 %v549, %v3033
    %v3035 = vpop.f32.mrb[0].mxu0
    %v3036 = vadd.f32 %v553, %v3035
    %3037 = vdwg.mxu0
    %v3038 = vxor.u32 %v2963, 2147483648
    %v3039 = vxor.u32 %v2965, 2147483648
    %v3040 = vxor.u32 %v3034, 2147483648
    %v3041 = vxor.u32 %v3036, 2147483648
    %v3042 = vmul.f32 %v3038, 1.442695
    %v3043 = vpow.pop %v3042
    %v3044 = vmul.f32 %v3039, 1.442695
    %v3045 = vpow.pop %v3044
    %v3046 = vmul.f32 %v3040, 1.442695
    %v3047 = vpow.pop %v3046
    %v3048 = vmul.f32 %v3041, 1.442695
    %v3049 = vpow.pop %v3048
    %v3050 = vadd.f32 %v3043, 1.0
    %v3051 = vadd.f32 %v3045, 1.0
    %v3052 = vadd.f32 %v3047, 1.0
    %v3053 = vadd.f32 %v3049, 1.0
    %v3054 = vrcp.pop %v3050
    %v3055 = vmul.f32 1.0, %v3054
    %v3056 = vrcp.pop %v3051
    %v3057 = vmul.f32 1.0, %v3056
    %v3058 = vrcp.pop %v3052
    %v3059 = vmul.f32 1.0, %v3058
    %v3060 = vrcp.pop %v3053
    %v3061 = vmul.f32 1.0, %v3060
    %v3062 = vmul.f32 %v3059, 2.0
    %v3063 = vsub.f32 %v3062, 1.0
    %v3064 = vmul.f32 %v3057, %v2892
    %v3065 = vmul.f32 %v3055, %v3063
    %v3066 = vadd.f32 %v3064, %v3065
    %v3067 = vtanh.pop %v3066
    %v3068 = vmul.f32 %v3061, %v3067
    %v3069 = vadd.f32 %v2895, %v3068
    %3070 = vmatprep.subr.mxu0 %v309
    %3071 = vmatpush1.msra.mxu0 %v308
    %3072 = vmatprep.subr.mxu0 %v313
    %3073 = vmatpush1.msra.mxu0 %v312
    %3074 = vmatprep.subr.mxu0 %v317
    %3075 = vmatpush1.msra.mxu0 %v316
    %3076 = vmatprep.subr.mxu0 %v321
    %3077 = vmatpush1.msra.mxu0 %v320
    %3078 = vmatprep.subr.mxu0 %v325
    %3079 = vmatpush1.msra.mxu0 %v324
    %3080 = vmatprep.subr.mxu0 %v329
    %3081 = vmatpush1.msra.mxu0 %v328
    %3082 = vmatprep.subr.mxu0 %v333
    %3083 = vmatpush1.msra.mxu0 %v332
    %3084 = vmatprep.subr.mxu0 %v337
    %3085 = vmatpush1.msra.mxu0 %v336
    %3086 = vmatprep.subr.mxu0 %v341
    %3087 = vmatpush1.msra.mxu0 %v340
    %3088 = vmatprep.subr.mxu0 %v345
    %3089 = vmatpush1.msra.mxu0 %v344
    %3090 = vmatprep.subr.mxu0 %v349
    %3091 = vmatpush1.msra.mxu0 %v348
    %3092 = vmatprep.subr.mxu0 %v353
    %3093 = vmatpush1.msra.mxu0 %v352
    %3094 = vmatprep.subr.mxu0 %v357
    %3095 = vmatpush1.msra.mxu0 %v356
    %3096 = vmatprep.subr.mxu0 %v361
    %3097 = vmatpush1.msra.mxu0 %v360
    %3098 = vmatprep.subr.mxu0 %v365
    %3099 = vmatpush1.msra.mxu0 %v364
    %3100 = vmatprep.subr.mxu0 %v369
    %3101 = vmatpush1.msra.mxu0 %v368
    %3102 = vmatprep.subr.mxu0 0.0
    %3103 = vmatpush1.msra.mxu0 0.0
    %3104 = vmatprep.subr.mxu0 0.0
    %3105 = vmatpush1.msra.mxu0 0.0
    %3106 = vmatprep.subr.mxu0 0.0
    %3107 = vmatpush1.msra.mxu0 0.0
    %3108 = vmatprep.subr.mxu0 0.0
    %3109 = vmatpush1.msra.mxu0 0.0
    %3110 = vmatprep.subr.mxu0 0.0
    %3111 = vmatpush1.msra.mxu0 0.0
    %3112 = vmatprep.subr.mxu0 0.0
    %3113 = vmatpush1.msra.mxu0 0.0
    %3114 = vmatprep.subr.mxu0 0.0
    %3115 = vmatpush1.msra.mxu0 0.0
    %3116 = vmatprep.subr.mxu0 0.0
    %3117 = vmatpush1.msra.mxu0 0.0
    %3118 = vmatprep.subr.mxu0 0.0
    %3119 = vmatpush1.msra.mxu0 0.0
    %3120 = vmatprep.subr.mxu0 0.0
    %3121 = vmatpush1.msra.mxu0 0.0
    %3122 = vmatprep.subr.mxu0 0.0
    %3123 = vmatpush1.msra.mxu0 0.0
    %3124 = vmatprep.subr.mxu0 0.0
    %3125 = vmatpush1.msra.mxu0 0.0
    %3126 = vmatprep.subr.mxu0 0.0
    %3127 = vmatpush1.msra.mxu0 0.0
    %3128 = vmatprep.subr.mxu0 0.0
    %3129 = vmatpush1.msra.mxu0 0.0
    %3130 = vmatprep.subr.mxu0 0.0
    %3131 = vmatpush1.msra.mxu0 0.0
    %3132 = vmatprep.subr.mxu0 0.0
    %3133 = vmatpush1.msra.mxu0 0.0
    %3134 = vmatprep.mubr.f32.mxu0 0.0
    %3135 = vmatmul.mubr.f32.gmra.mrb[0].mxu0 %v3068
    %v3136 = vpop.f32.mrb[0].mxu0
    %v3137 = vadd.f32 %v541, %v3136
    %v3138 = vpop.f32.mrb[0].mxu0
    %v3139 = vadd.f32 %v545, %v3138
    %3140 = vdwg.mxu0
    %3141 = vmatprep.subr.mxu0 %v311
    %3142 = vmatpush1.msra.mxu0 %v310
    %3143 = vmatprep.subr.mxu0 %v315
    %3144 = vmatpush1.msra.mxu0 %v314
    %3145 = vmatprep.subr.mxu0 %v319
    %3146 = vmatpush1.msra.mxu0 %v318
    %3147 = vmatprep.subr.mxu0 %v323
    %3148 = vmatpush1.msra.mxu0 %v322
    %3149 = vmatprep.subr.mxu0 %v327
    %3150 = vmatpush1.msra.mxu0 %v326
    %3151 = vmatprep.subr.mxu0 %v331
    %3152 = vmatpush1.msra.mxu0 %v330
    %3153 = vmatprep.subr.mxu0 %v335
    %3154 = vmatpush1.msra.mxu0 %v334
    %3155 = vmatprep.subr.mxu0 %v339
    %3156 = vmatpush1.msra.mxu0 %v338
    %3157 = vmatprep.subr.mxu0 %v343
    %3158 = vmatpush1.msra.mxu0 %v342
    %3159 = vmatprep.subr.mxu0 %v347
    %3160 = vmatpush1.msra.mxu0 %v346
    %3161 = vmatprep.subr.mxu0 %v351
    %3162 = vmatpush1.msra.mxu0 %v350
    %3163 = vmatprep.subr.mxu0 %v355
    %3164 = vmatpush1.msra.mxu0 %v354
    %3165 = vmatprep.subr.mxu0 %v359
    %3166 = vmatpush1.msra.mxu0 %v358
    %3167 = vmatprep.subr.mxu0 %v363
    %3168 = vmatpush1.msra.mxu0 %v362
    %3169 = vmatprep.subr.mxu0 %v367
    %3170 = vmatpush1.msra.mxu0 %v366
    %3171 = vmatprep.subr.mxu0 %v371
    %3172 = vmatpush1.msra.mxu0 %v370
    %3173 = vmatprep.subr.mxu0 0.0
    %3174 = vmatpush1.msra.mxu0 0.0
    %3175 = vmatprep.subr.mxu0 0.0
    %3176 = vmatpush1.msra.mxu0 0.0
    %3177 = vmatprep.subr.mxu0 0.0
    %3178 = vmatpush1.msra.mxu0 0.0
    %3179 = vmatprep.subr.mxu0 0.0
    %3180 = vmatpush1.msra.mxu0 0.0
    %3181 = vmatprep.subr.mxu0 0.0
    %3182 = vmatpush1.msra.mxu0 0.0
    %3183 = vmatprep.subr.mxu0 0.0
    %3184 = vmatpush1.msra.mxu0 0.0
    %3185 = vmatprep.subr.mxu0 0.0
    %3186 = vmatpush1.msra.mxu0 0.0
    %3187 = vmatprep.subr.mxu0 0.0
    %3188 = vmatpush1.msra.mxu0 0.0
    %3189 = vmatprep.subr.mxu0 0.0
    %3190 = vmatpush1.msra.mxu0 0.0
    %3191 = vmatprep.subr.mxu0 0.0
    %3192 = vmatpush1.msra.mxu0 0.0
    %3193 = vmatprep.subr.mxu0 0.0
    %3194 = vmatpush1.msra.mxu0 0.0
    %3195 = vmatprep.subr.mxu0 0.0
    %3196 = vmatpush1.msra.mxu0 0.0
    %3197 = vmatprep.subr.mxu0 0.0
    %3198 = vmatpush1.msra.mxu0 0.0
    %3199 = vmatprep.subr.mxu0 0.0
    %3200 = vmatpush1.msra.mxu0 0.0
    %3201 = vmatprep.subr.mxu0 0.0
    %3202 = vmatpush1.msra.mxu0 0.0
    %3203 = vmatprep.subr.mxu0 0.0
    %3204 = vmatpush1.msra.mxu0 0.0
    %3205 = vmatprep.mubr.f32.mxu0 0.0
    %3206 = vmatmul.mubr.f32.gmra.mrb[0].mxu0 %v3068
    %v3207 = vpop.f32.mrb[0].mxu0
    %v3208 = vadd.f32 %v549, %v3207
    %v3209 = vpop.f32.mrb[0].mxu0
    %v3210 = vadd.f32 %v553, %v3209
    %3211 = vdwg.mxu0
    %v3212 = vxor.u32 %v3137, 2147483648
    %v3213 = vxor.u32 %v3139, 2147483648
    %v3214 = vxor.u32 %v3208, 2147483648
    %v3215 = vxor.u32 %v3210, 2147483648
    %v3216 = vmul.f32 %v3212, 1.442695
    %v3217 = vpow.pop %v3216
    %v3218 = vmul.f32 %v3213, 1.442695
    %v3219 = vpow.pop %v3218
    %v3220 = vmul.f32 %v3214, 1.442695
    %v3221 = vpow.pop %v3220
    %v3222 = vmul.f32 %v3215, 1.442695
    %v3223 = vpow.pop %v3222
    %v3224 = vadd.f32 %v3217, 1.0
    %v3225 = vadd.f32 %v3219, 1.0
    %v3226 = vadd.f32 %v3221, 1.0
    %v3227 = vadd.f32 %v3223, 1.0
    %v3228 = vrcp.pop %v3224
    %v3229 = vmul.f32 1.0, %v3228
    %v3230 = vrcp.pop %v3225
    %v3231 = vmul.f32 1.0, %v3230
    %v3232 = vrcp.pop %v3226
    %v3233 = vmul.f32 1.0, %v3232
    %v3234 = vrcp.pop %v3227
    %v3235 = vmul.f32 1.0, %v3234
    %v3236 = vmul.f32 %v3233, 2.0
    %v3237 = vsub.f32 %v3236, 1.0
    %v3238 = vmul.f32 %v3231, %v3066
    %v3239 = vmul.f32 %v3229, %v3237
    %v3240 = vadd.f32 %v3238, %v3239
    %v3241 = vtanh.pop %v3240
    %v3242 = vmul.f32 %v3235, %v3241
    %v3243 = vadd.f32 %v3069, %v3242
    %3244 = vmatprep.subr.mxu0 %v309
    %3245 = vmatpush1.msra.mxu0 %v308
    %3246 = vmatprep.subr.mxu0 %v313
    %3247 = vmatpush1.msra.mxu0 %v312
    %3248 = vmatprep.subr.mxu0 %v317
    %3249 = vmatpush1.msra.mxu0 %v316
    %3250 = vmatprep.subr.mxu0 %v321
    %3251 = vmatpush1.msra.mxu0 %v320
    %3252 = vmatprep.subr.mxu0 %v325
    %3253 = vmatpush1.msra.mxu0 %v324
    %3254 = vmatprep.subr.mxu0 %v329
    %3255 = vmatpush1.msra.mxu0 %v328
    %3256 = vmatprep.subr.mxu0 %v333
    %3257 = vmatpush1.msra.mxu0 %v332
    %3258 = vmatprep.subr.mxu0 %v337
    %3259 = vmatpush1.msra.mxu0 %v336
    %3260 = vmatprep.subr.mxu0 %v341
    %3261 = vmatpush1.msra.mxu0 %v340
    %3262 = vmatprep.subr.mxu0 %v345
    %3263 = vmatpush1.msra.mxu0 %v344
    %3264 = vmatprep.subr.mxu0 %v349
    %3265 = vmatpush1.msra.mxu0 %v348
    %3266 = vmatprep.subr.mxu0 %v353
    %3267 = vmatpush1.msra.mxu0 %v352
    %3268 = vmatprep.subr.mxu0 %v357
    %3269 = vmatpush1.msra.mxu0 %v356
    %3270 = vmatprep.subr.mxu0 %v361
    %3271 = vmatpush1.msra.mxu0 %v360
    %3272 = vmatprep.subr.mxu0 %v365
    %3273 = vmatpush1.msra.mxu0 %v364
    %3274 = vmatprep.subr.mxu0 %v369
    %3275 = vmatpush1.msra.mxu0 %v368
    %3276 = vmatprep.subr.mxu0 0.0
    %3277 = vmatpush1.msra.mxu0 0.0
    %3278 = vmatprep.subr.mxu0 0.0
    %3279 = vmatpush1.msra.mxu0 0.0
    %3280 = vmatprep.subr.mxu0 0.0
    %3281 = vmatpush1.msra.mxu0 0.0
    %3282 = vmatprep.subr.mxu0 0.0
    %3283 = vmatpush1.msra.mxu0 0.0
    %3284 = vmatprep.subr.mxu0 0.0
    %3285 = vmatpush1.msra.mxu0 0.0
    %3286 = vmatprep.subr.mxu0 0.0
    %3287 = vmatpush1.msra.mxu0 0.0
    %3288 = vmatprep.subr.mxu0 0.0
    %3289 = vmatpush1.msra.mxu0 0.0
    %3290 = vmatprep.subr.mxu0 0.0
    %3291 = vmatpush1.msra.mxu0 0.0
    %3292 = vmatprep.subr.mxu0 0.0
    %3293 = vmatpush1.msra.mxu0 0.0
    %3294 = vmatprep.subr.mxu0 0.0
    %3295 = vmatpush1.msra.mxu0 0.0
    %3296 = vmatprep.subr.mxu0 0.0
    %3297 = vmatpush1.msra.mxu0 0.0
    %3298 = vmatprep.subr.mxu0 0.0
    %3299 = vmatpush1.msra.mxu0 0.0
    %3300 = vmatprep.subr.mxu0 0.0
    %3301 = vmatpush1.msra.mxu0 0.0
    %3302 = vmatprep.subr.mxu0 0.0
    %3303 = vmatpush1.msra.mxu0 0.0
    %3304 = vmatprep.subr.mxu0 0.0
    %3305 = vmatpush1.msra.mxu0 0.0
    %3306 = vmatprep.subr.mxu0 0.0
    %3307 = vmatpush1.msra.mxu0 0.0
    %3308 = vmatprep.mubr.f32.mxu0 0.0
    %3309 = vmatmul.mubr.f32.gmra.mrb[0].mxu0 %v3242
    %v3310 = vpop.f32.mrb[0].mxu0
    %v3311 = vadd.f32 %v541, %v3310
    %v3312 = vpop.f32.mrb[0].mxu0
    %v3313 = vadd.f32 %v545, %v3312
    %3314 = vdwg.mxu0
    %3315 = vmatprep.subr.mxu0 %v311
    %3316 = vmatpush1.msra.mxu0 %v310
    %3317 = vmatprep.subr.mxu0 %v315
    %3318 = vmatpush1.msra.mxu0 %v314
    %3319 = vmatprep.subr.mxu0 %v319
    %3320 = vmatpush1.msra.mxu0 %v318
    %3321 = vmatprep.subr.mxu0 %v323
    %3322 = vmatpush1.msra.mxu0 %v322
    %3323 = vmatprep.subr.mxu0 %v327
    %3324 = vmatpush1.msra.mxu0 %v326
    %3325 = vmatprep.subr.mxu0 %v331
    %3326 = vmatpush1.msra.mxu0 %v330
    %3327 = vmatprep.subr.mxu0 %v335
    %3328 = vmatpush1.msra.mxu0 %v334
    %3329 = vmatprep.subr.mxu0 %v339
    %3330 = vmatpush1.msra.mxu0 %v338
    %3331 = vmatprep.subr.mxu0 %v343
    %3332 = vmatpush1.msra.mxu0 %v342
    %3333 = vmatprep.subr.mxu0 %v347
    %3334 = vmatpush1.msra.mxu0 %v346
    %3335 = vmatprep.subr.mxu0 %v351
    %3336 = vmatpush1.msra.mxu0 %v350
    %3337 = vmatprep.subr.mxu0 %v355
    %3338 = vmatpush1.msra.mxu0 %v354
    %3339 = vmatprep.subr.mxu0 %v359
    %3340 = vmatpush1.msra.mxu0 %v358
    %3341 = vmatprep.subr.mxu0 %v363
    %3342 = vmatpush1.msra.mxu0 %v362
    %3343 = vmatprep.subr.mxu0 %v367
    %3344 = vmatpush1.msra.mxu0 %v366
    %3345 = vmatprep.subr.mxu0 %v371
    %3346 = vmatpush1.msra.mxu0 %v370
    %3347 = vmatprep.subr.mxu0 0.0
    %3348 = vmatpush1.msra.mxu0 0.0
    %3349 = vmatprep.subr.mxu0 0.0
    %3350 = vmatpush1.msra.mxu0 0.0
    %3351 = vmatprep.subr.mxu0 0.0
    %3352 = vmatpush1.msra.mxu0 0.0
    %3353 = vmatprep.subr.mxu0 0.0
    %3354 = vmatpush1.msra.mxu0 0.0
    %3355 = vmatprep.subr.mxu0 0.0
    %3356 = vmatpush1.msra.mxu0 0.0
    %3357 = vmatprep.subr.mxu0 0.0
    %3358 = vmatpush1.msra.mxu0 0.0
    %3359 = vmatprep.subr.mxu0 0.0
    %3360 = vmatpush1.msra.mxu0 0.0
    %3361 = vmatprep.subr.mxu0 0.0
    %3362 = vmatpush1.msra.mxu0 0.0
    %3363 = vmatprep.subr.mxu0 0.0
    %3364 = vmatpush1.msra.mxu0 0.0
    %3365 = vmatprep.subr.mxu0 0.0
    %3366 = vmatpush1.msra.mxu0 0.0
    %3367 = vmatprep.subr.mxu0 0.0
    %3368 = vmatpush1.msra.mxu0 0.0
    %3369 = vmatprep.subr.mxu0 0.0
    %3370 = vmatpush1.msra.mxu0 0.0
    %3371 = vmatprep.subr.mxu0 0.0
    %3372 = vmatpush1.msra.mxu0 0.0
    %3373 = vmatprep.subr.mxu0 0.0
    %3374 = vmatpush1.msra.mxu0 0.0
    %3375 = vmatprep.subr.mxu0 0.0
    %3376 = vmatpush1.msra.mxu0 0.0
    %3377 = vmatprep.subr.mxu0 0.0
    %3378 = vmatpush1.msra.mxu0 0.0
    %3379 = vmatprep.mubr.f32.mxu0 0.0
    %3380 = vmatmul.mubr.f32.gmra.mrb[0].mxu0 %v3242
    %v3381 = vpop.f32.mrb[0].mxu0
    %v3382 = vadd.f32 %v549, %v3381
    %v3383 = vpop.f32.mrb[0].mxu0
    %v3384 = vadd.f32 %v553, %v3383
    %3385 = vdwg.mxu0
    %v3386 = vxor.u32 %v3311, 2147483648
    %v3387 = vxor.u32 %v3313, 2147483648
    %v3388 = vxor.u32 %v3382, 2147483648
    %v3389 = vxor.u32 %v3384, 2147483648
    %v3390 = vmul.f32 %v3386, 1.442695
    %v3391 = vpow.pop %v3390
    %v3392 = vmul.f32 %v3387, 1.442695
    %v3393 = vpow.pop %v3392
    %v3394 = vmul.f32 %v3388, 1.442695
    %v3395 = vpow.pop %v3394
    %v3396 = vmul.f32 %v3389, 1.442695
    %v3397 = vpow.pop %v3396
    %v3398 = vadd.f32 %v3391, 1.0
    %v3399 = vadd.f32 %v3393, 1.0
    %v3400 = vadd.f32 %v3395, 1.0
    %v3401 = vadd.f32 %v3397, 1.0
    %v3402 = vrcp.pop %v3398
    %v3403 = vmul.f32 1.0, %v3402
    %v3404 = vrcp.pop %v3399
    %v3405 = vmul.f32 1.0, %v3404
    %v3406 = vrcp.pop %v3400
    %v3407 = vmul.f32 1.0, %v3406
    %v3408 = vrcp.pop %v3401
    %v3409 = vmul.f32 1.0, %v3408
    %v3410 = vmul.f32 %v3407, 2.0
    %v3411 = vsub.f32 %v3410, 1.0
    %v3412 = vmul.f32 %v3405, %v3240
    %v3413 = vmul.f32 %v3403, %v3411
    %v3414 = vadd.f32 %v3412, %v3413
    %v3415 = vtanh.pop %v3414
    %v3416 = vmul.f32 %v3409, %v3415
    %v3417 = vadd.f32 %v3243, %v3416
    %v3418 = vmul.f32 %v3417, 0.125
    %v3419 = vld [vmem:[%s5] sm:$0x1]
    %v3421 = vlaneseq
    %v3422 = vshrl.u32 %v3421, 7
    %v3423 = vsub.s32 0, %v3422
    %v3424 = vrot.slane %v3419, %v3423
    %3425 = vrot.lane.b32.xlu0 %v3424, 96
    %v3426 = vpop.permute.xlu0 %3425
    %v3428 = vmul.f32 %v3418, %v3426
    %3430 = vrot.lane.b32.xlu0 %v3428, 32
    %v3431 = vpop.permute.xlu0 %3430
    %vm3433 = vcmask 254976
    %v3434 = vsel %vm3433, %v3431, 0.0
    %3435 = vadd.xlane.f32.xlu0 %v3434
    %v3436 = vpop.xlane.xlu0 %3435
    %v3437 = vld [vmem:[%s6] sm:$0x1]
    %v3439 = vlaneseq
    %v3440 = vshrl.u32 %v3439, 7
    %v3441 = vsub.s32 0, %v3440
    %v3442 = vrot.slane %v3437, %v3441
    %3443 = vrot.lane.b32.xlu0 %v3442, 8
    %v3444 = vpop.permute.xlu0 %3443
    %v3446 = vmul.f32 %v85, %v3444
    %3448 = vrot.lane.b32.xlu0 %v3446, 120
    %v3449 = vpop.permute.xlu0 %3448
    %vm3451 = vcmask 164864
    %v3452 = vsel %vm3451, %v3449, 0.0
    %3453 = vadd.xlane.f32.xlu0 %v3452
    %v3454 = vpop.xlane.xlu0 %3453
    %v3455 = vadd.f32 %v3436, %v3454
    %v3456 = vld [vmem:[#allocation2] sm:$0x1]
    %v3458 = vlaneseq
    %v3459 = vshrl.u32 %v3458, 7
    %v3460 = vsub.s32 0, %v3459
    %v3461 = vrot.slane %v3456, %v3460
    %v3463 = vadd.f32 %v3455, %v3461
    %vm3464 = vcmask 1024
    %3465 = vst.msk [vmem:[%s8] sm:$0x3] %vm3464, %v3463
    // Predicated region
    $region50: #{rnn_model_forward.1} parent=1 // pred_check
      _
    $region51: #{rnn_model_forward.1} parent=1 // pred_check_branch
      %3467 = sbr.rel (0) target = $region53
    $region52: #{rnn_model_forward.1} parent=1 // pred_region
      _
    $region53: #{rnn_model_forward.1} parent=1 // pred_fallthru
      _
    // Predicated region
    $region54: #{rnn_model_forward.1} parent=1 // pred_check
      _
    $region55: #{rnn_model_forward.1} parent=1 // pred_check_branch
      %3469 = sbr.rel (0) target = $region57
    $region56: #{rnn_model_forward.1} parent=1 // pred_region
      _
    $region57: #{rnn_model_forward.1} parent=1 // pred_fallthru
      _
    %3470 = vsyncpa [#allocation4], 1
    %3471 = vsyncpa [#allocation6], 1
    %3472 = vsyncpa [#allocation9], 1

</llo_original>
